<compile_context>
chip_gen: v7x
topology: tpu7x:2x2x1
jax: 0.10.0
libtpu: 0.0.40
codegen_flags: <defaults>
</compile_context>

<pallas_src>
import functools
import math

import jax
import jax.numpy as jnp
from jax.experimental import pallas as pl
from jax.experimental.pallas import tpu as pltpu


_VMEM_LIMIT = 64 * 1024 * 1024  # fits v7x physical VMEM; raises v5e/v6e scoped defaults
_LANES = 128                    # vreg lane width


# ------------------------------- tiling helpers ------------------------------

def _round_up(x, m):
    return (x + m - 1) // m * m


def _choose_row_tile(m, target=256):
    """Row (sublane) tile: <= target rows, multiple of 8, >=2 blocks when m > 8."""
    if m <= 8:
        return m                      # full extent (allowed even if < 8)
    return max(8, min(target, _round_up((m + 1) // 2, 8)))


def _ln_f32(x, g, b):
    """PyTorch LayerNorm over the last dim, eps=1e-5, biased variance, f32 math."""
    mu = jnp.mean(x, axis=-1, keepdims=True)
    xc = x - mu
    var = jnp.mean(xc * xc, axis=-1, keepdims=True)
    inv = jax.lax.rsqrt(var + 1e-5)
    return xc * inv * g + b


# ------------------------------- Pallas kernels -------------------------------

def _matmul_kernel(x_ref, w_ref, b_ref, o_ref):
    out = jnp.dot(x_ref[...], w_ref[...], preferred_element_type=jnp.float32)
    o_ref[...] = (out + b_ref[...]).astype(o_ref.dtype)


def _matmul_res_kernel(x_ref, w_ref, b_ref, r_ref, o_ref):
    out = jnp.dot(x_ref[...], w_ref[...], preferred_element_type=jnp.float32)
    out = out + b_ref[...] + r_ref[...].astype(jnp.float32)
    o_ref[...] = out.astype(o_ref.dtype)


def _layernorm_kernel(x_ref, g_ref, b_ref, o_ref):
    x = x_ref[...].astype(jnp.float32)
    o_ref[...] = _ln_f32(x, g_ref[...], b_ref[...]).astype(o_ref.dtype)


def _ln_matmul_kernel(x_ref, g_ref, bln_ref, w_ref, b_ref, o_ref):
    # Fused LayerNorm prologue + full-K matmul with a VMEM-resident weight.
    x = x_ref[...].astype(jnp.float32)
    ln = _ln_f32(x, g_ref[...], bln_ref[...]).astype(jnp.bfloat16)
    out = jnp.dot(ln, w_ref[...], preferred_element_type=jnp.float32) + b_ref[...]
    o_ref[...] = out.astype(o_ref.dtype)


def _mlp_kernel(x_ref, g_ref, bln_ref, w1_ref, b1_ref, w2_ref, b2_ref, o_ref):
    # Fused: o = x + fc2(quickgelu(fc1(LN(x)))).  fc1/fc2 weights are VMEM-resident and
    # the (tm, 4D) hidden activation never leaves VMEM.
    x = x_ref[...].astype(jnp.float32)
    ln = _ln_f32(x, g_ref[...], bln_ref[...]).astype(jnp.bfloat16)
    h = jnp.dot(ln, w1_ref[...], preferred_element_type=jnp.float32) + b1_ref[...]
    # QuickGELU: h * sigmoid(1.702 h), sigmoid via EUP exp + approx reciprocal.
    h = h * pl.reciprocal(1.0 + jnp.exp(-1.702 * h), approx=True)
    out = jnp.dot(h.astype(jnp.bfloat16), w2_ref[...],
                  preferred_element_type=jnp.float32)
    o_ref[...] = (out + b2_ref[...] + x).astype(o_ref.dtype)


def _attention_kernel(q_ref, k_ref, v_ref, bias_ref, o_ref, *, dh):
    # q/k/v refs: (1, S_pad, 128) bf16 lane blocks holding 128//dh heads side by side.
    # The 1/sqrt(dh) scale is already folded into the q projection weights.
    q = q_ref[0]
    k = k_ref[0]
    v = v_ref[0]
    bias = bias_ref[...]                       # (1, S_pad) additive key-padding mask
    hpb = q.shape[-1] // dh                    # heads in this lane block (static)
    outs = []
    for h in range(hpb):                       # static unroll (1, 2 or 4 heads)
        lo, hi = h * dh, (h + 1) * dh
        s = jax.lax.dot_general(q[:, lo:hi], k[:, lo:hi],
                                (((1,), (1,)), ((), ())),
                                preferred_element_type=jnp.float32)   # (S_pad, S_pad)
        s = s + bias
        m = jnp.max(s, axis=-1, keepdims=True)
        p = jnp.exp(s - m)
        inv = pl.reciprocal(jnp.sum(p, axis=-1, keepdims=True), approx=True)
        o = jnp.dot(p.astype(jnp.bfloat16), v[:, lo:hi],
                    preferred_element_type=jnp.float32)
        outs.append((o * inv).astype(o_ref.dtype))
    o_ref[0] = outs[0] if hpb == 1 else jnp.concatenate(outs, axis=-1)


# ------------------------------ Pallas wrappers -------------------------------

def matmul_bias(x, w, b, *, residual=None, out_dtype=jnp.bfloat16):
    """o = x @ w + b [+ residual]; full-K, weight resident, rows tiled (cdiv grid)."""
    M, K = x.shape
    K2, N = w.shape
    assert K == K2
    tm = _choose_row_tile(M)
    in_specs = [pl.BlockSpec((tm, K), lambda i: (i, 0)),
                pl.BlockSpec((K, N), lambda i: (0, 0)),     # resident weight
                pl.BlockSpec((1, N), lambda i: (0, 0))]
    args = [x.astype(jnp.bfloat16), w.astype(jnp.bfloat16),
            b.reshape(1, N).astype(jnp.float32)]
    if residual is not None:
        in_specs.append(pl.BlockSpec((tm, N), lambda i: (i, 0)))
        args.append(residual.astype(jnp.bfloat16))
        kernel = _matmul_res_kernel
    else:
        kernel = _matmul_kernel
    return pl.pallas_call(
        kernel,
        out_shape=jax.ShapeDtypeStruct((M, N), out_dtype),
        grid=(pl.cdiv(M, tm),),
        in_specs=in_specs,
        out_specs=pl.BlockSpec((tm, N), lambda i: (i, 0)),
        compiler_params=pltpu.CompilerParams(
            dimension_semantics=("parallel",),
            vmem_limit_bytes=_VMEM_LIMIT),
    )(*args)


def layernorm(x, g, b, *, out_dtype=jnp.bfloat16):
    M, D = x.shape
    tm = _choose_row_tile(M)
    return pl.pallas_call(
        _layernorm_kernel,
        out_shape=jax.ShapeDtypeStruct((M, D), out_dtype),
        grid=(pl.cdiv(M, tm),),
        in_specs=[pl.BlockSpec((tm, D), lambda i: (i, 0)),
                  pl.BlockSpec((1, D), lambda i: (0, 0)),
                  pl.BlockSpec((1, D), lambda i: (0, 0))],
        out_specs=pl.BlockSpec((tm, D), lambda i: (i, 0)),
        compiler_params=pltpu.CompilerParams(
            dimension_semantics=("parallel",),
            vmem_limit_bytes=_VMEM_LIMIT),
    )(x, g.reshape(1, D).astype(jnp.float32), b.reshape(1, D).astype(jnp.float32))


def ln_matmul_bias(x, g, bln, w, b, *, out_dtype=jnp.bfloat16):
    M, D = x.shape
    D2, N = w.shape
    assert D == D2
    tm = _choose_row_tile(M)
    return pl.pallas_call(
        _ln_matmul_kernel,
        out_shape=jax.ShapeDtypeStruct((M, N), out_dtype),
        grid=(pl.cdiv(M, tm),),
        in_specs=[pl.BlockSpec((tm, D), lambda i: (i, 0)),
                  pl.BlockSpec((1, D), lambda i: (0, 0)),
                  pl.BlockSpec((1, D), lambda i: (0, 0)),
                  pl.BlockSpec((D, N), lambda i: (0, 0)),    # resident weight
                  pl.BlockSpec((1, N), lambda i: (0, 0))],
        out_specs=pl.BlockSpec((tm, N), lambda i: (i, 0)),
        compiler_params=pltpu.CompilerParams(
            dimension_semantics=("parallel",),
            vmem_limit_bytes=_VMEM_LIMIT),
    )(x.astype(jnp.bfloat16), g.reshape(1, D).astype(jnp.float32),
      bln.reshape(1, D).astype(jnp.float32), w.astype(jnp.bfloat16),
      b.reshape(1, N).astype(jnp.float32))


def fused_mlp(x, g, bln, w1, b1, w2, b2, *, out_dtype=jnp.bfloat16):
    M, D = x.shape
    D2, Hdim = w1.shape
    assert D == D2 and w2.shape == (Hdim, D)
    tm = _choose_row_tile(M)
    return pl.pallas_call(
        _mlp_kernel,
        out_shape=jax.ShapeDtypeStruct((M, D), out_dtype),
        grid=(pl.cdiv(M, tm),),
        in_specs=[pl.BlockSpec((tm, D), lambda i: (i, 0)),
                  pl.BlockSpec((1, D), lambda i: (0, 0)),
                  pl.BlockSpec((1, D), lambda i: (0, 0)),
                  pl.BlockSpec((D, Hdim), lambda i: (0, 0)),   # resident fc1
                  pl.BlockSpec((1, Hdim), lambda i: (0, 0)),
                  pl.BlockSpec((Hdim, D), lambda i: (0, 0)),   # resident fc2
                  pl.BlockSpec((1, D), lambda i: (0, 0))],
        out_specs=pl.BlockSpec((tm, D), lambda i: (i, 0)),
        compiler_params=pltpu.CompilerParams(
            dimension_semantics=("parallel",),
            vmem_limit_bytes=_VMEM_LIMIT),
    )(x.astype(jnp.bfloat16), g.reshape(1, D).astype(jnp.float32),
      bln.reshape(1, D).astype(jnp.float32),
      w1.astype(jnp.bfloat16), b1.reshape(1, Hdim).astype(jnp.float32),
      w2.astype(jnp.bfloat16), b2.reshape(1, D).astype(jnp.float32))


def attention(qkv, key_bias, *, batch, s_pad, d_model, dh):
    """qkv: (B, S_pad, 3*D) bf16 with columns [q | k | v], heads contiguous (dh each).

    Grid (B, D/128); each step handles one 128-lane block (128//dh heads) of one image,
    reading lane-dense slices straight from qkv and writing a lane-dense slab of the
    (B, S_pad, D) output (the exact layout out_proj consumes).
    """
    assert d_model % _LANES == 0 and _LANES % dh == 0
    n_blk = d_model // _LANES
    q_spec = pl.BlockSpec((1, s_pad, _LANES), lambda b, j: (b, 0, j))
    k_spec = pl.BlockSpec((1, s_pad, _LANES), lambda b, j: (b, 0, n_blk + j))
    v_spec = pl.BlockSpec((1, s_pad, _LANES), lambda b, j: (b, 0, 2 * n_blk + j))
    bias_spec = pl.BlockSpec((1, s_pad), lambda b, j: (0, 0))
    out_spec = pl.BlockSpec((1, s_pad, _LANES), lambda b, j: (b, 0, j))
    return pl.pallas_call(
        functools.partial(_attention_kernel, dh=dh),
        out_shape=jax.ShapeDtypeStruct((batch, s_pad, d_model), jnp.bfloat16),
        grid=(batch, n_blk),
        in_specs=[q_spec, k_spec, v_spec, bias_spec],
        out_specs=out_spec,
        compiler_params=pltpu.CompilerParams(
            dimension_semantics=("parallel", "parallel"),
            vmem_limit_bytes=_VMEM_LIMIT),
    )(qkv, qkv, qkv, key_bias)


# ------------------------------ CLIP visual model ------------------------------

def init_clip_visual_params(key, *, width, layers, heads, patch, in_ch,
                            out_dim, num_patches):
    keys = iter(jax.random.split(key, 8 + 12 * layers))
    s = 0.02

    def nrm(shape, dtype=jnp.bfloat16):
        return (s * jax.random.normal(next(keys), shape)).astype(dtype)

    params = {
        # conv1 weight stored pre-flattened: [(C*P*P), width] (bias=False in CLIP)
        "conv_w": nrm((in_ch * patch * patch, width)),
        "class_emb": nrm((width,), jnp.float32),
        "pos_emb": nrm((num_patches + 1, width), jnp.float32),
        "ln_pre_g": jnp.ones((width,), jnp.float32),
        "ln_pre_b": jnp.zeros((width,), jnp.float32),
        "ln_post_g": jnp.ones((width,), jnp.float32),
        "ln_post_b": jnp.zeros((width,), jnp.float32),
        "proj": nrm((width, out_dim)),
        "blocks": [],
    }
    for _ in range(layers):
        params["blocks"].append({
            "ln1_g": jnp.ones((width,), jnp.float32),
            "ln1_b": jnp.zeros((width,), jnp.float32),
            "in_proj_w": nrm((width, 3 * width)),     # [D, 3D], columns [q|k|v]
            "in_proj_b": jnp.zeros((3 * width,), jnp.float32),
            "out_proj_w": nrm((width, width)),
            "out_proj_b": jnp.zeros((width,), jnp.float32),
            "ln2_g": jnp.ones((width,), jnp.float32),
            "ln2_b": jnp.zeros((width,), jnp.float32),
            "fc1_w": nrm((width, 4 * width)),
            "fc1_b": jnp.zeros((4 * width,), jnp.float32),
            "fc2_w": nrm((4 * width, width)),
            "fc2_b": jnp.zeros((width,), jnp.float32),
        })
    return params


def fold_attention_scale(params, *, heads):
    """One-time param prep: fold 1/sqrt(Dh) into the q columns of in_proj weight/bias."""
    D = params["conv_w"].shape[1]
    scale = 1.0 / math.sqrt(D // heads)
    col_scale = jnp.concatenate(
        [jnp.full((D,), scale, jnp.float32), jnp.ones((2 * D,), jnp.float32)])
    new_blocks = []
    for blk in params["blocks"]:
        blk = dict(blk)
        blk["in_proj_w"] = (blk["in_proj_w"].astype(jnp.float32)
                            * col_scale[None, :]).astype(blk["in_proj_w"].dtype)
        blk["in_proj_b"] = (blk["in_proj_b"].astype(jnp.float32)
                            * col_scale).astype(blk["in_proj_b"].dtype)
        new_blocks.append(blk)
    out = dict(params)
    out["blocks"] = new_blocks
    return out


def clip_visual_forward(params, images, *, patch, heads):
    """images: NCHW float32 [B, C, H, W]. Returns [B, out_dim] float32."""
    B, C, H, W = images.shape
    gh, gw = H // patch, W // patch
    Np = gh * gw
    D = params["conv_w"].shape[1]
    Dh = D // heads
    assert D % _LANES == 0, "model width must be a multiple of 128"
    assert _LANES % Dh == 0, "head dim must divide 128"

    # ---- patch embedding (conv stride==kernel==patch, no bias) as a tiled matmul ----
    p = images.reshape(B, C, gh, patch, gw, patch)
    p = p.transpose(0, 2, 4, 1, 3, 5).reshape(B * Np, C * patch * patch)
    x = matmul_bias(p, params["conv_w"], jnp.zeros((D,), jnp.float32),
                    out_dtype=jnp.float32).reshape(B, Np, D)

    # ---- class token + positional embedding (one-time XLA glue) ----
    cls = jnp.broadcast_to(params["class_emb"].reshape(1, 1, D), (B, 1, D))
    x = jnp.concatenate([cls, x], axis=1)                      # [B, S, D]
    S = Np + 1
    x = x + params["pos_emb"].reshape(1, S, D)

    # ---- pad sequence to a sublane multiple; padded keys masked via additive bias ----
    S_pad = _round_up(S, 8)
    if S_pad != S:
        x = jnp.pad(x, ((0, 0), (0, S_pad - S), (0, 0)))
    M = B * S_pad
    key_bias = jnp.where(jnp.arange(S_pad) < S, 0.0, -1e30)
    key_bias = key_bias.astype(jnp.float32).reshape(1, S_pad)

    # ---- ln_pre ----
    x2d = layernorm(x.reshape(M, D), params["ln_pre_g"], params["ln_pre_b"])

    # ---- transformer resblocks ----
    for blk in params["blocks"]:
        # fused LN1 + QKV projection (weight resident, scale pre-folded into q columns)
        qkv = ln_matmul_bias(x2d, blk["ln1_g"], blk["ln1_b"],
                             blk["in_proj_w"], blk["in_proj_b"])   # [M, 3D] bf16
        # attention reads qkv lane blocks directly; output already (B, S_pad, D)
        attn = attention(qkv.reshape(B, S_pad, 3 * D), key_bias,
                         batch=B, s_pad=S_pad, d_model=D, dh=Dh)
        # out_proj with fused bias + residual add
        x2d = matmul_bias(attn.reshape(M, D), blk["out_proj_w"], blk["out_proj_b"],
                          residual=x2d)
        # fused LN2 + fc1 + QuickGELU + fc2 + bias + residual (hidden stays in VMEM)
        x2d = fused_mlp(x2d, blk["ln2_g"], blk["ln2_b"],
                        blk["fc1_w"], blk["fc1_b"], blk["fc2_w"], blk["fc2_b"])

    # ---- fused ln_post + final projection on the class token (proj has no bias) ----
    cls_tok = x2d.reshape(B, S_pad, D)[:, 0, :]                  # [B, D]
    out_dim = params["proj"].shape[1]
    return ln_matmul_bias(cls_tok, params["ln_post_g"], params["ln_post_b"],
                          params["proj"], jnp.zeros((out_dim,), jnp.float32),
                          out_dtype=jnp.float32)                 # [B, out_dim]


def clip_encoder_forward(params, images_or_text, *, patch, heads,
                         encode_image=True, num_layers=-1, featurize=True):
    """Mirror of CLIPEncoder.forward for the image path."""
    assert encode_image, "Only the image-encoding path is implemented."
    assert num_layers == -1
    return clip_visual_forward(params, images_or_text, patch=patch, heads=heads)


# ------------------------------------- main -------------------------------------

if __name__ == "__main__":
    # Small synthetic config: 16x16 RGB images, 8x8 patches -> 4 patches, seq=5 (pad to 8).
    # width=256 / heads=4 gives Dh=64 (same head dim as real CLIP), D % 128 == 0.
    B, C, H, W = 2, 3, 16, 16
    PATCH = 8
    WIDTH = 256
    HEADS = 4
    LAYERS = 2
    OUT_DIM = 128
    NUM_PATCHES = (H // PATCH) * (W // PATCH)

    key = jax.random.PRNGKey(0)
    k_img, k_par = jax.random.split(key)
    images = jax.random.normal(k_img, (B, C, H, W), dtype=jnp.float32)

    params = init_clip_visual_params(
        k_par, width=WIDTH, layers=LAYERS, heads=HEADS, patch=PATCH,
        in_ch=C, out_dim=OUT_DIM, num_patches=NUM_PATCHES)
    params = fold_attention_scale(params, heads=HEADS)   # one-time param prep

    fwd = jax.jit(functools.partial(clip_encoder_forward, patch=PATCH, heads=HEADS,
                                    encode_image=True, num_layers=-1, featurize=True))
    out = fwd(params, images)
    out = jax.block_until_ready(out)
    assert out.shape == (B, OUT_DIM), out.shape
    assert bool(jnp.all(jnp.isfinite(out)))
    print("KERNEL_OK")
</pallas_src>

<mosaic_0001>
module attributes {stable_mosaic.version = 11 : i64} {
  func.func @_matmul_kernel(%arg0: i32, %arg1: memref<8x192xbf16, #tpu.memory_space<vmem>>, %arg2: memref<192x256xbf16, #tpu.memory_space<vmem>>, %arg3: memref<1x256xf32, #tpu.memory_space<vmem>>, %arg4: memref<8x256xf32, #tpu.memory_space<vmem>>) attributes {dimension_semantics = [#tpu.dimension_semantics<parallel>], iteration_bounds = array<i64: 1>, scalar_prefetch = 0 : i64, scratch_operands = 0 : i64, tpu.core_type = #tpu.core_type<tc>, window_params = [{transform_indices = @transform_0, window_bounds = array<i64: 8, 192>}, {pipeline_mode = #tpu.pipeline_mode<synchronous>, transform_indices = @transform_1, window_bounds = array<i64: 192, 256>}, {pipeline_mode = #tpu.pipeline_mode<synchronous>, transform_indices = @transform_2, window_bounds = array<i64: 1, 256>}, {transform_indices = @transform_3, window_bounds = array<i64: 8, 256>}]} {
    %c0 = arith.constant 0 : index
    %c0_0 = arith.constant 0 : index
    %0 = vector.load %arg1[%c0, %c0_0] : memref<8x192xbf16, #tpu.memory_space<vmem>>, vector<8x192xbf16>
    %c0_1 = arith.constant 0 : index
    %c0_2 = arith.constant 0 : index
    %1 = vector.load %arg2[%c0_1, %c0_2] : memref<192x256xbf16, #tpu.memory_space<vmem>>, vector<192x256xbf16>
    %cst = arith.constant dense<0.000000e+00> : vector<8x256xf32>
    %2 = tpu.matmul %0, %1, %cst {dimension_numbers = #tpu.dot_dimension_numbers<[1], [0], [0], [1], [0, 0, 1, 1], [], []>} : vector<8x192xbf16>, vector<192x256xbf16>, vector<8x256xf32> -> vector<8x256xf32>
    %c0_3 = arith.constant 0 : index
    %c0_4 = arith.constant 0 : index
    %3 = vector.load %arg3[%c0_3, %c0_4] : memref<1x256xf32, #tpu.memory_space<vmem>>, vector<1x256xf32>
    %4 = vector.broadcast %3 : vector<1x256xf32> to vector<8x256xf32>
    %5 = arith.addf %2, %4 : vector<8x256xf32>
    %c0_5 = arith.constant 0 : index
    %c0_6 = arith.constant 0 : index
    %6 = vector.load %arg4[%c0_5, %c0_6] : memref<8x256xf32, #tpu.memory_space<vmem>>, vector<8x256xf32>
    tpu.vector_store %arg4[%c0_5, %c0_6], %5 {strides = array<i32>} : memref<8x256xf32, #tpu.memory_space<vmem>>, vector<8x256xf32>,
    return
  }
  func.func @transform_0(%arg0: i32) -> (i32, i32) {
    %c0_i32 = arith.constant 0 : i32
    %c0_i32_0 = arith.constant 0 : i32
    return %arg0, %c0_i32 : i32, i32
  }
  func.func @transform_1(%arg0: i32) -> (i32, i32) {
    %c0_i32 = arith.constant 0 : i32
    %c0_i32_0 = arith.constant 0 : i32
    %c0_i32_1 = arith.constant 0 : i32
    return %c0_i32, %c0_i32_0 : i32, i32
  }
  func.func @transform_2(%arg0: i32) -> (i32, i32) {
    %c0_i32 = arith.constant 0 : i32
    %c0_i32_0 = arith.constant 0 : i32
    %c0_i32_1 = arith.constant 0 : i32
    return %c0_i32, %c0_i32_0 : i32, i32
  }
  func.func @transform_3(%arg0: i32) -> (i32, i32) {
    %c0_i32 = arith.constant 0 : i32
    %c0_i32_0 = arith.constant 0 : i32
    return %arg0, %c0_i32 : i32, i32
  }
}

module attributes {stable_mosaic.version = 11 : i64} {
  func.func @_layernorm_kernel(%arg0: i32, %arg1: memref<8x256xf32, #tpu.memory_space<vmem>>, %arg2: memref<1x256xf32, #tpu.memory_space<vmem>>, %arg3: memref<1x256xf32, #tpu.memory_space<vmem>>, %arg4: memref<8x256xbf16, #tpu.memory_space<vmem>>) attributes {dimension_semantics = [#tpu.dimension_semantics<parallel>], iteration_bounds = array<i64: 2>, scalar_prefetch = 0 : i64, scratch_operands = 0 : i64, tpu.core_type = #tpu.core_type<tc>, window_params = [{transform_indices = @transform_0, window_bounds = array<i64: 8, 256>}, {pipeline_mode = #tpu.pipeline_mode<synchronous>, transform_indices = @transform_1, window_bounds = array<i64: 1, 256>}, {pipeline_mode = #tpu.pipeline_mode<synchronous>, transform_indices = @transform_2, window_bounds = array<i64: 1, 256>}, {transform_indices = @transform_3, window_bounds = array<i64: 8, 256>}]} {
    %c0 = arith.constant 0 : index
    %c0_0 = arith.constant 0 : index
    %0 = vector.load %arg1[%c0, %c0_0] : memref<8x256xf32, #tpu.memory_space<vmem>>, vector<8x256xf32>
    %c0_1 = arith.constant 0 : index
    %c0_2 = arith.constant 0 : index
    %1 = vector.load %arg2[%c0_1, %c0_2] : memref<1x256xf32, #tpu.memory_space<vmem>>, vector<1x256xf32>
    %c0_3 = arith.constant 0 : index
    %c0_4 = arith.constant 0 : index
    %2 = vector.load %arg3[%c0_3, %c0_4] : memref<1x256xf32, #tpu.memory_space<vmem>>, vector<1x256xf32>
    %cst = arith.constant dense<0.000000e+00> : vector<8xf32>
    %3 = vector.multi_reduction <add>, %0, %cst [1] : vector<8x256xf32> to vector<8xf32>
    %4 = vector.shape_cast %3 : vector<8xf32> to vector<8x1xf32>
    %cst_5 = arith.constant 2.560000e+02 : f32
    %5 = vector.broadcast %cst_5 : f32 to vector<8x1xf32>
    %6 = arith.divf %4, %5 : vector<8x1xf32>
    %7 = vector.broadcast %6 : vector<8x1xf32> to vector<8x256xf32>
    %8 = arith.subf %0, %7 : vector<8x256xf32>
    %9 = arith.mulf %8, %8 : vector<8x256xf32>
    %cst_6 = arith.constant dense<0.000000e+00> : vector<8xf32>
    %10 = vector.multi_reduction <add>, %9, %cst_6 [1] : vector<8x256xf32> to vector<8xf32>
    %11 = vector.shape_cast %10 : vector<8xf32> to vector<8x1xf32>
    %cst_7 = arith.constant 2.560000e+02 : f32
    %12 = vector.broadcast %cst_7 : f32 to vector<8x1xf32>
    %13 = arith.divf %11, %12 : vector<8x1xf32>
    %cst_8 = arith.constant 9.99999974E-6 : f32
    %14 = vector.broadcast %cst_8 : f32 to vector<8x1xf32>
    %15 = arith.addf %13, %14 : vector<8x1xf32>
    %16 = math.rsqrt %15 : vector<8x1xf32>
    %17 = vector.broadcast %16 : vector<8x1xf32> to vector<8x256xf32>
    %18 = arith.mulf %8, %17 : vector<8x256xf32>
    %19 = vector.broadcast %1 : vector<1x256xf32> to vector<8x256xf32>
    %20 = arith.mulf %18, %19 : vector<8x256xf32>
    %21 = vector.broadcast %2 : vector<1x256xf32> to vector<8x256xf32>
    %22 = arith.addf %20, %21 : vector<8x256xf32>
    %23 = arith.truncf %22 : vector<8x256xf32> to vector<8x256xbf16>
    %c0_9 = arith.constant 0 : index
    %c0_10 = arith.constant 0 : index
    %24 = vector.load %arg4[%c0_9, %c0_10] : memref<8x256xbf16, #tpu.memory_space<vmem>>, vector<8x256xbf16>
    tpu.vector_store %arg4[%c0_9, %c0_10], %23 {strides = array<i32>} : memref<8x256xbf16, #tpu.memory_space<vmem>>, vector<8x256xbf16>,
    return
  }
  func.func @transform_0(%arg0: i32) -> (i32, i32) {
    %c0_i32 = arith.constant 0 : i32
    %c0_i32_0 = arith.constant 0 : i32
    return %arg0, %c0_i32 : i32, i32
  }
  func.func @transform_1(%arg0: i32) -> (i32, i32) {
    %c0_i32 = arith.constant 0 : i32
    %c0_i32_0 = arith.constant 0 : i32
    %c0_i32_1 = arith.constant 0 : i32
    return %c0_i32, %c0_i32_0 : i32, i32
  }
  func.func @transform_2(%arg0: i32) -> (i32, i32) {
    %c0_i32 = arith.constant 0 : i32
    %c0_i32_0 = arith.constant 0 : i32
    %c0_i32_1 = arith.constant 0 : i32
    return %c0_i32, %c0_i32_0 : i32, i32
  }
  func.func @transform_3(%arg0: i32) -> (i32, i32) {
    %c0_i32 = arith.constant 0 : i32
    %c0_i32_0 = arith.constant 0 : i32
    return %arg0, %c0_i32 : i32, i32
  }
}

module attributes {stable_mosaic.version = 11 : i64} {
  func.func @_ln_matmul_kernel(%arg0: i32, %arg1: memref<8x256xbf16, #tpu.memory_space<vmem>>, %arg2: memref<1x256xf32, #tpu.memory_space<vmem>>, %arg3: memref<1x256xf32, #tpu.memory_space<vmem>>, %arg4: memref<256x768xbf16, #tpu.memory_space<vmem>>, %arg5: memref<1x768xf32, #tpu.memory_space<vmem>>, %arg6: memref<8x768xbf16, #tpu.memory_space<vmem>>) attributes {dimension_semantics = [#tpu.dimension_semantics<parallel>], iteration_bounds = array<i64: 2>, scalar_prefetch = 0 : i64, scratch_operands = 0 : i64, tpu.core_type = #tpu.core_type<tc>, window_params = [{transform_indices = @transform_0, window_bounds = array<i64: 8, 256>}, {pipeline_mode = #tpu.pipeline_mode<synchronous>, transform_indices = @transform_1, window_bounds = array<i64: 1, 256>}, {pipeline_mode = #tpu.pipeline_mode<synchronous>, transform_indices = @transform_2, window_bounds = array<i64: 1, 256>}, {pipeline_mode = #tpu.pipeline_mode<synchronous>, transform_indices = @transform_3, window_bounds = array<i64: 256, 768>}, {pipeline_mode = #tpu.pipeline_mode<synchronous>, transform_indices = @transform_4, window_bounds = array<i64: 1, 768>}, {transform_indices = @transform_5, window_bounds = array<i64: 8, 768>}]} {
    %c0 = arith.constant 0 : index
    %c0_0 = arith.constant 0 : index
    %0 = vector.load %arg1[%c0, %c0_0] : memref<8x256xbf16, #tpu.memory_space<vmem>>, vector<8x256xbf16>
    %1 = arith.extf %0 : vector<8x256xbf16> to vector<8x256xf32>
    %c0_1 = arith.constant 0 : index
    %c0_2 = arith.constant 0 : index
    %2 = vector.load %arg2[%c0_1, %c0_2] : memref<1x256xf32, #tpu.memory_space<vmem>>, vector<1x256xf32>
    %c0_3 = arith.constant 0 : index
    %c0_4 = arith.constant 0 : index
    %3 = vector.load %arg3[%c0_3, %c0_4] : memref<1x256xf32, #tpu.memory_space<vmem>>, vector<1x256xf32>
    %cst = arith.constant dense<0.000000e+00> : vector<8xf32>
    %4 = vector.multi_reduction <add>, %1, %cst [1] : vector<8x256xf32> to vector<8xf32>
    %5 = vector.shape_cast %4 : vector<8xf32> to vector<8x1xf32>
    %cst_5 = arith.constant 2.560000e+02 : f32
    %6 = vector.broadcast %cst_5 : f32 to vector<8x1xf32>
    %7 = arith.divf %5, %6 : vector<8x1xf32>
    %8 = vector.broadcast %7 : vector<8x1xf32> to vector<8x256xf32>
    %9 = arith.subf %1, %8 : vector<8x256xf32>
    %10 = arith.mulf %9, %9 : vector<8x256xf32>
    %cst_6 = arith.constant dense<0.000000e+00> : vector<8xf32>
    %11 = vector.multi_reduction <add>, %10, %cst_6 [1] : vector<8x256xf32> to vector<8xf32>
    %12 = vector.shape_cast %11 : vector<8xf32> to vector<8x1xf32>
    %cst_7 = arith.constant 2.560000e+02 : f32
    %13 = vector.broadcast %cst_7 : f32 to vector<8x1xf32>
    %14 = arith.divf %12, %13 : vector<8x1xf32>
    %cst_8 = arith.constant 9.99999974E-6 : f32
    %15 = vector.broadcast %cst_8 : f32 to vector<8x1xf32>
    %16 = arith.addf %14, %15 : vector<8x1xf32>
    %17 = math.rsqrt %16 : vector<8x1xf32>
    %18 = vector.broadcast %17 : vector<8x1xf32> to vector<8x256xf32>
    %19 = arith.mulf %9, %18 : vector<8x256xf32>
    %20 = vector.broadcast %2 : vector<1x256xf32> to vector<8x256xf32>
    %21 = arith.mulf %19, %20 : vector<8x256xf32>
    %22 = vector.broadcast %3 : vector<1x256xf32> to vector<8x256xf32>
    %23 = arith.addf %21, %22 : vector<8x256xf32>
    %24 = arith.truncf %23 : vector<8x256xf32> to vector<8x256xbf16>
    %c0_9 = arith.constant 0 : index
    %c0_10 = arith.constant 0 : index
    %25 = vector.load %arg4[%c0_9, %c0_10] : memref<256x768xbf16, #tpu.memory_space<vmem>>, vector<256x768xbf16>
    %cst_11 = arith.constant dense<0.000000e+00> : vector<8x768xf32>
    %26 = tpu.matmul %24, %25, %cst_11 {dimension_numbers = #tpu.dot_dimension_numbers<[1], [0], [0], [1], [0, 0, 1, 1], [], []>} : vector<8x256xbf16>, vector<256x768xbf16>, vector<8x768xf32> -> vector<8x768xf32>
    %c0_12 = arith.constant 0 : index
    %c0_13 = arith.constant 0 : index
    %27 = vector.load %arg5[%c0_12, %c0_13] : memref<1x768xf32, #tpu.memory_space<vmem>>, vector<1x768xf32>
    %28 = vector.broadcast %27 : vector<1x768xf32> to vector<8x768xf32>
    %29 = arith.addf %26, %28 : vector<8x768xf32>
    %30 = arith.truncf %29 : vector<8x768xf32> to vector<8x768xbf16>
    %c0_14 = arith.constant 0 : index
    %c0_15 = arith.constant 0 : index
    %31 = vector.load %arg6[%c0_14, %c0_15] : memref<8x768xbf16, #tpu.memory_space<vmem>>, vector<8x768xbf16>
    tpu.vector_store %arg6[%c0_14, %c0_15], %30 {strides = array<i32>} : memref<8x768xbf16, #tpu.memory_space<vmem>>, vector<8x768xbf16>,
    return
  }
  func.func @transform_0(%arg0: i32) -> (i32, i32) {
    %c0_i32 = arith.constant 0 : i32
    %c0_i32_0 = arith.constant 0 : i32
    return %arg0, %c0_i32 : i32, i32
  }
  func.func @transform_1(%arg0: i32) -> (i32, i32) {
    %c0_i32 = arith.constant 0 : i32
    %c0_i32_0 = arith.constant 0 : i32
    %c0_i32_1 = arith.constant 0 : i32
    return %c0_i32, %c0_i32_0 : i32, i32
  }
  func.func @transform_2(%arg0: i32) -> (i32, i32) {
    %c0_i32 = arith.constant 0 : i32
    %c0_i32_0 = arith.constant 0 : i32
    %c0_i32_1 = arith.constant 0 : i32
    return %c0_i32, %c0_i32_0 : i32, i32
  }
  func.func @transform_3(%arg0: i32) -> (i32, i32) {
    %c0_i32 = arith.constant 0 : i32
    %c0_i32_0 = arith.constant 0 : i32
    %c0_i32_1 = arith.constant 0 : i32
    return %c0_i32, %c0_i32_0 : i32, i32
  }
  func.func @transform_4(%arg0: i32) -> (i32, i32) {
    %c0_i32 = arith.constant 0 : i32
    %c0_i32_0 = arith.constant 0 : i32
    %c0_i32_1 = arith.constant 0 : i32
    return %c0_i32, %c0_i32_0 : i32, i32
  }
  func.func @transform_5(%arg0: i32) -> (i32, i32) {
    %c0_i32 = arith.constant 0 : i32
    %c0_i32_0 = arith.constant 0 : i32
    return %arg0, %c0_i32 : i32, i32
  }
}

module attributes {stable_mosaic.version = 11 : i64} {
  func.func @_attention_kernel(%arg0: i32, %arg1: i32, %arg2: memref<1x8x128xbf16, #tpu.memory_space<vmem>>, %arg3: memref<1x8x128xbf16, #tpu.memory_space<vmem>>, %arg4: memref<1x8x128xbf16, #tpu.memory_space<vmem>>, %arg5: memref<1x8xf32, #tpu.memory_space<vmem>>, %arg6: memref<1x8x128xbf16, #tpu.memory_space<vmem>>) attributes {dimension_semantics = [#tpu.dimension_semantics<parallel>, #tpu.dimension_semantics<parallel>], iteration_bounds = array<i64: 2, 2>, scalar_prefetch = 0 : i64, scratch_operands = 0 : i64, tpu.core_type = #tpu.core_type<tc>, window_params = [{transform_indices = @transform_0, window_bounds = array<i64: 1, 8, 128>}, {transform_indices = @transform_1, window_bounds = array<i64: 1, 8, 128>}, {transform_indices = @transform_2, window_bounds = array<i64: 1, 8, 128>}, {pipeline_mode = #tpu.pipeline_mode<synchronous>, transform_indices = @transform_3, window_bounds = array<i64: 1, 8>}, {transform_indices = @transform_4, window_bounds = array<i64: 1, 8, 128>}]} {
    %c0 = arith.constant 0 : index
    %c0_0 = arith.constant 0 : index
    %c0_1 = arith.constant 0 : index
    %0 = vector.load %arg2[%c0, %c0_0, %c0_1] : memref<1x8x128xbf16, #tpu.memory_space<vmem>>, vector<1x8x128xbf16>
    %1 = vector.shape_cast %0 : vector<1x8x128xbf16> to vector<8x128xbf16>
    %c0_2 = arith.constant 0 : index
    %c0_3 = arith.constant 0 : index
    %c0_4 = arith.constant 0 : index
    %2 = vector.load %arg3[%c0_2, %c0_3, %c0_4] : memref<1x8x128xbf16, #tpu.memory_space<vmem>>, vector<1x8x128xbf16>
    %3 = vector.shape_cast %2 : vector<1x8x128xbf16> to vector<8x128xbf16>
    %c0_5 = arith.constant 0 : index
    %c0_6 = arith.constant 0 : index
    %c0_7 = arith.constant 0 : index
    %4 = vector.load %arg4[%c0_5, %c0_6, %c0_7] : memref<1x8x128xbf16, #tpu.memory_space<vmem>>, vector<1x8x128xbf16>
    %5 = vector.shape_cast %4 : vector<1x8x128xbf16> to vector<8x128xbf16>
    %c0_8 = arith.constant 0 : index
    %c0_9 = arith.constant 0 : index
    %6 = vector.load %arg5[%c0_8, %c0_9] : memref<1x8xf32, #tpu.memory_space<vmem>>, vector<1x8xf32>
    %7 = vector.extract_strided_slice %1 {offsets = [0, 0], sizes = [8, 64], strides = [1, 1]} : vector<8x128xbf16> to vector<8x64xbf16>
    %8 = vector.extract_strided_slice %3 {offsets = [0, 0], sizes = [8, 64], strides = [1, 1]} : vector<8x128xbf16> to vector<8x64xbf16>
    %cst = arith.constant dense<0.000000e+00> : vector<8x8xf32>
    %9 = tpu.matmul %7, %8, %cst {dimension_numbers = #tpu.dot_dimension_numbers<[1], [1], [0], [0], [0, 0, 1, 0], [], []>} : vector<8x64xbf16>, vector<8x64xbf16>, vector<8x8xf32> -> vector<8x8xf32>
    %10 = vector.broadcast %6 : vector<1x8xf32> to vector<8x8xf32>
    %11 = arith.addf %9, %10 : vector<8x8xf32>
    %cst_10 = arith.constant dense<0xFF800000> : vector<8xf32>
    %12 = vector.multi_reduction <maximumf>, %11, %cst_10 [1] : vector<8x8xf32> to vector<8xf32>
    %13 = vector.shape_cast %12 : vector<8xf32> to vector<8x1xf32>
    %14 = vector.broadcast %13 : vector<8x1xf32> to vector<8x8xf32>
    %15 = arith.subf %11, %14 : vector<8x8xf32>
    %16 = math.exp %15 : vector<8x8xf32>
    %cst_11 = arith.constant dense<0.000000e+00> : vector<8xf32>
    %17 = vector.multi_reduction <add>, %16, %cst_11 [1] : vector<8x8xf32> to vector<8xf32>
    %18 = vector.shape_cast %17 : vector<8xf32> to vector<8x1xf32>
    %19 = tpu.reciprocal %18 {approx = true} : vector<8x1xf32> -> vector<8x1xf32>
    %20 = arith.truncf %16 : vector<8x8xf32> to vector<8x8xbf16>
    %21 = vector.extract_strided_slice %5 {offsets = [0, 0], sizes = [8, 64], strides = [1, 1]} : vector<8x128xbf16> to vector<8x64xbf16>
    %cst_12 = arith.constant dense<0.000000e+00> : vector<8x64xf32>
    %22 = tpu.matmul %20, %21, %cst_12 {dimension_numbers = #tpu.dot_dimension_numbers<[1], [0], [0], [1], [0, 0, 1, 1], [], []>} : vector<8x8xbf16>, vector<8x64xbf16>, vector<8x64xf32> -> vector<8x64xf32>
    %23 = vector.broadcast %19 : vector<8x1xf32> to vector<8x64xf32>
    %24 = arith.mulf %22, %23 : vector<8x64xf32>
    %25 = arith.truncf %24 : vector<8x64xf32> to vector<8x64xbf16>
    %26 = vector.extract_strided_slice %1 {offsets = [0, 64], sizes = [8, 64], strides = [1, 1]} : vector<8x128xbf16> to vector<8x64xbf16>
    %27 = vector.extract_strided_slice %3 {offsets = [0, 64], sizes = [8, 64], strides = [1, 1]} : vector<8x128xbf16> to vector<8x64xbf16>
    %cst_13 = arith.constant dense<0.000000e+00> : vector<8x8xf32>
    %28 = tpu.matmul %26, %27, %cst_13 {dimension_numbers = #tpu.dot_dimension_numbers<[1], [1], [0], [0], [0, 0, 1, 0], [], []>} : vector<8x64xbf16>, vector<8x64xbf16>, vector<8x8xf32> -> vector<8x8xf32>
    %29 = vector.broadcast %6 : vector<1x8xf32> to vector<8x8xf32>
    %30 = arith.addf %28, %29 : vector<8x8xf32>
    %cst_14 = arith.constant dense<0xFF800000> : vector<8xf32>
    %31 = vector.multi_reduction <maximumf>, %30, %cst_14 [1] : vector<8x8xf32> to vector<8xf32>
    %32 = vector.shape_cast %31 : vector<8xf32> to vector<8x1xf32>
    %33 = vector.broadcast %32 : vector<8x1xf32> to vector<8x8xf32>
    %34 = arith.subf %30, %33 : vector<8x8xf32>
    %35 = math.exp %34 : vector<8x8xf32>
    %cst_15 = arith.constant dense<0.000000e+00> : vector<8xf32>
    %36 = vector.multi_reduction <add>, %35, %cst_15 [1] : vector<8x8xf32> to vector<8xf32>
    %37 = vector.shape_cast %36 : vector<8xf32> to vector<8x1xf32>
    %38 = tpu.reciprocal %37 {approx = true} : vector<8x1xf32> -> vector<8x1xf32>
    %39 = arith.truncf %35 : vector<8x8xf32> to vector<8x8xbf16>
    %40 = vector.extract_strided_slice %5 {offsets = [0, 64], sizes = [8, 64], strides = [1, 1]} : vector<8x128xbf16> to vector<8x64xbf16>
    %cst_16 = arith.constant dense<0.000000e+00> : vector<8x64xf32>
    %41 = tpu.matmul %39, %40, %cst_16 {dimension_numbers = #tpu.dot_dimension_numbers<[1], [0], [0], [1], [0, 0, 1, 1], [], []>} : vector<8x8xbf16>, vector<8x64xbf16>, vector<8x64xf32> -> vector<8x64xf32>
    %42 = vector.broadcast %38 : vector<8x1xf32> to vector<8x64xf32>
    %43 = arith.mulf %41, %42 : vector<8x64xf32>
    %44 = arith.truncf %43 : vector<8x64xf32> to vector<8x64xbf16>
    %45 = tpu.concatenate %25, %44 in 1 : vector<8x64xbf16>, vector<8x64xbf16> -> vector<8x128xbf16>
    %c0_17 = arith.constant 0 : index
    %c0_18 = arith.constant 0 : index
    %c0_19 = arith.constant 0 : index
    %46 = vector.load %arg6[%c0_17, %c0_18, %c0_19] : memref<1x8x128xbf16, #tpu.memory_space<vmem>>, vector<1x8x128xbf16>
    %47 = vector.shape_cast %46 : vector<1x8x128xbf16> to vector<8x128xbf16>
    %48 = vector.shape_cast %45 : vector<8x128xbf16> to vector<1x8x128xbf16>
    tpu.vector_store %arg6[%c0_17, %c0_18, %c0_19], %48 {strides = array<i32>} : memref<1x8x128xbf16, #tpu.memory_space<vmem>>, vector<1x8x128xbf16>,
    return
  }
  func.func @transform_0(%arg0: i32, %arg1: i32) -> (i32, i32, i32) {
    %c0_i32 = arith.constant 0 : i32
    %c0_i32_0 = arith.constant 0 : i32
    return %arg0, %c0_i32, %arg1 : i32, i32, i32
  }
  func.func @transform_1(%arg0: i32, %arg1: i32) -> (i32, i32, i32) {
    %c2_i32 = arith.constant 2 : i32
    %0 = arith.addi %c2_i32, %arg1 : i32
    %c0_i32 = arith.constant 0 : i32
    %c0_i32_0 = arith.constant 0 : i32
    return %arg0, %c0_i32, %0 : i32, i32, i32
  }
  func.func @transform_2(%arg0: i32, %arg1: i32) -> (i32, i32, i32) {
    %c4_i32 = arith.constant 4 : i32
    %0 = arith.addi %c4_i32, %arg1 : i32
    %c0_i32 = arith.constant 0 : i32
    %c0_i32_0 = arith.constant 0 : i32
    return %arg0, %c0_i32, %0 : i32, i32, i32
  }
  func.func @transform_3(%arg0: i32, %arg1: i32) -> (i32, i32) {
    %c0_i32 = arith.constant 0 : i32
    %c0_i32_0 = arith.constant 0 : i32
    %c0_i32_1 = arith.constant 0 : i32
    return %c0_i32, %c0_i32_0 : i32, i32
  }
  func.func @transform_4(%arg0: i32, %arg1: i32) -> (i32, i32, i32) {
    %c0_i32 = arith.constant 0 : i32
    %c0_i32_0 = arith.constant 0 : i32
    return %arg0, %c0_i32, %arg1 : i32, i32, i32
  }
}

module attributes {stable_mosaic.version = 11 : i64} {
  func.func @_matmul_res_kernel(%arg0: i32, %arg1: memref<8x256xbf16, #tpu.memory_space<vmem>>, %arg2: memref<256x256xbf16, #tpu.memory_space<vmem>>, %arg3: memref<1x256xf32, #tpu.memory_space<vmem>>, %arg4: memref<8x256xbf16, #tpu.memory_space<vmem>>, %arg5: memref<8x256xbf16, #tpu.memory_space<vmem>>) attributes {dimension_semantics = [#tpu.dimension_semantics<parallel>], iteration_bounds = array<i64: 2>, scalar_prefetch = 0 : i64, scratch_operands = 0 : i64, tpu.core_type = #tpu.core_type<tc>, window_params = [{transform_indices = @transform_0, window_bounds = array<i64: 8, 256>}, {pipeline_mode = #tpu.pipeline_mode<synchronous>, transform_indices = @transform_1, window_bounds = array<i64: 256, 256>}, {pipeline_mode = #tpu.pipeline_mode<synchronous>, transform_indices = @transform_2, window_bounds = array<i64: 1, 256>}, {transform_indices = @transform_3, window_bounds = array<i64: 8, 256>}, {transform_indices = @transform_4, window_bounds = array<i64: 8, 256>}]} {
    %c0 = arith.constant 0 : index
    %c0_0 = arith.constant 0 : index
    %0 = vector.load %arg1[%c0, %c0_0] : memref<8x256xbf16, #tpu.memory_space<vmem>>, vector<8x256xbf16>
    %c0_1 = arith.constant 0 : index
    %c0_2 = arith.constant 0 : index
    %1 = vector.load %arg2[%c0_1, %c0_2] : memref<256x256xbf16, #tpu.memory_space<vmem>>, vector<256x256xbf16>
    %cst = arith.constant dense<0.000000e+00> : vector<8x256xf32>
    %2 = tpu.matmul %0, %1, %cst {dimension_numbers = #tpu.dot_dimension_numbers<[1], [0], [0], [1], [0, 0, 1, 1], [], []>} : vector<8x256xbf16>, vector<256x256xbf16>, vector<8x256xf32> -> vector<8x256xf32>
    %c0_3 = arith.constant 0 : index
    %c0_4 = arith.constant 0 : index
    %3 = vector.load %arg3[%c0_3, %c0_4] : memref<1x256xf32, #tpu.memory_space<vmem>>, vector<1x256xf32>
    %4 = vector.broadcast %3 : vector<1x256xf32> to vector<8x256xf32>
    %5 = arith.addf %2, %4 : vector<8x256xf32>
    %c0_5 = arith.constant 0 : index
    %c0_6 = arith.constant 0 : index
    %6 = vector.load %arg4[%c0_5, %c0_6] : memref<8x256xbf16, #tpu.memory_space<vmem>>, vector<8x256xbf16>
    %7 = arith.extf %6 : vector<8x256xbf16> to vector<8x256xf32>
    %8 = arith.addf %5, %7 : vector<8x256xf32>
    %9 = arith.truncf %8 : vector<8x256xf32> to vector<8x256xbf16>
    %c0_7 = arith.constant 0 : index
    %c0_8 = arith.constant 0 : index
    %10 = vector.load %arg5[%c0_7, %c0_8] : memref<8x256xbf16, #tpu.memory_space<vmem>>, vector<8x256xbf16>
    tpu.vector_store %arg5[%c0_7, %c0_8], %9 {strides = array<i32>} : memref<8x256xbf16, #tpu.memory_space<vmem>>, vector<8x256xbf16>,
    return
  }
  func.func @transform_0(%arg0: i32) -> (i32, i32) {
    %c0_i32 = arith.constant 0 : i32
    %c0_i32_0 = arith.constant 0 : i32
    return %arg0, %c0_i32 : i32, i32
  }
  func.func @transform_1(%arg0: i32) -> (i32, i32) {
    %c0_i32 = arith.constant 0 : i32
    %c0_i32_0 = arith.constant 0 : i32
    %c0_i32_1 = arith.constant 0 : i32
    return %c0_i32, %c0_i32_0 : i32, i32
  }
  func.func @transform_2(%arg0: i32) -> (i32, i32) {
    %c0_i32 = arith.constant 0 : i32
    %c0_i32_0 = arith.constant 0 : i32
    %c0_i32_1 = arith.constant 0 : i32
    return %c0_i32, %c0_i32_0 : i32, i32
  }
  func.func @transform_3(%arg0: i32) -> (i32, i32) {
    %c0_i32 = arith.constant 0 : i32
    %c0_i32_0 = arith.constant 0 : i32
    return %arg0, %c0_i32 : i32, i32
  }
  func.func @transform_4(%arg0: i32) -> (i32, i32) {
    %c0_i32 = arith.constant 0 : i32
    %c0_i32_0 = arith.constant 0 : i32
    return %arg0, %c0_i32 : i32, i32
  }
}

module attributes {stable_mosaic.version = 11 : i64} {
  func.func @_mlp_kernel(%arg0: i32, %arg1: memref<8x256xbf16, #tpu.memory_space<vmem>>, %arg2: memref<1x256xf32, #tpu.memory_space<vmem>>, %arg3: memref<1x256xf32, #tpu.memory_space<vmem>>, %arg4: memref<256x1024xbf16, #tpu.memory_space<vmem>>, %arg5: memref<1x1024xf32, #tpu.memory_space<vmem>>, %arg6: memref<1024x256xbf16, #tpu.memory_space<vmem>>, %arg7: memref<1x256xf32, #tpu.memory_space<vmem>>, %arg8: memref<8x256xbf16, #tpu.memory_space<vmem>>) attributes {dimension_semantics = [#tpu.dimension_semantics<parallel>], iteration_bounds = array<i64: 2>, scalar_prefetch = 0 : i64, scratch_operands = 0 : i64, tpu.core_type = #tpu.core_type<tc>, window_params = [{transform_indices = @transform_0, window_bounds = array<i64: 8, 256>}, {pipeline_mode = #tpu.pipeline_mode<synchronous>, transform_indices = @transform_1, window_bounds = array<i64: 1, 256>}, {pipeline_mode = #tpu.pipeline_mode<synchronous>, transform_indices = @transform_2, window_bounds = array<i64: 1, 256>}, {pipeline_mode = #tpu.pipeline_mode<synchronous>, transform_indices = @transform_3, window_bounds = array<i64: 256, 1024>}, {pipeline_mode = #tpu.pipeline_mode<synchronous>, transform_indices = @transform_4, window_bounds = array<i64: 1, 1024>}, {pipeline_mode = #tpu.pipeline_mode<synchronous>, transform_indices = @transform_5, window_bounds = array<i64: 1024, 256>}, {pipeline_mode = #tpu.pipeline_mode<synchronous>, transform_indices = @transform_6, window_bounds = array<i64: 1, 256>}, {transform_indices = @transform_7, window_bounds = array<i64: 8, 256>}]} {
    %c0 = arith.constant 0 : index
    %c0_0 = arith.constant 0 : index
    %0 = vector.load %arg1[%c0, %c0_0] : memref<8x256xbf16, #tpu.memory_space<vmem>>, vector<8x256xbf16>
    %1 = arith.extf %0 : vector<8x256xbf16> to vector<8x256xf32>
    %c0_1 = arith.constant 0 : index
    %c0_2 = arith.constant 0 : index
    %2 = vector.load %arg2[%c0_1, %c0_2] : memref<1x256xf32, #tpu.memory_space<vmem>>, vector<1x256xf32>
    %c0_3 = arith.constant 0 : index
    %c0_4 = arith.constant 0 : index
    %3 = vector.load %arg3[%c0_3, %c0_4] : memref<1x256xf32, #tpu.memory_space<vmem>>, vector<1x256xf32>
    %cst = arith.constant dense<0.000000e+00> : vector<8xf32>
    %4 = vector.multi_reduction <add>, %1, %cst [1] : vector<8x256xf32> to vector<8xf32>
    %5 = vector.shape_cast %4 : vector<8xf32> to vector<8x1xf32>
    %cst_5 = arith.constant 2.560000e+02 : f32
    %6 = vector.broadcast %cst_5 : f32 to vector<8x1xf32>
    %7 = arith.divf %5, %6 : vector<8x1xf32>
    %8 = vector.broadcast %7 : vector<8x1xf32> to vector<8x256xf32>
    %9 = arith.subf %1, %8 : vector<8x256xf32>
    %10 = arith.mulf %9, %9 : vector<8x256xf32>
    %cst_6 = arith.constant dense<0.000000e+00> : vector<8xf32>
    %11 = vector.multi_reduction <add>, %10, %cst_6 [1] : vector<8x256xf32> to vector<8xf32>
    %12 = vector.shape_cast %11 : vector<8xf32> to vector<8x1xf32>
    %cst_7 = arith.constant 2.560000e+02 : f32
    %13 = vector.broadcast %cst_7 : f32 to vector<8x1xf32>
    %14 = arith.divf %12, %13 : vector<8x1xf32>
    %cst_8 = arith.constant 9.99999974E-6 : f32
    %15 = vector.broadcast %cst_8 : f32 to vector<8x1xf32>
    %16 = arith.addf %14, %15 : vector<8x1xf32>
    %17 = math.rsqrt %16 : vector<8x1xf32>
    %18 = vector.broadcast %17 : vector<8x1xf32> to vector<8x256xf32>
    %19 = arith.mulf %9, %18 : vector<8x256xf32>
    %20 = vector.broadcast %2 : vector<1x256xf32> to vector<8x256xf32>
    %21 = arith.mulf %19, %20 : vector<8x256xf32>
    %22 = vector.broadcast %3 : vector<1x256xf32> to vector<8x256xf32>
    %23 = arith.addf %21, %22 : vector<8x256xf32>
    %24 = arith.truncf %23 : vector<8x256xf32> to vector<8x256xbf16>
    %c0_9 = arith.constant 0 : index
    %c0_10 = arith.constant 0 : index
    %25 = vector.load %arg4[%c0_9, %c0_10] : memref<256x1024xbf16, #tpu.memory_space<vmem>>, vector<256x1024xbf16>
    %cst_11 = arith.constant dense<0.000000e+00> : vector<8x1024xf32>
    %26 = tpu.matmul %24, %25, %cst_11 {dimension_numbers = #tpu.dot_dimension_numbers<[1], [0], [0], [1], [0, 0, 1, 1], [], []>} : vector<8x256xbf16>, vector<256x1024xbf16>, vector<8x1024xf32> -> vector<8x1024xf32>
    %c0_12 = arith.constant 0 : index
    %c0_13 = arith.constant 0 : index
    %27 = vector.load %arg5[%c0_12, %c0_13] : memref<1x1024xf32, #tpu.memory_space<vmem>>, vector<1x1024xf32>
    %28 = vector.broadcast %27 : vector<1x1024xf32> to vector<8x1024xf32>
    %29 = arith.addf %26, %28 : vector<8x1024xf32>
    %cst_14 = arith.constant -1.702000e+00 : f32
    %30 = vector.broadcast %cst_14 : f32 to vector<8x1024xf32>
    %31 = arith.mulf %30, %29 : vector<8x1024xf32>
    %32 = math.exp %31 : vector<8x1024xf32>
    %cst_15 = arith.constant 1.000000e+00 : f32
    %33 = vector.broadcast %cst_15 : f32 to vector<8x1024xf32>
    %34 = arith.addf %33, %32 : vector<8x1024xf32>
    %35 = tpu.reciprocal %34 {approx = true} : vector<8x1024xf32> -> vector<8x1024xf32>
    %36 = arith.mulf %29, %35 : vector<8x1024xf32>
    %37 = arith.truncf %36 : vector<8x1024xf32> to vector<8x1024xbf16>
    %c0_16 = arith.constant 0 : index
    %c0_17 = arith.constant 0 : index
    %38 = vector.load %arg6[%c0_16, %c0_17] : memref<1024x256xbf16, #tpu.memory_space<vmem>>, vector<1024x256xbf16>
    %cst_18 = arith.constant dense<0.000000e+00> : vector<8x256xf32>
    %39 = tpu.matmul %37, %38, %cst_18 {dimension_numbers = #tpu.dot_dimension_numbers<[1], [0], [0], [1], [0, 0, 1, 1], [], []>} : vector<8x1024xbf16>, vector<1024x256xbf16>, vector<8x256xf32> -> vector<8x256xf32>
    %c0_19 = arith.constant 0 : index
    %c0_20 = arith.constant 0 : index
    %40 = vector.load %arg7[%c0_19, %c0_20] : memref<1x256xf32, #tpu.memory_space<vmem>>, vector<1x256xf32>
    %41 = vector.broadcast %40 : vector<1x256xf32> to vector<8x256xf32>
    %42 = arith.addf %39, %41 : vector<8x256xf32>
    %43 = arith.addf %42, %1 : vector<8x256xf32>
    %44 = arith.truncf %43 : vector<8x256xf32> to vector<8x256xbf16>
    %c0_21 = arith.constant 0 : index
    %c0_22 = arith.constant 0 : index
    %45 = vector.load %arg8[%c0_21, %c0_22] : memref<8x256xbf16, #tpu.memory_space<vmem>>, vector<8x256xbf16>
    tpu.vector_store %arg8[%c0_21, %c0_22], %44 {strides = array<i32>} : memref<8x256xbf16, #tpu.memory_space<vmem>>, vector<8x256xbf16>,
    return
  }
  func.func @transform_0(%arg0: i32) -> (i32, i32) {
    %c0_i32 = arith.constant 0 : i32
    %c0_i32_0 = arith.constant 0 : i32
    return %arg0, %c0_i32 : i32, i32
  }
  func.func @transform_1(%arg0: i32) -> (i32, i32) {
    %c0_i32 = arith.constant 0 : i32
    %c0_i32_0 = arith.constant 0 : i32
    %c0_i32_1 = arith.constant 0 : i32
    return %c0_i32, %c0_i32_0 : i32, i32
  }
  func.func @transform_2(%arg0: i32) -> (i32, i32) {
    %c0_i32 = arith.constant 0 : i32
    %c0_i32_0 = arith.constant 0 : i32
    %c0_i32_1 = arith.constant 0 : i32
    return %c0_i32, %c0_i32_0 : i32, i32
  }
  func.func @transform_3(%arg0: i32) -> (i32, i32) {
    %c0_i32 = arith.constant 0 : i32
    %c0_i32_0 = arith.constant 0 : i32
    %c0_i32_1 = arith.constant 0 : i32
    return %c0_i32, %c0_i32_0 : i32, i32
  }
  func.func @transform_4(%arg0: i32) -> (i32, i32) {
    %c0_i32 = arith.constant 0 : i32
    %c0_i32_0 = arith.constant 0 : i32
    %c0_i32_1 = arith.constant 0 : i32
    return %c0_i32, %c0_i32_0 : i32, i32
  }
  func.func @transform_5(%arg0: i32) -> (i32, i32) {
    %c0_i32 = arith.constant 0 : i32
    %c0_i32_0 = arith.constant 0 : i32
    %c0_i32_1 = arith.constant 0 : i32
    return %c0_i32, %c0_i32_0 : i32, i32
  }
  func.func @transform_6(%arg0: i32) -> (i32, i32) {
    %c0_i32 = arith.constant 0 : i32
    %c0_i32_0 = arith.constant 0 : i32
    %c0_i32_1 = arith.constant 0 : i32
    return %c0_i32, %c0_i32_0 : i32, i32
  }
  func.func @transform_7(%arg0: i32) -> (i32, i32) {
    %c0_i32 = arith.constant 0 : i32
    %c0_i32_0 = arith.constant 0 : i32
    return %arg0, %c0_i32 : i32, i32
  }
}

module attributes {stable_mosaic.version = 11 : i64} {
  func.func @_ln_matmul_kernel(%arg0: i32, %arg1: memref<2x256xbf16, #tpu.memory_space<vmem>>, %arg2: memref<1x256xf32, #tpu.memory_space<vmem>>, %arg3: memref<1x256xf32, #tpu.memory_space<vmem>>, %arg4: memref<256x128xbf16, #tpu.memory_space<vmem>>, %arg5: memref<1x128xf32, #tpu.memory_space<vmem>>, %arg6: memref<2x128xf32, #tpu.memory_space<vmem>>) attributes {dimension_semantics = [#tpu.dimension_semantics<parallel>], iteration_bounds = array<i64: 1>, scalar_prefetch = 0 : i64, scratch_operands = 0 : i64, tpu.core_type = #tpu.core_type<tc>, window_params = [{transform_indices = @transform_0, window_bounds = array<i64: 2, 256>}, {pipeline_mode = #tpu.pipeline_mode<synchronous>, transform_indices = @transform_1, window_bounds = array<i64: 1, 256>}, {pipeline_mode = #tpu.pipeline_mode<synchronous>, transform_indices = @transform_2, window_bounds = array<i64: 1, 256>}, {pipeline_mode = #tpu.pipeline_mode<synchronous>, transform_indices = @transform_3, window_bounds = array<i64: 256, 128>}, {pipeline_mode = #tpu.pipeline_mode<synchronous>, transform_indices = @transform_4, window_bounds = array<i64: 1, 128>}, {transform_indices = @transform_5, window_bounds = array<i64: 2, 128>}]} {
    %c0 = arith.constant 0 : index
    %c0_0 = arith.constant 0 : index
    %0 = vector.load %arg1[%c0, %c0_0] : memref<2x256xbf16, #tpu.memory_space<vmem>>, vector<2x256xbf16>
    %1 = arith.extf %0 : vector<2x256xbf16> to vector<2x256xf32>
    %c0_1 = arith.constant 0 : index
    %c0_2 = arith.constant 0 : index
    %2 = vector.load %arg2[%c0_1, %c0_2] : memref<1x256xf32, #tpu.memory_space<vmem>>, vector<1x256xf32>
    %c0_3 = arith.constant 0 : index
    %c0_4 = arith.constant 0 : index
    %3 = vector.load %arg3[%c0_3, %c0_4] : memref<1x256xf32, #tpu.memory_space<vmem>>, vector<1x256xf32>
    %cst = arith.constant dense<0.000000e+00> : vector<2xf32>
    %4 = vector.multi_reduction <add>, %1, %cst [1] : vector<2x256xf32> to vector<2xf32>
    %5 = vector.shape_cast %4 : vector<2xf32> to vector<2x1xf32>
    %cst_5 = arith.constant 2.560000e+02 : f32
    %6 = vector.broadcast %cst_5 : f32 to vector<2x1xf32>
    %7 = arith.divf %5, %6 : vector<2x1xf32>
    %8 = vector.broadcast %7 : vector<2x1xf32> to vector<2x256xf32>
    %9 = arith.subf %1, %8 : vector<2x256xf32>
    %10 = arith.mulf %9, %9 : vector<2x256xf32>
    %cst_6 = arith.constant dense<0.000000e+00> : vector<2xf32>
    %11 = vector.multi_reduction <add>, %10, %cst_6 [1] : vector<2x256xf32> to vector<2xf32>
    %12 = vector.shape_cast %11 : vector<2xf32> to vector<2x1xf32>
    %cst_7 = arith.constant 2.560000e+02 : f32
    %13 = vector.broadcast %cst_7 : f32 to vector<2x1xf32>
    %14 = arith.divf %12, %13 : vector<2x1xf32>
    %cst_8 = arith.constant 9.99999974E-6 : f32
    %15 = vector.broadcast %cst_8 : f32 to vector<2x1xf32>
    %16 = arith.addf %14, %15 : vector<2x1xf32>
    %17 = math.rsqrt %16 : vector<2x1xf32>
    %18 = vector.broadcast %17 : vector<2x1xf32> to vector<2x256xf32>
    %19 = arith.mulf %9, %18 : vector<2x256xf32>
    %20 = vector.broadcast %2 : vector<1x256xf32> to vector<2x256xf32>
    %21 = arith.mulf %19, %20 : vector<2x256xf32>
    %22 = vector.broadcast %3 : vector<1x256xf32> to vector<2x256xf32>
    %23 = arith.addf %21, %22 : vector<2x256xf32>
    %24 = arith.truncf %23 : vector<2x256xf32> to vector<2x256xbf16>
    %c0_9 = arith.constant 0 : index
    %c0_10 = arith.constant 0 : index
    %25 = vector.load %arg4[%c0_9, %c0_10] : memref<256x128xbf16, #tpu.memory_space<vmem>>, vector<256x128xbf16>
    %cst_11 = arith.constant dense<0.000000e+00> : vector<2x128xf32>
    %26 = tpu.matmul %24, %25, %cst_11 {dimension_numbers = #tpu.dot_dimension_numbers<[1], [0], [0], [1], [0, 0, 1, 1], [], []>} : vector<2x256xbf16>, vector<256x128xbf16>, vector<2x128xf32> -> vector<2x128xf32>
    %c0_12 = arith.constant 0 : index
    %c0_13 = arith.constant 0 : index
    %27 = vector.load %arg5[%c0_12, %c0_13] : memref<1x128xf32, #tpu.memory_space<vmem>>, vector<1x128xf32>
    %28 = vector.broadcast %27 : vector<1x128xf32> to vector<2x128xf32>
    %29 = arith.addf %26, %28 : vector<2x128xf32>
    %c0_14 = arith.constant 0 : index
    %c0_15 = arith.constant 0 : index
    %30 = vector.load %arg6[%c0_14, %c0_15] : memref<2x128xf32, #tpu.memory_space<vmem>>, vector<2x128xf32>
    tpu.vector_store %arg6[%c0_14, %c0_15], %29 {strides = array<i32>} : memref<2x128xf32, #tpu.memory_space<vmem>>, vector<2x128xf32>,
    return
  }
  func.func @transform_0(%arg0: i32) -> (i32, i32) {
    %c0_i32 = arith.constant 0 : i32
    %c0_i32_0 = arith.constant 0 : i32
    return %arg0, %c0_i32 : i32, i32
  }
  func.func @transform_1(%arg0: i32) -> (i32, i32) {
    %c0_i32 = arith.constant 0 : i32
    %c0_i32_0 = arith.constant 0 : i32
    %c0_i32_1 = arith.constant 0 : i32
    return %c0_i32, %c0_i32_0 : i32, i32
  }
  func.func @transform_2(%arg0: i32) -> (i32, i32) {
    %c0_i32 = arith.constant 0 : i32
    %c0_i32_0 = arith.constant 0 : i32
    %c0_i32_1 = arith.constant 0 : i32
    return %c0_i32, %c0_i32_0 : i32, i32
  }
  func.func @transform_3(%arg0: i32) -> (i32, i32) {
    %c0_i32 = arith.constant 0 : i32
    %c0_i32_0 = arith.constant 0 : i32
    %c0_i32_1 = arith.constant 0 : i32
    return %c0_i32, %c0_i32_0 : i32, i32
  }
  func.func @transform_4(%arg0: i32) -> (i32, i32) {
    %c0_i32 = arith.constant 0 : i32
    %c0_i32_0 = arith.constant 0 : i32
    %c0_i32_1 = arith.constant 0 : i32
    return %c0_i32, %c0_i32_0 : i32, i32
  }
  func.func @transform_5(%arg0: i32) -> (i32, i32) {
    %c0_i32 = arith.constant 0 : i32
    %c0_i32_0 = arith.constant 0 : i32
    return %arg0, %c0_i32 : i32, i32
  }
}

</mosaic_0001>

<llo_original>
// kernel: clip_encoder_forward.12
$region0: #{clip_encoder_forward.12}
  #allocation0 [shape = 'u32[]', space=smem, size = 0x4, offset = 0x4, fixed_abs, tag = 'smem constant byte address 0x4 - core index']
  #allocation1 [shape = 'u32[144,128]{1,0:T(1,128)}', space=vmem, size = 0x12000, scoped, tag = 'internal scratch']
  %s0 = inlined_call_operand.hbm [shape: f32[16,256], index: 0, kind: input, shape index: {}]
  %s1 = inlined_call_operand.hbm [shape: f32[1,256], index: 1, kind: input, shape index: {}]
  %s2 = inlined_call_operand.hbm [shape: f32[1,256], index: 2, kind: input, shape index: {}]
  %s3 = inlined_call_operand.hbm [shape: bf16[16,256], index: 3, kind: output, shape index: {}]
  %s4 = sld [smem:[#allocation0]]
  $region57: #{clip_encoder_forward.12} parent=0
    _
  %s6 = ssub.s32 1, %s4
  %s7 = scalar_select 0, %s6, %s4
  $region1: #{clip_encoder_forward.12} parent=0
    #allocation2 [shape = 'u8[16384]{0}', space=vmem, size = 0x4000, scoped, tag = 'input window, operand 0']
    #allocation3 [shape = 's32[2]{0}', space=sflag, size = 0x8, scoped, tag = 'scoped memory for clip_encoder_forward.12']
    #allocation4 [shape = 's32[2]{0}', space=sflag, size = 0x8, scoped, tag = 'scoped memory for clip_encoder_forward.12']
    #allocation5 [shape = 'u8[1024]{0}', space=vmem, size = 0x400, scoped, tag = 'input window, operand 1, single buffered']
    #allocation6 [shape = 's32[1]{0}', space=sflag, size = 0x4, scoped, tag = 'scoped memory for clip_encoder_forward.12']
    #allocation7 [shape = 'u8[1024]{0}', space=vmem, size = 0x400, scoped, tag = 'input window, operand 2, single buffered']
    #allocation8 [shape = 'u8[8192]{0}', space=vmem, size = 0x2000, scoped, tag = 'output window, operand 0']
    %8 = vsyncpa [#allocation3], 0
    %s9 = scalar_lea.sflag [#allocation3], 1
    %10 = vsyncpa %s9, 0
    %11 = vsyncpa [#allocation6], 0
    %12 = vsyncpa [#allocation4], 0
    %s13 = scalar_lea.sflag [#allocation4], 1
    %14 = vsyncpa %s13, 0
    loop: start=0, step=1, limit=4
    $region2: #{clip_encoder_forward.12} parent=1 // loop_pre_header
      _
    $region3: #{clip_encoder_forward.12} parent=1 // loop_header
      %s16 = sphi 0, %s20
      %p17 = scmp.ge.s32.totalorder %s16, 4
      %s26 = sphi 0, %s28
      %s29 = sphi 0, %s26
      %s30 = sphi 0, %s29
      %s46 = sphi 0, %s30
      %s50 = sphi 0, %s50
      %s52 = sphi 0, %s50
      %s53 = sphi 0, %s52
      %s67 = sphi 0, %s53
      %s71 = sphi 0, %s71
      %s73 = sphi 0, %s71
      %s74 = sphi 0, %s73
      %s88 = sphi 0, %s74
      %s94 = sphi 0, %s96
      %s97 = sphi 0, %s94
      %s98 = sphi 0, %s97
      %s114 = sphi 0, %s98
    $region4: #{clip_encoder_forward.12} parent=1 // loop_header_branch
      %19 = sbr.rel (%p17) target = $region8
    $region5: #{clip_encoder_forward.12} parent=1 // loop_body
      %s21 = ssub.s32 %s16, 1
      %s22 = ssub.s32 %s16, 2
      %s23 = sadd.s32 %s16, 1
      %s24 = ssub.s32 %s16, %s23
      %p25 = scmp.eq.s32.totalorder %s24, 0
      %s27 = sadd.s32 %s26, 1
      %s28 = scalar_select %p25, %s26, %s27
      %p31 = pneg %p25
      %p32 = scmp.eq.s32.totalorder %s16, 1
      %p33 = por %p31, %p32
      %p34 = scmp.ne.s32.totalorder %s26, %s29
      %p35 = scmp.eq.s32.totalorder %s16, 0
      %p36 = por %p34, %p35
      %p37 = scmp.ne.s32.totalorder %s26, %s29
      %p38 = scmp.eq.s32.totalorder %s21, 1
      %p39 = por %p37, %p38
      %p40 = scmp.ne.s32.totalorder %s29, %s30
      %p41 = scmp.eq.s32.totalorder %s21, 0
      %p42 = por %p40, %p41
      %p43 = scmp.ne.s32.totalorder %s29, %s30
      %p44 = scmp.eq.s32.totalorder %s22, 1
      %p45 = por %p43, %p44
      %p47 = scmp.ne.s32.totalorder %s30, %s46
      %p48 = scmp.eq.s32.totalorder %s22, 0
      %p49 = por %p47, %p48
      %s51 = sadd.s32 %s50, 1
      %p54 = scmp.eq.s32.totalorder %s16, 1
      %p55 = scmp.ne.s32.totalorder %s50, %s52
      %p56 = scmp.eq.s32.totalorder %s16, 0
      %p57 = por %p55, %p56
      %p58 = scmp.ne.s32.totalorder %s50, %s52
      %p59 = scmp.eq.s32.totalorder %s21, 1
      %p60 = por %p58, %p59
      %p61 = scmp.ne.s32.totalorder %s52, %s53
      %p62 = scmp.eq.s32.totalorder %s21, 0
      %p63 = por %p61, %p62
      %p64 = scmp.ne.s32.totalorder %s52, %s53
      %p65 = scmp.eq.s32.totalorder %s22, 1
      %p66 = por %p64, %p65
      %p68 = scmp.ne.s32.totalorder %s53, %s67
      %p69 = scmp.eq.s32.totalorder %s22, 0
      %p70 = por %p68, %p69
      %s72 = sadd.s32 %s71, 1
      %p75 = scmp.eq.s32.totalorder %s16, 1
      %p76 = scmp.ne.s32.totalorder %s71, %s73
      %p77 = scmp.eq.s32.totalorder %s16, 0
      %p78 = por %p76, %p77
      %p79 = scmp.ne.s32.totalorder %s71, %s73
      %p80 = scmp.eq.s32.totalorder %s21, 1
      %p81 = por %p79, %p80
      %p82 = scmp.ne.s32.totalorder %s73, %s74
      %p83 = scmp.eq.s32.totalorder %s21, 0
      %p84 = por %p82, %p83
      %p85 = scmp.ne.s32.totalorder %s73, %s74
      %p86 = scmp.eq.s32.totalorder %s22, 1
      %p87 = por %p85, %p86
      %p89 = scmp.ne.s32.totalorder %s74, %s88
      %p90 = scmp.eq.s32.totalorder %s22, 0
      %p91 = por %p89, %p90
      %s92 = ssub.s32 %s16, %s23
      %p93 = scmp.eq.s32.totalorder %s92, 0
      %s95 = sadd.s32 %s94, 1
      %s96 = scalar_select %p93, %s94, %s95
      %p99 = pneg %p93
      %p100 = scmp.eq.s32.totalorder %s16, 1
      %p101 = por %p99, %p100
      %p102 = scmp.ne.s32.totalorder %s94, %s97
      %p103 = scmp.eq.s32.totalorder %s16, 0
      %p104 = por %p102, %p103
      %p105 = scmp.ne.s32.totalorder %s94, %s97
      %p106 = scmp.eq.s32.totalorder %s21, 1
      %p107 = por %p105, %p106
      %p108 = scmp.ne.s32.totalorder %s97, %s98
      %p109 = scmp.eq.s32.totalorder %s21, 0
      %p110 = por %p108, %p109
      %p111 = scmp.ne.s32.totalorder %s97, %s98
      %p112 = scmp.eq.s32.totalorder %s22, 1
      %p113 = por %p111, %p112
      %p115 = scmp.ne.s32.totalorder %s98, %s114
      %p116 = scmp.eq.s32.totalorder %s22, 0
      %p117 = por %p115, %p116
      %p118 = scmp.le.s32.totalorder 1, %s16
      %p119 = scmp.lt.s32.totalorder %s16, 3
      %p120 = pnand %p118, %p119
      %p121 = pneg %p120
      // Predicated region
      $region9: #{clip_encoder_forward.12} parent=5 // pred_check
        _
      $region10: #{clip_encoder_forward.12} parent=5 // pred_check_branch
        %123 = sbr.rel (%p120) target = $region12
      $region11: #{clip_encoder_forward.12} parent=5 // pred_region
        %s124 = ssub.s32 %s16, 1
        // Predicated region
        $region13: #{clip_encoder_forward.12} parent=11 // pred_check
          %p125 = pneg %p63
        $region14: #{clip_encoder_forward.12} parent=11 // pred_check_branch
          %127 = sbr.rel (%p125) target = $region16
        $region15: #{clip_encoder_forward.12} parent=11 // pred_region
          %s129 = ssub.s32 32, 32
          %130 = vsyncadd [#allocation6], %s129
          %s132 = sshll.u32 [#allocation5], 4
          %s133 = int_to_ptr.vmem [resolvable:$true] %s132
          %135 = dma.hbm_to_vmem [thread:$0]  %s1, 32, %s133, [#allocation6]
        $region16: #{clip_encoder_forward.12} parent=11 // pred_fallthru
          _
        // Predicated region
        $region17: #{clip_encoder_forward.12} parent=11 // pred_check
          %p136 = pneg %p84
        $region18: #{clip_encoder_forward.12} parent=11 // pred_check_branch
          %138 = sbr.rel (%p136) target = $region20
        $region19: #{clip_encoder_forward.12} parent=11 // pred_region
          %s140 = ssub.s32 32, 32
          %141 = vsyncadd [#allocation6], %s140
          %s143 = sshll.u32 [#allocation7], 4
          %s144 = int_to_ptr.vmem [resolvable:$true] %s143
          %146 = dma.hbm_to_vmem [thread:$0]  %s2, 32, %s144, [#allocation6]
        $region20: #{clip_encoder_forward.12} parent=11 // pred_fallthru
          _
      $region12: #{clip_encoder_forward.12} parent=5 // pred_fallthru
        _
      %p147 = scmp.lt.s32.totalorder %s16, 2
      // Predicated region
      $region21: #{clip_encoder_forward.12} parent=5 // pred_check
        %p148 = pneg %p147
      $region22: #{clip_encoder_forward.12} parent=5 // pred_check_branch
        %150 = sbr.rel (%p148) target = $region24
      $region23: #{clip_encoder_forward.12} parent=5 // pred_region
        // Predicated region
        $region25: #{clip_encoder_forward.12} parent=23 // pred_check
          %p151 = pneg %p36
        $region26: #{clip_encoder_forward.12} parent=23 // pred_check_branch
          %153 = sbr.rel (%p151) target = $region28
        $region27: #{clip_encoder_forward.12} parent=23 // pred_region
          %s154 = sand.u32 %s26, 1
          %s155 = scalar_lea.sflag [#allocation3], %s154
          %s156 = sand.u32 %s26, 1
          %s157 = smul.addr %s156, 16
          %s158 = scalar_lea.vmem [#allocation2], %s157
          %s160 = ssub.s32 256, 256
          %161 = vsyncadd %s155, %s160
          %s162 = smul.addr %s16, 2
          %s163 = smul.addr %s162, 128
          %s164 = scalar_lea.hbm %s0, %s163
          %s166 = sshll.u32 %s158, 4
          %s167 = int_to_ptr.vmem [resolvable:$true] %s166
          %169 = dma.hbm_to_vmem [thread:$0]  %s164, 256, %s167, %s155
        $region28: #{clip_encoder_forward.12} parent=23 // pred_fallthru
          _
      $region24: #{clip_encoder_forward.12} parent=5 // pred_fallthru
        _
      %p170 = scmp.le.s32.totalorder 1, %s16
      %p171 = scmp.lt.s32.totalorder %s16, 3
      %p172 = pnand %p170, %p171
      %p173 = pneg %p172
      // Predicated region
      $region29: #{clip_encoder_forward.12} parent=5 // pred_check
        _
      $region30: #{clip_encoder_forward.12} parent=5 // pred_check_branch
        %175 = sbr.rel (%p172) target = $region32
      $region31: #{clip_encoder_forward.12} parent=5 // pred_region
        %s176 = ssub.s32 %s16, 1
        %s177 = sand.u32 %s29, 1
        %s178 = scalar_lea.sflag [#allocation3], %s177
        %s179 = sand.u32 %s29, 1
        %s180 = smul.addr %s179, 16
        %s181 = scalar_lea.vmem [#allocation2], %s180
        // Predicated region
        $region33: #{clip_encoder_forward.12} parent=31 // pred_check
          %p182 = pneg %p42
        $region34: #{clip_encoder_forward.12} parent=31 // pred_check_branch
          %184 = sbr.rel (%p182) target = $region36
        $region35: #{clip_encoder_forward.12} parent=31 // pred_region
          %185 = dma.done %s178, 256
        $region36: #{clip_encoder_forward.12} parent=31 // pred_fallthru
          _
        // Predicated region
        $region37: #{clip_encoder_forward.12} parent=31 // pred_check
          %p186 = pneg %p63
        $region38: #{clip_encoder_forward.12} parent=31 // pred_check_branch
          %188 = sbr.rel (%p186) target = $region40
        $region39: #{clip_encoder_forward.12} parent=31 // pred_region
          %189 = dma.done [#allocation6], 32
        $region40: #{clip_encoder_forward.12} parent=31 // pred_fallthru
          _
        // Predicated region
        $region41: #{clip_encoder_forward.12} parent=31 // pred_check
          %p190 = pneg %p84
        $region42: #{clip_encoder_forward.12} parent=31 // pred_check_branch
          %192 = sbr.rel (%p190) target = $region44
        $region43: #{clip_encoder_forward.12} parent=31 // pred_region
          %193 = dma.done [#allocation6], 32
        $region44: #{clip_encoder_forward.12} parent=31 // pred_fallthru
          _
        %s194 = sand.u32 %s29, 1
        %s195 = scalar_lea.sflag [#allocation3], %s194
        %s196 = sand.u32 %s29, 1
        %s197 = smul.addr %s196, 16
        %s198 = scalar_lea.vmem [#allocation2], %s197
        %p199 = pneg %p42
        %p200 = pneg %p39
        %p201 = pneg %p63
        %p202 = pneg %p60
        %p203 = pneg %p84
        %p204 = pneg %p81
        %p205 = pneg %p110
        %p206 = pneg %p107
        %s207 = sand.u32 %s97, 1
        %s208 = scalar_lea.sflag [#allocation4], %s207
        %s209 = sand.u32 %s97, 1
        %s210 = smul.addr %s209, 8
        %s211 = scalar_lea.vmem [#allocation8], %s210
        %v212 = vld [vmem:[%s181] sm:$0xff]
        %v213 = vld [vmem:[%s181 + $0x8] sm:$0xff]
        %v214 = vld [vmem:[#allocation5] sm:$0x3]
        %v215 = vld [vmem:[#allocation7] sm:$0x3]
        %v216 = vadd.f32 %v212, %v213
        %217 = vadd.xlane.f32.xlu0 %v216
        %v218 = vpop.xlane.xlu0 %217
        %v219 = vrcp.pop 256.0
        %v220 = vmul.f32 %v218, %v219
        %v221 = vsub.f32 %v212, %v220
        %v222 = vsub.f32 %v213, %v220
        %v223 = vmul.f32 %v221, %v221
        %v224 = vmul.f32 %v222, %v222
        %v225 = vadd.f32 %v223, %v224
        %226 = vadd.xlane.f32.xlu0 %v225
        %v227 = vpop.xlane.xlu0 %226
        %v228 = vmul.f32 %v227, %v219
        %v229 = vadd.f32 %v228, 1e-05
        %v230 = vrsqrt.pop %v229
        %v231 = vmul.f32 %v221, %v230
        %v232 = vmul.f32 %v222, %v230
        %v234 = vlaneseq
        %v235 = vshrl.u32 %v234, 7
        %v236 = vsub.s32 0, %v235
        %v237 = vrot.slane %v214, %v236
        %v238 = vlaneseq
        %v239 = vshrl.u32 %v238, 7
        %v240 = vsub.s32 1, %v239
        %v241 = vrot.slane %v214, %v240
        %v244 = vmul.f32 %v231, %v237
        %v245 = vmul.f32 %v232, %v241
        %v247 = vlaneseq
        %v248 = vshrl.u32 %v247, 7
        %v249 = vsub.s32 0, %v248
        %v250 = vrot.slane %v215, %v249
        %v251 = vlaneseq
        %v252 = vshrl.u32 %v251, 7
        %v253 = vsub.s32 1, %v252
        %v254 = vrot.slane %v215, %v253
        %v257 = vadd.f32 %v244, %v250
        %v258 = vadd.f32 %v245, %v254
        %v259 = vpack.c.bf16 %v257, %v257
        %v260 = vpack.c.bf16 %v258, %v258
        %v263 = vunpack.c.l.b16 %v259
        %v264 = vunpack.c.l.b16 %v260
        %v265 = vpack.c.b16 %v264, %v263
        %267 = vst [vmem:[%s211] sm:$0xff] %v265
        %s268 = sand.u32 %s97, 1
        %s269 = scalar_lea.sflag [#allocation4], %s268
        %s270 = sand.u32 %s97, 1
        %s271 = smul.addr %s270, 8
        %s272 = scalar_lea.vmem [#allocation8], %s271
        // Predicated region
        $region45: #{clip_encoder_forward.12} parent=31 // pred_check
          %p273 = pneg %p107
        $region46: #{clip_encoder_forward.12} parent=31 // pred_check_branch
          %275 = sbr.rel (%p273) target = $region48
        $region47: #{clip_encoder_forward.12} parent=31 // pred_region
          %s277 = ssub.s32 128, 128
          %278 = vsyncadd %s269, %s277
          %s279 = smul.addr %s21, 2
          %s280 = smul.addr %s279, 64
          %s281 = scalar_lea.hbm %s3, %s280
          %s283 = sshll.u32 %s272, 4
          %s284 = int_to_ptr.vmem [resolvable:$true] %s283
          %286 = dma.vmem_to_hbm [thread:$0]  %s284, 128, %s281, %s269
        $region48: #{clip_encoder_forward.12} parent=31 // pred_fallthru
          _
      $region32: #{clip_encoder_forward.12} parent=5 // pred_fallthru
        _
      %p287 = scmp.le.s32.totalorder 2, %s16
      // Predicated region
      $region49: #{clip_encoder_forward.12} parent=5 // pred_check
        %p288 = pneg %p287
      $region50: #{clip_encoder_forward.12} parent=5 // pred_check_branch
        %290 = sbr.rel (%p288) target = $region52
      $region51: #{clip_encoder_forward.12} parent=5 // pred_region
        %s291 = ssub.s32 %s16, 2
        // Predicated region
        $region53: #{clip_encoder_forward.12} parent=51 // pred_check
          %p292 = pneg %p113
        $region54: #{clip_encoder_forward.12} parent=51 // pred_check_branch
          %294 = sbr.rel (%p292) target = $region56
        $region55: #{clip_encoder_forward.12} parent=51 // pred_region
          %s295 = sand.u32 %s98, 1
          %s296 = scalar_lea.sflag [#allocation4], %s295
          %s297 = sand.u32 %s98, 1
          %s298 = smul.addr %s297, 8
          %s299 = scalar_lea.vmem [#allocation8], %s298
          %300 = dma.done %s296, 128
        $region56: #{clip_encoder_forward.12} parent=51 // pred_fallthru
          _
      $region52: #{clip_encoder_forward.12} parent=5 // pred_fallthru
        _
    $region6: #{clip_encoder_forward.12} parent=1 // loop_footer
      %s20 = sadd.s32 1, %s16
    $region7: #{clip_encoder_forward.12} parent=1 // loop_footer_branch
      %15 = sbr.rel target = $region3
    $region8: #{clip_encoder_forward.12} parent=1 // loop_exit
      _
    %301 = vsyncpa [#allocation3], 1
    %s302 = scalar_lea.sflag [#allocation3], 1
    %303 = vsyncpa %s302, 1
    %304 = vsyncpa [#allocation6], 1
    %305 = vsyncpa [#allocation4], 1
    %s306 = scalar_lea.sflag [#allocation4], 1
    %307 = vsyncpa %s306, 1

// kernel: clip_encoder_forward.11
$region0: #{clip_encoder_forward.11}
  #allocation0 [shape = 'u32[]', space=smem, size = 0x4, offset = 0x4, fixed_abs, tag = 'smem constant byte address 0x4 - core index']
  #allocation1 [shape = 'u32[144,128]{1,0:T(1,128)}', space=vmem, size = 0x12000, scoped, tag = 'internal scratch']
  %s0 = inlined_call_operand.hbm [shape: bf16[8,192], index: 0, kind: input, shape index: {}]
  %s1 = inlined_call_operand.hbm [shape: bf16[192,256], index: 1, kind: input, shape index: {}]
  %s2 = inlined_call_operand.hbm [shape: f32[1,256], index: 2, kind: input, shape index: {}]
  %s3 = inlined_call_operand.hbm [shape: f32[8,256], index: 3, kind: output, shape index: {}]
  %s4 = sld [smem:[#allocation0]]
  $region34: #{clip_encoder_forward.11} parent=0
    _
  %s6 = ssub.s32 1, %s4
  %s7 = scalar_select 0, %s6, %s4
  $region1: #{clip_encoder_forward.11} parent=0
    #allocation2 [shape = 'u8[4096]{0}', space=vmem, size = 0x1000, scoped, tag = 'input window, operand 0, single buffered']
    #allocation3 [shape = 's32[1]{0}', space=sflag, size = 0x4, scoped, tag = 'scoped memory for clip_encoder_forward.11']
    #allocation4 [shape = 's32[1]{0}', space=sflag, size = 0x4, scoped, tag = 'scoped memory for clip_encoder_forward.11']
    #allocation5 [shape = 'u8[98304]{0}', space=vmem, size = 0x18000, scoped, tag = 'input window, operand 1, single buffered']
    #allocation6 [shape = 's32[1]{0}', space=sflag, size = 0x4, scoped, tag = 'scoped memory for clip_encoder_forward.11']
    #allocation7 [shape = 'u8[1024]{0}', space=vmem, size = 0x400, scoped, tag = 'input window, operand 2, single buffered']
    #allocation8 [shape = 'u8[8192]{0}', space=vmem, size = 0x2000, scoped, tag = 'output window, operand 0, single buffered']
    %8 = vsyncpa [#allocation3], 0
    %9 = vsyncpa [#allocation6], 0
    %10 = vsyncpa [#allocation4], 0
    // Predicated region
    $region2: #{clip_encoder_forward.11} parent=1 // pred_check
      _
    $region3: #{clip_encoder_forward.11} parent=1 // pred_check_branch
      %12 = sbr.rel (0) target = $region5
    $region4: #{clip_encoder_forward.11} parent=1 // pred_region
      %s14 = ssub.s32 128, 128
      %15 = vsyncadd [#allocation3], %s14
      %s17 = sshll.u32 [#allocation2], 4
      %s18 = int_to_ptr.vmem [resolvable:$true] %s17
      %20 = dma.hbm_to_vmem [thread:$0]  %s0, 128, %s18, [#allocation3]
    $region5: #{clip_encoder_forward.11} parent=1 // pred_fallthru
      _
    // Predicated region
    $region6: #{clip_encoder_forward.11} parent=1 // pred_check
      _
    $region7: #{clip_encoder_forward.11} parent=1 // pred_check_branch
      %22 = sbr.rel (0) target = $region9
    $region8: #{clip_encoder_forward.11} parent=1 // pred_region
      %s24 = ssub.s32 3072, 3072
      %25 = vsyncadd [#allocation6], %s24
      %s26 = sshll.u32 [#allocation5], 4
      %s27 = int_to_ptr.vmem [resolvable:$true] %s26
      %32 = dma.hbm_to_vmem [thread:$0]  %s1, 3072, %s27, [#allocation6], 128, 128, 8
    $region9: #{clip_encoder_forward.11} parent=1 // pred_fallthru
      _
    // Predicated region
    $region10: #{clip_encoder_forward.11} parent=1 // pred_check
      _
    $region11: #{clip_encoder_forward.11} parent=1 // pred_check_branch
      %34 = sbr.rel (0) target = $region13
    $region12: #{clip_encoder_forward.11} parent=1 // pred_region
      %s36 = ssub.s32 32, 32
      %37 = vsyncadd [#allocation6], %s36
      %s39 = sshll.u32 [#allocation7], 4
      %s40 = int_to_ptr.vmem [resolvable:$true] %s39
      %42 = dma.hbm_to_vmem [thread:$0]  %s2, 32, %s40, [#allocation6]
    $region13: #{clip_encoder_forward.11} parent=1 // pred_fallthru
      _
    // Predicated region
    $region14: #{clip_encoder_forward.11} parent=1 // pred_check
      _
    $region15: #{clip_encoder_forward.11} parent=1 // pred_check_branch
      %44 = sbr.rel (0) target = $region17
    $region16: #{clip_encoder_forward.11} parent=1 // pred_region
      %45 = dma.done [#allocation3], 128
    $region17: #{clip_encoder_forward.11} parent=1 // pred_fallthru
      _
    // Predicated region
    $region18: #{clip_encoder_forward.11} parent=1 // pred_check
      _
    $region19: #{clip_encoder_forward.11} parent=1 // pred_check_branch
      %47 = sbr.rel (0) target = $region21
    $region20: #{clip_encoder_forward.11} parent=1 // pred_region
      %48 = dma.done [#allocation6], 3072
    $region21: #{clip_encoder_forward.11} parent=1 // pred_fallthru
      _
    // Predicated region
    $region22: #{clip_encoder_forward.11} parent=1 // pred_check
      _
    $region23: #{clip_encoder_forward.11} parent=1 // pred_check_branch
      %50 = sbr.rel (0) target = $region25
    $region24: #{clip_encoder_forward.11} parent=1 // pred_region
      %51 = dma.done [#allocation6], 32
    $region25: #{clip_encoder_forward.11} parent=1 // pred_fallthru
      _
    %v53 = vld [vmem:[#allocation2] sm:$0xff]
    %v54 = vld [vmem:[#allocation5] sm:$0xff]
    %v55 = vld [vmem:[#allocation5 + $0x8] sm:$0xff]
    %v56 = vld [vmem:[#allocation5 + $0x10] sm:$0xff]
    %v57 = vld [vmem:[#allocation5 + $0x18] sm:$0xff]
    %v58 = vld [vmem:[#allocation5 + $0x20] sm:$0xff]
    %v59 = vld [vmem:[#allocation5 + $0x28] sm:$0xff]
    %v60 = vld [vmem:[#allocation5 + $0x30] sm:$0xff]
    %v61 = vld [vmem:[#allocation5 + $0x38] sm:$0xff]
    %v62 = vld [vmem:[#allocation5 + $0x40] sm:$0xff]
    %v63 = vld [vmem:[#allocation5 + $0x48] sm:$0xff]
    %v64 = vld [vmem:[#allocation5 + $0x50] sm:$0xff]
    %v65 = vld [vmem:[#allocation5 + $0x58] sm:$0xff]
    %v66 = vld [vmem:[#allocation5 + $0x60] sm:$0xff]
    %v67 = vld [vmem:[#allocation5 + $0x68] sm:$0xff]
    %v68 = vld [vmem:[#allocation5 + $0x70] sm:$0xff]
    %v69 = vld [vmem:[#allocation5 + $0x78] sm:$0xff]
    %v70 = vld [vmem:[#allocation5 + $0x80] sm:$0xff]
    %v71 = vld [vmem:[#allocation5 + $0x88] sm:$0xff]
    %v72 = vld [vmem:[#allocation5 + $0x90] sm:$0xff]
    %v73 = vld [vmem:[#allocation5 + $0x98] sm:$0xff]
    %v74 = vld [vmem:[#allocation5 + $0xa0] sm:$0xff]
    %v75 = vld [vmem:[#allocation5 + $0xa8] sm:$0xff]
    %v76 = vld [vmem:[#allocation5 + $0xb0] sm:$0xff]
    %v77 = vld [vmem:[#allocation5 + $0xb8] sm:$0xff]
    %v78 = vld [vmem:[#allocation7] sm:$0x3]
    %v80 = vlaneseq
    %v81 = vshrl.u32 %v80, 7
    %v82 = vsub.s32 0, %v81
    %v83 = vrot.slane %v78, %v82
    %v84 = vlaneseq
    %v85 = vshrl.u32 %v84, 7
    %v86 = vsub.s32 1, %v85
    %v87 = vrot.slane %v78, %v86
    %v91 = vunpack.c.l.b16 %v53
    %v92 = vunpack.c.h.b16 %v53
    %v93 = vpack.c.b16 %v91, %v91
    %v94 = vpack.c.b16 %v92, %v92
    %v120 = vunpack.c.l.b16 %v54
    %v121 = vunpack.c.h.b16 %v54
    %v122 = vunpack.c.l.b16 %v55
    %v123 = vunpack.c.h.b16 %v55
    %v124 = vunpack.c.l.b16 %v56
    %v125 = vunpack.c.h.b16 %v56
    %v126 = vunpack.c.l.b16 %v57
    %v127 = vunpack.c.h.b16 %v57
    %v128 = vunpack.c.l.b16 %v58
    %v129 = vunpack.c.h.b16 %v58
    %v130 = vunpack.c.l.b16 %v59
    %v131 = vunpack.c.h.b16 %v59
    %v132 = vunpack.c.l.b16 %v60
    %v133 = vunpack.c.h.b16 %v60
    %v134 = vunpack.c.l.b16 %v61
    %v135 = vunpack.c.h.b16 %v61
    %v136 = vunpack.c.l.b16 %v62
    %v137 = vunpack.c.h.b16 %v62
    %v138 = vunpack.c.l.b16 %v63
    %v139 = vunpack.c.h.b16 %v63
    %v140 = vunpack.c.l.b16 %v64
    %v141 = vunpack.c.h.b16 %v64
    %v142 = vunpack.c.l.b16 %v65
    %v143 = vunpack.c.h.b16 %v65
    %v144 = vunpack.c.l.b16 %v66
    %v145 = vunpack.c.h.b16 %v66
    %v146 = vunpack.c.l.b16 %v67
    %v147 = vunpack.c.h.b16 %v67
    %v148 = vunpack.c.l.b16 %v68
    %v149 = vunpack.c.h.b16 %v68
    %v150 = vunpack.c.l.b16 %v69
    %v151 = vunpack.c.h.b16 %v69
    %v152 = vunpack.c.l.b16 %v70
    %v153 = vunpack.c.h.b16 %v70
    %v154 = vunpack.c.l.b16 %v71
    %v155 = vunpack.c.h.b16 %v71
    %v156 = vunpack.c.l.b16 %v72
    %v157 = vunpack.c.h.b16 %v72
    %v158 = vunpack.c.l.b16 %v73
    %v159 = vunpack.c.h.b16 %v73
    %v160 = vunpack.c.l.b16 %v74
    %v161 = vunpack.c.h.b16 %v74
    %v162 = vunpack.c.l.b16 %v75
    %v163 = vunpack.c.h.b16 %v75
    %v164 = vunpack.c.l.b16 %v76
    %v165 = vunpack.c.h.b16 %v76
    %v166 = vunpack.c.l.b16 %v77
    %v167 = vunpack.c.h.b16 %v77
    %v168 = vpack.c.b16 %v122, %v120
    %v169 = vpack.c.b16 %v123, %v121
    %v170 = vpack.c.b16 %v126, %v124
    %v171 = vpack.c.b16 %v127, %v125
    %v172 = vpack.c.b16 %v130, %v128
    %v173 = vpack.c.b16 %v131, %v129
    %v174 = vpack.c.b16 %v134, %v132
    %v175 = vpack.c.b16 %v135, %v133
    %v176 = vpack.c.b16 %v138, %v136
    %v177 = vpack.c.b16 %v139, %v137
    %v178 = vpack.c.b16 %v142, %v140
    %v179 = vpack.c.b16 %v143, %v141
    %v180 = vpack.c.b16 %v146, %v144
    %v181 = vpack.c.b16 %v147, %v145
    %v182 = vpack.c.b16 %v150, %v148
    %v183 = vpack.c.b16 %v151, %v149
    %v184 = vpack.c.b16 %v154, %v152
    %v185 = vpack.c.b16 %v155, %v153
    %v186 = vpack.c.b16 %v158, %v156
    %v187 = vpack.c.b16 %v159, %v157
    %v188 = vpack.c.b16 %v162, %v160
    %v189 = vpack.c.b16 %v163, %v161
    %v190 = vpack.c.b16 %v166, %v164
    %v191 = vpack.c.b16 %v167, %v165
    %vm216 = vcmask 523264
    %v218 = vsel %vm216, %v94, 0
    %220 = vmatprep.subr.bf16.mxu0 %v169
    %221 = vmatpush1.bf16.msra.mxu0 %v168
    %222 = vmatprep.subr.bf16.mxu0 %v171
    %223 = vmatpush1.bf16.msra.mxu0 %v170
    %224 = vmatprep.subr.bf16.mxu0 %v173
    %225 = vmatpush1.bf16.msra.mxu0 %v172
    %226 = vmatprep.subr.bf16.mxu0 %v175
    %227 = vmatpush1.bf16.msra.mxu0 %v174
    %228 = vmatprep.subr.bf16.mxu0 %v177
    %229 = vmatpush1.bf16.msra.mxu0 %v176
    %230 = vmatprep.subr.bf16.mxu0 %v179
    %231 = vmatpush1.bf16.msra.mxu0 %v178
    %232 = vmatprep.subr.bf16.mxu0 %v181
    %233 = vmatpush1.bf16.msra.mxu0 %v180
    %234 = vmatprep.subr.bf16.mxu0 %v183
    %235 = vmatpush1.bf16.msra.mxu0 %v182
    %236 = vmatprep.subr.bf16.mxu0 %v185
    %237 = vmatpush1.bf16.msra.mxu0 %v184
    %238 = vmatprep.subr.bf16.mxu0 %v187
    %239 = vmatpush1.bf16.msra.mxu0 %v186
    %240 = vmatprep.subr.bf16.mxu0 %v189
    %241 = vmatpush1.bf16.msra.mxu0 %v188
    %242 = vmatprep.subr.bf16.mxu0 %v191
    %243 = vmatpush1.bf16.msra.mxu0 %v190
    %244 = vmatprep.subr.bf16.mxu0 0
    %245 = vmatpush1.bf16.msra.mxu0 0
    %246 = vmatprep.subr.bf16.mxu0 0
    %247 = vmatpush1.bf16.msra.mxu0 0
    %248 = vmatprep.subr.bf16.mxu0 0
    %249 = vmatpush1.bf16.msra.mxu0 0
    %250 = vmatprep.subr.bf16.mxu0 0
    %251 = vmatpush1.bf16.msra.mxu0 0
    %252 = vmatprep.mubr.bf16.mxu0 %v218
    %253 = vmatmul.mubr.bf16.gmra.mrb[0].mxu0 %v93
    %v254 = vpop.f32.mrb[0].mxu0
    %v255 = vadd.f32 %v83, %v254
    %v256 = vpop.f32.mrb[0].mxu0
    %v257 = vadd.f32 %v87, %v256
    %v258 = vpop.f32.mrb[0].mxu0
    %v259 = vpop.f32.mrb[0].mxu0
    %260 = vdwg.mxu0
    %261 = vst [vmem:[#allocation8] sm:$0xff] %v255
    %262 = vst [vmem:[#allocation8 + $0x8] sm:$0xff] %v257
    // Predicated region
    $region26: #{clip_encoder_forward.11} parent=1 // pred_check
      _
    $region27: #{clip_encoder_forward.11} parent=1 // pred_check_branch
      %264 = sbr.rel (0) target = $region29
    $region28: #{clip_encoder_forward.11} parent=1 // pred_region
      %s266 = ssub.s32 256, 256
      %267 = vsyncadd [#allocation4], %s266
      %s269 = sshll.u32 [#allocation8], 4
      %s270 = int_to_ptr.vmem [resolvable:$true] %s269
      %272 = dma.vmem_to_hbm [thread:$0]  %s270, 256, %s3, [#allocation4]
    $region29: #{clip_encoder_forward.11} parent=1 // pred_fallthru
      _
    // Predicated region
    $region30: #{clip_encoder_forward.11} parent=1 // pred_check
      _
    $region31: #{clip_encoder_forward.11} parent=1 // pred_check_branch
      %274 = sbr.rel (0) target = $region33
    $region32: #{clip_encoder_forward.11} parent=1 // pred_region
      %275 = dma.done [#allocation4], 256
    $region33: #{clip_encoder_forward.11} parent=1 // pred_fallthru
      _
    %276 = vsyncpa [#allocation3], 1
    %277 = vsyncpa [#allocation6], 1
    %278 = vsyncpa [#allocation4], 1

// kernel: clip_encoder_forward.14
$region0: #{clip_encoder_forward.14}
  #allocation0 [shape = 'u32[]', space=smem, size = 0x4, offset = 0x4, fixed_abs, tag = 'smem constant byte address 0x4 - core index']
  #allocation1 [shape = 'u32[144,128]{1,0:T(1,128)}', space=vmem, size = 0x12000, scoped, tag = 'internal scratch']
  %s0 = inlined_call_operand.hbm [shape: bf16[2,8,768], index: 0, kind: input, shape index: {}, may-alias: {0,1,2}]
  %s1 = inlined_call_operand.hbm [shape: bf16[2,8,768], index: 1, kind: input, shape index: {}, may-alias: {0,1,2}]
  %s2 = inlined_call_operand.hbm [shape: bf16[2,8,768], index: 2, kind: input, shape index: {}, may-alias: {0,1,2}]
  %s3 = inlined_call_operand.hbm [shape: f32[1,8], index: 3, kind: input, shape index: {}]
  %s4 = inlined_call_operand.hbm [shape: bf16[2,8,256], index: 4, kind: output, shape index: {}]
  %s5 = sld [smem:[#allocation0]]
  $region65: #{clip_encoder_forward.14} parent=0
    _
  %s7 = ssub.s32 1, %s5
  %s8 = scalar_select 0, %s7, %s5
  $region1: #{clip_encoder_forward.14} parent=0
    #allocation2 [shape = 'u8[4096]{0}', space=vmem, size = 0x1000, scoped, tag = 'input window, operand 0']
    #allocation3 [shape = 's32[2]{0}', space=sflag, size = 0x8, scoped, tag = 'scoped memory for clip_encoder_forward.14']
    #allocation4 [shape = 's32[2]{0}', space=sflag, size = 0x8, scoped, tag = 'scoped memory for clip_encoder_forward.14']
    #allocation5 [shape = 'u8[4096]{0}', space=vmem, size = 0x1000, scoped, tag = 'input window, operand 1']
    #allocation6 [shape = 's32[2]{0}', space=sflag, size = 0x8, scoped, tag = 'scoped memory for clip_encoder_forward.14']
    #allocation7 [shape = 'u8[4096]{0}', space=vmem, size = 0x1000, scoped, tag = 'input window, operand 2']
    #allocation8 [shape = 'u8[512]{0}', space=vmem, size = 0x400, scoped, tag = 'input window, operand 3, single buffered']
    #allocation9 [shape = 's32[1]{0}', space=sflag, size = 0x4, scoped, tag = 'scoped memory for clip_encoder_forward.14']
    #allocation10 [shape = 'u8[4096]{0}', space=vmem, size = 0x1000, scoped, tag = 'output window, operand 0']
    %9 = vsyncpa [#allocation3], 0
    %s10 = scalar_lea.sflag [#allocation3], 1
    %11 = vsyncpa %s10, 0
    %12 = vsyncpa [#allocation6], 0
    %s13 = scalar_lea.sflag [#allocation6], 1
    %14 = vsyncpa %s13, 0
    %15 = vsyncpa [#allocation9], 0
    %16 = vsyncpa [#allocation4], 0
    %s17 = scalar_lea.sflag [#allocation4], 1
    %18 = vsyncpa %s17, 0
    loop: start=0, step=1, limit=6
    $region2: #{clip_encoder_forward.14} parent=1 // loop_pre_header
      _
    $region3: #{clip_encoder_forward.14} parent=1 // loop_header
      %s20 = sphi 0, %s24
      %p21 = scmp.ge.s32.totalorder %s20, 6
      %s27 = sphi 0, %s39
      %s28 = sphi 0, %s35
      %s29 = sphi 0, %s27
      %s30 = sphi 0, %s28
      %s31 = sphi 0, %s29
      %s32 = sphi 0, %s30
      %s44 = sphi 0, %s46
      %s47 = sphi 0, %s44
      %s48 = sphi 0, %s47
      %s64 = sphi 0, %s48
      %s74 = sphi 0, %s76
      %s77 = sphi 0, %s74
      %s78 = sphi 0, %s77
      %s94 = sphi 0, %s78
      %s104 = sphi 0, %s106
      %s107 = sphi 0, %s104
      %s108 = sphi 0, %s107
      %s124 = sphi 0, %s108
      %s128 = sphi 0, %s128
      %s130 = sphi 0, %s128
      %s131 = sphi 0, %s130
      %s145 = sphi 0, %s131
      %s153 = sphi 0, %s155
      %s156 = sphi 0, %s153
      %s157 = sphi 0, %s156
      %s173 = sphi 0, %s157
    $region4: #{clip_encoder_forward.14} parent=1 // loop_header_branch
      %23 = sbr.rel (%p21) target = $region8
    $region5: #{clip_encoder_forward.14} parent=1 // loop_body
      %s25 = ssub.s32 %s20, 1
      %s26 = ssub.s32 %s20, 2
      %s33 = sadd.s32 1, %s28
      %p34 = scmp.ge.s32.totalorder %s33, 2
      %s35 = scalar_select %p34, 0, %s33
      %s36 = sadd.s32 1, %s27
      %s37 = scalar_select %p34, %s36, %s27
      %p38 = scmp.ge.s32.totalorder %s37, 2
      %s39 = scalar_select %p38, 0, %s37
      %s40 = ssub.s32 %s27, %s39
      %s41 = ssub.s32 %s28, %s35
      %s42 = sor.u32 %s40, %s41
      %p43 = scmp.eq.s32.totalorder %s42, 0
      %s45 = sadd.s32 %s44, 1
      %s46 = scalar_select %p43, %s44, %s45
      %p49 = pneg %p43
      %p50 = scmp.eq.s32.totalorder %s20, 3
      %p51 = por %p49, %p50
      %p52 = scmp.ne.s32.totalorder %s44, %s47
      %p53 = scmp.eq.s32.totalorder %s20, 0
      %p54 = por %p52, %p53
      %p55 = scmp.ne.s32.totalorder %s44, %s47
      %p56 = scmp.eq.s32.totalorder %s25, 3
      %p57 = por %p55, %p56
      %p58 = scmp.ne.s32.totalorder %s47, %s48
      %p59 = scmp.eq.s32.totalorder %s25, 0
      %p60 = por %p58, %p59
      %p61 = scmp.ne.s32.totalorder %s47, %s48
      %p62 = scmp.eq.s32.totalorder %s26, 3
      %p63 = por %p61, %p62
      %p65 = scmp.ne.s32.totalorder %s48, %s64
      %p66 = scmp.eq.s32.totalorder %s26, 0
      %p67 = por %p65, %p66
      %s68 = sadd.s32 %s28, 2
      %s69 = sadd.s32 %s35, 2
      %s70 = ssub.s32 %s27, %s39
      %s71 = ssub.s32 %s68, %s69
      %s72 = sor.u32 %s70, %s71
      %p73 = scmp.eq.s32.totalorder %s72, 0
      %s75 = sadd.s32 %s74, 1
      %s76 = scalar_select %p73, %s74, %s75
      %p79 = pneg %p73
      %p80 = scmp.eq.s32.totalorder %s20, 3
      %p81 = por %p79, %p80
      %p82 = scmp.ne.s32.totalorder %s74, %s77
      %p83 = scmp.eq.s32.totalorder %s20, 0
      %p84 = por %p82, %p83
      %p85 = scmp.ne.s32.totalorder %s74, %s77
      %p86 = scmp.eq.s32.totalorder %s25, 3
      %p87 = por %p85, %p86
      %p88 = scmp.ne.s32.totalorder %s77, %s78
      %p89 = scmp.eq.s32.totalorder %s25, 0
      %p90 = por %p88, %p89
      %p91 = scmp.ne.s32.totalorder %s77, %s78
      %p92 = scmp.eq.s32.totalorder %s26, 3
      %p93 = por %p91, %p92
      %p95 = scmp.ne.s32.totalorder %s78, %s94
      %p96 = scmp.eq.s32.totalorder %s26, 0
      %p97 = por %p95, %p96
      %s98 = sadd.s32 %s28, 4
      %s99 = sadd.s32 %s35, 4
      %s100 = ssub.s32 %s27, %s39
      %s101 = ssub.s32 %s98, %s99
      %s102 = sor.u32 %s100, %s101
      %p103 = scmp.eq.s32.totalorder %s102, 0
      %s105 = sadd.s32 %s104, 1
      %s106 = scalar_select %p103, %s104, %s105
      %p109 = pneg %p103
      %p110 = scmp.eq.s32.totalorder %s20, 3
      %p111 = por %p109, %p110
      %p112 = scmp.ne.s32.totalorder %s104, %s107
      %p113 = scmp.eq.s32.totalorder %s20, 0
      %p114 = por %p112, %p113
      %p115 = scmp.ne.s32.totalorder %s104, %s107
      %p116 = scmp.eq.s32.totalorder %s25, 3
      %p117 = por %p115, %p116
      %p118 = scmp.ne.s32.totalorder %s107, %s108
      %p119 = scmp.eq.s32.totalorder %s25, 0
      %p120 = por %p118, %p119
      %p121 = scmp.ne.s32.totalorder %s107, %s108
      %p122 = scmp.eq.s32.totalorder %s26, 3
      %p123 = por %p121, %p122
      %p125 = scmp.ne.s32.totalorder %s108, %s124
      %p126 = scmp.eq.s32.totalorder %s26, 0
      %p127 = por %p125, %p126
      %s129 = sadd.s32 %s128, 1
      %p132 = scmp.eq.s32.totalorder %s20, 3
      %p133 = scmp.ne.s32.totalorder %s128, %s130
      %p134 = scmp.eq.s32.totalorder %s20, 0
      %p135 = por %p133, %p134
      %p136 = scmp.ne.s32.totalorder %s128, %s130
      %p137 = scmp.eq.s32.totalorder %s25, 3
      %p138 = por %p136, %p137
      %p139 = scmp.ne.s32.totalorder %s130, %s131
      %p140 = scmp.eq.s32.totalorder %s25, 0
      %p141 = por %p139, %p140
      %p142 = scmp.ne.s32.totalorder %s130, %s131
      %p143 = scmp.eq.s32.totalorder %s26, 3
      %p144 = por %p142, %p143
      %p146 = scmp.ne.s32.totalorder %s131, %s145
      %p147 = scmp.eq.s32.totalorder %s26, 0
      %p148 = por %p146, %p147
      %s149 = ssub.s32 %s27, %s39
      %s150 = ssub.s32 %s28, %s35
      %s151 = sor.u32 %s149, %s150
      %p152 = scmp.eq.s32.totalorder %s151, 0
      %s154 = sadd.s32 %s153, 1
      %s155 = scalar_select %p152, %s153, %s154
      %p158 = pneg %p152
      %p159 = scmp.eq.s32.totalorder %s20, 3
      %p160 = por %p158, %p159
      %p161 = scmp.ne.s32.totalorder %s153, %s156
      %p162 = scmp.eq.s32.totalorder %s20, 0
      %p163 = por %p161, %p162
      %p164 = scmp.ne.s32.totalorder %s153, %s156
      %p165 = scmp.eq.s32.totalorder %s25, 3
      %p166 = por %p164, %p165
      %p167 = scmp.ne.s32.totalorder %s156, %s157
      %p168 = scmp.eq.s32.totalorder %s25, 0
      %p169 = por %p167, %p168
      %p170 = scmp.ne.s32.totalorder %s156, %s157
      %p171 = scmp.eq.s32.totalorder %s26, 3
      %p172 = por %p170, %p171
      %p174 = scmp.ne.s32.totalorder %s157, %s173
      %p175 = scmp.eq.s32.totalorder %s26, 0
      %p176 = por %p174, %p175
      %p177 = scmp.le.s32.totalorder 1, %s20
      %p178 = scmp.lt.s32.totalorder %s20, 5
      %p179 = pnand %p177, %p178
      %p180 = pneg %p179
      // Predicated region
      $region9: #{clip_encoder_forward.14} parent=5 // pred_check
        _
      $region10: #{clip_encoder_forward.14} parent=5 // pred_check_branch
        %182 = sbr.rel (%p179) target = $region12
      $region11: #{clip_encoder_forward.14} parent=5 // pred_region
        %s183 = ssub.s32 %s20, 1
        // Predicated region
        $region13: #{clip_encoder_forward.14} parent=11 // pred_check
          %p184 = pneg %p141
        $region14: #{clip_encoder_forward.14} parent=11 // pred_check_branch
          %186 = sbr.rel (%p184) target = $region16
        $region15: #{clip_encoder_forward.14} parent=11 // pred_region
          %s188 = ssub.s32 16, 16
          %189 = vsyncadd [#allocation9], %s188
          %s191 = sshll.u32 [#allocation8], 4
          %s192 = int_to_ptr.vmem [resolvable:$true] %s191
          %194 = dma.hbm_to_vmem [thread:$0]  %s3, 16, %s192, [#allocation9]
        $region16: #{clip_encoder_forward.14} parent=11 // pred_fallthru
          _
      $region12: #{clip_encoder_forward.14} parent=5 // pred_fallthru
        _
      %p195 = scmp.lt.s32.totalorder %s20, 4
      // Predicated region
      $region17: #{clip_encoder_forward.14} parent=5 // pred_check
        %p196 = pneg %p195
      $region18: #{clip_encoder_forward.14} parent=5 // pred_check_branch
        %198 = sbr.rel (%p196) target = $region20
      $region19: #{clip_encoder_forward.14} parent=5 // pred_region
        // Predicated region
        $region21: #{clip_encoder_forward.14} parent=19 // pred_check
          %p199 = pneg %p54
        $region22: #{clip_encoder_forward.14} parent=19 // pred_check_branch
          %201 = sbr.rel (%p199) target = $region24
        $region23: #{clip_encoder_forward.14} parent=19 // pred_region
          %s202 = sand.u32 %s44, 1
          %s203 = scalar_lea.sflag [#allocation3], %s202
          %s204 = sand.u32 %s44, 1
          %s205 = smul.addr %s204, 4
          %s206 = scalar_lea.vmem [#allocation2], %s205
          %s208 = ssub.s32 64, 64
          %209 = vsyncadd %s203, %s208
          %s210 = smul.addr %s27, 6
          %s211 = sadd.s32 %s28, %s210
          %s212 = smul.addr %s211, 64
          %s213 = scalar_lea.hbm %s0, %s212
          %s215 = sshll.u32 %s206, 4
          %s216 = int_to_ptr.vmem [resolvable:$true] %s215
          %218 = dma.hbm_to_vmem [thread:$0]  %s213, 64, %s216, %s203
        $region24: #{clip_encoder_forward.14} parent=19 // pred_fallthru
          _
        // Predicated region
        $region25: #{clip_encoder_forward.14} parent=19 // pred_check
          %p219 = pneg %p84
        $region26: #{clip_encoder_forward.14} parent=19 // pred_check_branch
          %221 = sbr.rel (%p219) target = $region28
        $region27: #{clip_encoder_forward.14} parent=19 // pred_region
          %s222 = sand.u32 %s20, 1
          %s223 = scalar_lea.sflag [#allocation6], %s222
          %s224 = sand.u32 %s74, 1
          %s225 = smul.addr %s224, 4
          %s226 = scalar_lea.vmem [#allocation5], %s225
          %s227 = sadd.s32 %s28, 2
          %s229 = ssub.s32 64, 64
          %230 = vsyncadd %s223, %s229
          %s231 = smul.addr %s27, 6
          %s232 = sadd.s32 %s227, %s231
          %s233 = smul.addr %s232, 64
          %s234 = scalar_lea.hbm %s1, %s233
          %s236 = sshll.u32 %s226, 4
          %s237 = int_to_ptr.vmem [resolvable:$true] %s236
          %239 = dma.hbm_to_vmem [thread:$0]  %s234, 64, %s237, %s223
        $region28: #{clip_encoder_forward.14} parent=19 // pred_fallthru
          _
        // Predicated region
        $region29: #{clip_encoder_forward.14} parent=19 // pred_check
          %p240 = pneg %p114
        $region30: #{clip_encoder_forward.14} parent=19 // pred_check_branch
          %242 = sbr.rel (%p240) target = $region32
        $region31: #{clip_encoder_forward.14} parent=19 // pred_region
          %s243 = sand.u32 %s20, 1
          %s244 = scalar_lea.sflag [#allocation6], %s243
          %s245 = sand.u32 %s104, 1
          %s246 = smul.addr %s245, 4
          %s247 = scalar_lea.vmem [#allocation7], %s246
          %s248 = sadd.s32 %s28, 4
          %s250 = ssub.s32 64, 64
          %251 = vsyncadd %s244, %s250
          %s252 = smul.addr %s27, 6
          %s253 = sadd.s32 %s248, %s252
          %s254 = smul.addr %s253, 64
          %s255 = scalar_lea.hbm %s2, %s254
          %s257 = sshll.u32 %s247, 4
          %s258 = int_to_ptr.vmem [resolvable:$true] %s257
          %260 = dma.hbm_to_vmem [thread:$0]  %s255, 64, %s258, %s244
        $region32: #{clip_encoder_forward.14} parent=19 // pred_fallthru
          _
      $region20: #{clip_encoder_forward.14} parent=5 // pred_fallthru
        _
      %p261 = scmp.le.s32.totalorder 1, %s20
      %p262 = scmp.lt.s32.totalorder %s20, 5
      %p263 = pnand %p261, %p262
      %p264 = pneg %p263
      // Predicated region
      $region33: #{clip_encoder_forward.14} parent=5 // pred_check
        _
      $region34: #{clip_encoder_forward.14} parent=5 // pred_check_branch
        %266 = sbr.rel (%p263) target = $region36
      $region35: #{clip_encoder_forward.14} parent=5 // pred_region
        %s267 = ssub.s32 %s20, 1
        %s268 = sand.u32 %s47, 1
        %s269 = scalar_lea.sflag [#allocation3], %s268
        %s270 = sand.u32 %s47, 1
        %s271 = smul.addr %s270, 4
        %s272 = scalar_lea.vmem [#allocation2], %s271
        // Predicated region
        $region37: #{clip_encoder_forward.14} parent=35 // pred_check
          %p273 = pneg %p60
        $region38: #{clip_encoder_forward.14} parent=35 // pred_check_branch
          %275 = sbr.rel (%p273) target = $region40
        $region39: #{clip_encoder_forward.14} parent=35 // pred_region
          %276 = dma.done %s269, 64
        $region40: #{clip_encoder_forward.14} parent=35 // pred_fallthru
          _
        %s277 = sand.u32 %s25, 1
        %s278 = scalar_lea.sflag [#allocation6], %s277
        %s279 = sand.u32 %s77, 1
        %s280 = smul.addr %s279, 4
        %s281 = scalar_lea.vmem [#allocation5], %s280
        // Predicated region
        $region41: #{clip_encoder_forward.14} parent=35 // pred_check
          %p282 = pneg %p90
        $region42: #{clip_encoder_forward.14} parent=35 // pred_check_branch
          %284 = sbr.rel (%p282) target = $region44
        $region43: #{clip_encoder_forward.14} parent=35 // pred_region
          %285 = dma.done %s278, 64
        $region44: #{clip_encoder_forward.14} parent=35 // pred_fallthru
          _
        %s286 = sand.u32 %s25, 1
        %s287 = scalar_lea.sflag [#allocation6], %s286
        %s288 = sand.u32 %s107, 1
        %s289 = smul.addr %s288, 4
        %s290 = scalar_lea.vmem [#allocation7], %s289
        // Predicated region
        $region45: #{clip_encoder_forward.14} parent=35 // pred_check
          %p291 = pneg %p120
        $region46: #{clip_encoder_forward.14} parent=35 // pred_check_branch
          %293 = sbr.rel (%p291) target = $region48
        $region47: #{clip_encoder_forward.14} parent=35 // pred_region
          %294 = dma.done %s287, 64
        $region48: #{clip_encoder_forward.14} parent=35 // pred_fallthru
          _
        // Predicated region
        $region49: #{clip_encoder_forward.14} parent=35 // pred_check
          %p295 = pneg %p141
        $region50: #{clip_encoder_forward.14} parent=35 // pred_check_branch
          %297 = sbr.rel (%p295) target = $region52
        $region51: #{clip_encoder_forward.14} parent=35 // pred_region
          %298 = dma.done [#allocation9], 16
        $region52: #{clip_encoder_forward.14} parent=35 // pred_fallthru
          _
        %s299 = sand.u32 %s47, 1
        %s300 = scalar_lea.sflag [#allocation3], %s299
        %s301 = sand.u32 %s47, 1
        %s302 = smul.addr %s301, 4
        %s303 = scalar_lea.vmem [#allocation2], %s302
        %p304 = pneg %p60
        %p305 = pneg %p57
        %s306 = sand.u32 %s25, 1
        %s307 = scalar_lea.sflag [#allocation6], %s306
        %s308 = sand.u32 %s77, 1
        %s309 = smul.addr %s308, 4
        %s310 = scalar_lea.vmem [#allocation5], %s309
        %p311 = pneg %p90
        %p312 = pneg %p87
        %s313 = sand.u32 %s25, 1
        %s314 = scalar_lea.sflag [#allocation6], %s313
        %s315 = sand.u32 %s107, 1
        %s316 = smul.addr %s315, 4
        %s317 = scalar_lea.vmem [#allocation7], %s316
        %p318 = pneg %p120
        %p319 = pneg %p117
        %p320 = pneg %p141
        %p321 = pneg %p138
        %p322 = pneg %p169
        %p323 = pneg %p166
        %s324 = sand.u32 %s156, 1
        %s325 = scalar_lea.sflag [#allocation4], %s324
        %s326 = sand.u32 %s156, 1
        %s327 = smul.addr %s326, 4
        %s328 = scalar_lea.vmem [#allocation10], %s327
        %s329 = sadd.s32 %s30, 2
        %s330 = sadd.s32 %s30, 4
        %v332 = vld [vmem:[%s272] sm:$0xf]
        %v333 = vld [vmem:[%s281] sm:$0xf]
        %v334 = vld [vmem:[%s290] sm:$0xf]
        %v335 = vld [vmem:[#allocation8] sm:$0x1]
        %v337 = vlaneseq
        %v338 = vshrl.u32 %v337, 7
        %v339 = vsub.s32 0, %v338
        %v340 = vrot.slane %v335, %v339
        %vm342 = vcmask 523264
        %v344 = vsel %vm342, %v332, 0
        %v347 = vsel %vm342, %v333, 0
        %349 = vmatprep.subr.bf16.mxu0 0
        %350 = vmatpush1.bf16.xpose.msra.mxu0 %v347
        %351 = vmatprep.subr.bf16.mxu0 0
        %352 = vmatpush1.bf16.xpose.msra.mxu0 0
        %353 = vmatprep.subr.bf16.mxu0 0
        %354 = vmatpush1.bf16.xpose.msra.mxu0 0
        %355 = vmatprep.subr.bf16.mxu0 0
        %356 = vmatpush1.bf16.xpose.msra.mxu0 0
        %357 = vmatprep.subr.bf16.mxu0 0
        %358 = vmatpush1.bf16.xpose.msra.mxu0 0
        %359 = vmatprep.subr.bf16.mxu0 0
        %360 = vmatpush1.bf16.xpose.msra.mxu0 0
        %361 = vmatprep.subr.bf16.mxu0 0
        %362 = vmatpush1.bf16.xpose.msra.mxu0 0
        %363 = vmatprep.subr.bf16.mxu0 0
        %364 = vmatpush1.bf16.xpose.msra.mxu0 0
        %365 = vmatprep.subr.bf16.mxu0 0
        %366 = vmatpush1.bf16.xpose.msra.mxu0 0
        %367 = vmatprep.subr.bf16.mxu0 0
        %368 = vmatpush1.bf16.xpose.msra.mxu0 0
        %369 = vmatprep.subr.bf16.mxu0 0
        %370 = vmatpush1.bf16.xpose.msra.mxu0 0
        %371 = vmatprep.subr.bf16.mxu0 0
        %372 = vmatpush1.bf16.xpose.msra.mxu0 0
        %373 = vmatprep.subr.bf16.mxu0 0
        %374 = vmatpush1.bf16.xpose.msra.mxu0 0
        %375 = vmatprep.subr.bf16.mxu0 0
        %376 = vmatpush1.bf16.xpose.msra.mxu0 0
        %377 = vmatprep.subr.bf16.mxu0 0
        %378 = vmatpush1.bf16.xpose.msra.mxu0 0
        %379 = vmatprep.subr.bf16.mxu0 0
        %380 = vmatpush1.bf16.xpose.msra.mxu0 0
        %381 = vmatprep.mubr.bf16.mxu0 0
        %382 = vmatmul.mubr.bf16.gmra.mrb[0].mxu0 %v344
        %v383 = vpop.f32.mrb[0].mxu0
        %v384 = vadd.f32 %v340, %v383
        %v385 = vpop.f32.mrb[0].mxu0
        %v386 = vpop.f32.mrb[0].mxu0
        %v387 = vpop.f32.mrb[0].mxu0
        %388 = vdwg.mxu0
        %vm389 = vcmask 64512
        %v390 = vsel %vm389, %v384, -inf
        %391 = vmax.xlane.f32.xlu0 %v390
        %v392 = vpop.xlane.xlu0 %391
        %v393 = vsub.f32 %v384, %v392
        %v394 = vmul.f32 %v393, 1.442695
        %v395 = vpow.pop %v394
        %v396 = vsel %vm389, %v395, 0.0
        %397 = vadd.xlane.f32.xlu0 %v396
        %v398 = vpop.xlane.xlu0 %397
        %v399 = vrcp.pop %v398
        %v400 = vpack.c.bf16 %v395, %v395
        %v402 = vsel %vm389, %v400, 0
        %vm404 = vcmask 1043456
        %v406 = vsel %vm404, %v334, 0
        %408 = vmatprep.subr.bf16.mxu0 0
        %409 = vmatpush1.bf16.msra.mxu0 %v406
        %410 = vmatprep.subr.bf16.mxu0 0
        %411 = vmatpush1.bf16.msra.mxu0 0
        %412 = vmatprep.subr.bf16.mxu0 0
        %413 = vmatpush1.bf16.msra.mxu0 0
        %414 = vmatprep.subr.bf16.mxu0 0
        %415 = vmatpush1.bf16.msra.mxu0 0
        %416 = vmatprep.subr.bf16.mxu0 0
        %417 = vmatpush1.bf16.msra.mxu0 0
        %418 = vmatprep.subr.bf16.mxu0 0
        %419 = vmatpush1.bf16.msra.mxu0 0
        %420 = vmatprep.subr.bf16.mxu0 0
        %421 = vmatpush1.bf16.msra.mxu0 0
        %422 = vmatprep.subr.bf16.mxu0 0
        %423 = vmatpush1.bf16.msra.mxu0 0
        %424 = vmatprep.subr.bf16.mxu0 0
        %425 = vmatpush1.bf16.msra.mxu0 0
        %426 = vmatprep.subr.bf16.mxu0 0
        %427 = vmatpush1.bf16.msra.mxu0 0
        %428 = vmatprep.subr.bf16.mxu0 0
        %429 = vmatpush1.bf16.msra.mxu0 0
        %430 = vmatprep.subr.bf16.mxu0 0
        %431 = vmatpush1.bf16.msra.mxu0 0
        %432 = vmatprep.subr.bf16.mxu0 0
        %433 = vmatpush1.bf16.msra.mxu0 0
        %434 = vmatprep.subr.bf16.mxu0 0
        %435 = vmatpush1.bf16.msra.mxu0 0
        %436 = vmatprep.subr.bf16.mxu0 0
        %437 = vmatpush1.bf16.msra.mxu0 0
        %438 = vmatprep.subr.bf16.mxu0 0
        %439 = vmatpush1.bf16.msra.mxu0 0
        %440 = vmatprep.mubr.bf16.mxu0 0
        %441 = vmatmul.mubr.bf16.gmra.mrb[0].mxu0 %v402
        %v442 = vpop.f32.mrb[0].mxu0
        %v443 = vadd.f32 0.0, %v442
        %v444 = vpop.f32.mrb[0].mxu0
        %v445 = vpop.f32.mrb[0].mxu0
        %v446 = vpop.f32.mrb[0].mxu0
        %447 = vdwg.mxu0
        %v448 = vmul.f32 %v443, %v399
        %v449 = vpack.c.bf16 %v448, %v448
        %v451 = vunpack.c.l.b16 %v332
        %v452 = vpack.c.b16 %v451, %v451
        %453 = vrot.lane.b32.xlu0 %v452, 64
        %v454 = vpop.permute.xlu0 %453
        %v456 = vunpack.c.l.b16 %v333
        %v457 = vpack.c.b16 %v456, %v456
        %458 = vrot.lane.b32.xlu0 %v457, 64
        %v459 = vpop.permute.xlu0 %458
        %v461 = vsel %vm342, %v454, 0
        %v464 = vsel %vm342, %v459, 0
        %466 = vmatprep.subr.bf16.mxu0 0
        %467 = vmatpush1.bf16.xpose.msra.mxu0 %v464
        %468 = vmatprep.subr.bf16.mxu0 0
        %469 = vmatpush1.bf16.xpose.msra.mxu0 0
        %470 = vmatprep.subr.bf16.mxu0 0
        %471 = vmatpush1.bf16.xpose.msra.mxu0 0
        %472 = vmatprep.subr.bf16.mxu0 0
        %473 = vmatpush1.bf16.xpose.msra.mxu0 0
        %474 = vmatprep.subr.bf16.mxu0 0
        %475 = vmatpush1.bf16.xpose.msra.mxu0 0
        %476 = vmatprep.subr.bf16.mxu0 0
        %477 = vmatpush1.bf16.xpose.msra.mxu0 0
        %478 = vmatprep.subr.bf16.mxu0 0
        %479 = vmatpush1.bf16.xpose.msra.mxu0 0
        %480 = vmatprep.subr.bf16.mxu0 0
        %481 = vmatpush1.bf16.xpose.msra.mxu0 0
        %482 = vmatprep.subr.bf16.mxu0 0
        %483 = vmatpush1.bf16.xpose.msra.mxu0 0
        %484 = vmatprep.subr.bf16.mxu0 0
        %485 = vmatpush1.bf16.xpose.msra.mxu0 0
        %486 = vmatprep.subr.bf16.mxu0 0
        %487 = vmatpush1.bf16.xpose.msra.mxu0 0
        %488 = vmatprep.subr.bf16.mxu0 0
        %489 = vmatpush1.bf16.xpose.msra.mxu0 0
        %490 = vmatprep.subr.bf16.mxu0 0
        %491 = vmatpush1.bf16.xpose.msra.mxu0 0
        %492 = vmatprep.subr.bf16.mxu0 0
        %493 = vmatpush1.bf16.xpose.msra.mxu0 0
        %494 = vmatprep.subr.bf16.mxu0 0
        %495 = vmatpush1.bf16.xpose.msra.mxu0 0
        %496 = vmatprep.subr.bf16.mxu0 0
        %497 = vmatpush1.bf16.xpose.msra.mxu0 0
        %498 = vmatprep.mubr.bf16.mxu0 0
        %499 = vmatmul.mubr.bf16.gmra.mrb[0].mxu0 %v461
        %v500 = vpop.f32.mrb[0].mxu0
        %v501 = vadd.f32 %v340, %v500
        %v502 = vpop.f32.mrb[0].mxu0
        %v503 = vpop.f32.mrb[0].mxu0
        %v504 = vpop.f32.mrb[0].mxu0
        %505 = vdwg.mxu0
        %v506 = vsel %vm389, %v501, -inf
        %507 = vmax.xlane.f32.xlu0 %v506
        %v508 = vpop.xlane.xlu0 %507
        %v509 = vsub.f32 %v501, %v508
        %v510 = vmul.f32 %v509, 1.442695
        %v511 = vpow.pop %v510
        %v512 = vsel %vm389, %v511, 0.0
        %513 = vadd.xlane.f32.xlu0 %v512
        %v514 = vpop.xlane.xlu0 %513
        %v515 = vrcp.pop %v514
        %v516 = vpack.c.bf16 %v511, %v511
        %v518 = vunpack.c.l.b16 %v334
        %v519 = vpack.c.b16 %v518, %v518
        %520 = vrot.lane.b32.xlu0 %v519, 64
        %v521 = vpop.permute.xlu0 %520
        %v523 = vsel %vm389, %v516, 0
        %v526 = vsel %vm404, %v521, 0
        %528 = vmatprep.subr.bf16.mxu0 0
        %529 = vmatpush1.bf16.msra.mxu0 %v526
        %530 = vmatprep.subr.bf16.mxu0 0
        %531 = vmatpush1.bf16.msra.mxu0 0
        %532 = vmatprep.subr.bf16.mxu0 0
        %533 = vmatpush1.bf16.msra.mxu0 0
        %534 = vmatprep.subr.bf16.mxu0 0
        %535 = vmatpush1.bf16.msra.mxu0 0
        %536 = vmatprep.subr.bf16.mxu0 0
        %537 = vmatpush1.bf16.msra.mxu0 0
        %538 = vmatprep.subr.bf16.mxu0 0
        %539 = vmatpush1.bf16.msra.mxu0 0
        %540 = vmatprep.subr.bf16.mxu0 0
        %541 = vmatpush1.bf16.msra.mxu0 0
        %542 = vmatprep.subr.bf16.mxu0 0
        %543 = vmatpush1.bf16.msra.mxu0 0
        %544 = vmatprep.subr.bf16.mxu0 0
        %545 = vmatpush1.bf16.msra.mxu0 0
        %546 = vmatprep.subr.bf16.mxu0 0
        %547 = vmatpush1.bf16.msra.mxu0 0
        %548 = vmatprep.subr.bf16.mxu0 0
        %549 = vmatpush1.bf16.msra.mxu0 0
        %550 = vmatprep.subr.bf16.mxu0 0
        %551 = vmatpush1.bf16.msra.mxu0 0
        %552 = vmatprep.subr.bf16.mxu0 0
        %553 = vmatpush1.bf16.msra.mxu0 0
        %554 = vmatprep.subr.bf16.mxu0 0
        %555 = vmatpush1.bf16.msra.mxu0 0
        %556 = vmatprep.subr.bf16.mxu0 0
        %557 = vmatpush1.bf16.msra.mxu0 0
        %558 = vmatprep.subr.bf16.mxu0 0
        %559 = vmatpush1.bf16.msra.mxu0 0
        %560 = vmatprep.mubr.bf16.mxu0 0
        %561 = vmatmul.mubr.bf16.gmra.mrb[0].mxu0 %v523
        %v562 = vpop.f32.mrb[0].mxu0
        %v563 = vadd.f32 0.0, %v562
        %v564 = vpop.f32.mrb[0].mxu0
        %v565 = vpop.f32.mrb[0].mxu0
        %v566 = vpop.f32.mrb[0].mxu0
        %567 = vdwg.mxu0
        %v568 = vmul.f32 %v563, %v515
        %v569 = vpack.c.bf16 %v568, %v568
        %571 = vrot.lane.b32.xlu0 %v569, 64
        %v572 = vpop.permute.xlu0 %571
        %v575 = vsel %vm342, %v449, %v572
        %577 = vst [vmem:[%s328] sm:$0xf] %v575
        %s578 = sand.u32 %s156, 1
        %s579 = scalar_lea.sflag [#allocation4], %s578
        %s580 = sand.u32 %s156, 1
        %s581 = smul.addr %s580, 4
        %s582 = scalar_lea.vmem [#allocation10], %s581
        // Predicated region
        $region53: #{clip_encoder_forward.14} parent=35 // pred_check
          %p583 = pneg %p166
        $region54: #{clip_encoder_forward.14} parent=35 // pred_check_branch
          %585 = sbr.rel (%p583) target = $region56
        $region55: #{clip_encoder_forward.14} parent=35 // pred_region
          %s587 = ssub.s32 64, 64
          %588 = vsyncadd %s579, %s587
          %s589 = smul.addr %s29, 2
          %s590 = sadd.s32 %s30, %s589
          %s591 = smul.addr %s590, 64
          %s592 = scalar_lea.hbm %s4, %s591
          %s594 = sshll.u32 %s582, 4
          %s595 = int_to_ptr.vmem [resolvable:$true] %s594
          %597 = dma.vmem_to_hbm [thread:$0]  %s595, 64, %s592, %s579
        $region56: #{clip_encoder_forward.14} parent=35 // pred_fallthru
          _
      $region36: #{clip_encoder_forward.14} parent=5 // pred_fallthru
        _
      %p598 = scmp.le.s32.totalorder 2, %s20
      // Predicated region
      $region57: #{clip_encoder_forward.14} parent=5 // pred_check
        %p599 = pneg %p598
      $region58: #{clip_encoder_forward.14} parent=5 // pred_check_branch
        %601 = sbr.rel (%p599) target = $region60
      $region59: #{clip_encoder_forward.14} parent=5 // pred_region
        %s602 = ssub.s32 %s20, 2
        // Predicated region
        $region61: #{clip_encoder_forward.14} parent=59 // pred_check
          %p603 = pneg %p172
        $region62: #{clip_encoder_forward.14} parent=59 // pred_check_branch
          %605 = sbr.rel (%p603) target = $region64
        $region63: #{clip_encoder_forward.14} parent=59 // pred_region
          %s606 = sand.u32 %s157, 1
          %s607 = scalar_lea.sflag [#allocation4], %s606
          %s608 = sand.u32 %s157, 1
          %s609 = smul.addr %s608, 4
          %s610 = scalar_lea.vmem [#allocation10], %s609
          %611 = dma.done %s607, 64
        $region64: #{clip_encoder_forward.14} parent=59 // pred_fallthru
          _
      $region60: #{clip_encoder_forward.14} parent=5 // pred_fallthru
        _
    $region6: #{clip_encoder_forward.14} parent=1 // loop_footer
      %s24 = sadd.s32 1, %s20
    $region7: #{clip_encoder_forward.14} parent=1 // loop_footer_branch
      %19 = sbr.rel target = $region3
    $region8: #{clip_encoder_forward.14} parent=1 // loop_exit
      _
    %612 = vsyncpa [#allocation3], 1
    %s613 = scalar_lea.sflag [#allocation3], 1
    %614 = vsyncpa %s613, 1
    %615 = vsyncpa [#allocation6], 1
    %s616 = scalar_lea.sflag [#allocation6], 1
    %617 = vsyncpa %s616, 1
    %618 = vsyncpa [#allocation9], 1
    %619 = vsyncpa [#allocation4], 1
    %s620 = scalar_lea.sflag [#allocation4], 1
    %621 = vsyncpa %s620, 1

// kernel: clip_encoder_forward.13
$region0: #{clip_encoder_forward.13}
  #allocation0 [shape = 'u32[]', space=smem, size = 0x4, offset = 0x4, fixed_abs, tag = 'smem constant byte address 0x4 - core index']
  #allocation1 [shape = 'u32[144,128]{1,0:T(1,128)}', space=vmem, size = 0x12000, scoped, tag = 'internal scratch']
  %s0 = inlined_call_operand.hbm [shape: bf16[16,256], index: 0, kind: input, shape index: {}]
  %s1 = inlined_call_operand.hbm [shape: f32[1,256], index: 1, kind: input, shape index: {}]
  %s2 = inlined_call_operand.hbm [shape: f32[1,256], index: 2, kind: input, shape index: {}]
  %s3 = inlined_call_operand.hbm [shape: bf16[256,768], index: 3, kind: input, shape index: {}]
  %s4 = inlined_call_operand.hbm [shape: f32[1,768], index: 4, kind: input, shape index: {}]
  %s5 = inlined_call_operand.hbm [shape: bf16[16,768], index: 5, kind: output, shape index: {}]
  %s6 = sld [smem:[#allocation0]]
  $region73: #{clip_encoder_forward.13} parent=0
    _
  %s8 = ssub.s32 1, %s6
  %s9 = scalar_select 0, %s8, %s6
  $region1: #{clip_encoder_forward.13} parent=0
    #allocation2 [shape = 'u8[8192]{0}', space=vmem, size = 0x2000, scoped, tag = 'input window, operand 0']
    #allocation3 [shape = 's32[2]{0}', space=sflag, size = 0x8, scoped, tag = 'scoped memory for clip_encoder_forward.13']
    #allocation4 [shape = 's32[2]{0}', space=sflag, size = 0x8, scoped, tag = 'scoped memory for clip_encoder_forward.13']
    #allocation5 [shape = 'u8[1024]{0}', space=vmem, size = 0x400, scoped, tag = 'input window, operand 1, single buffered']
    #allocation6 [shape = 's32[1]{0}', space=sflag, size = 0x4, scoped, tag = 'scoped memory for clip_encoder_forward.13']
    #allocation7 [shape = 'u8[1024]{0}', space=vmem, size = 0x400, scoped, tag = 'input window, operand 2, single buffered']
    #allocation8 [shape = 'u8[393216]{0}', space=vmem, size = 0x60000, scoped, tag = 'input window, operand 3, single buffered']
    #allocation9 [shape = 's32[1]{0}', space=sflag, size = 0x4, scoped, tag = 'scoped memory for clip_encoder_forward.13']
    #allocation10 [shape = 'u8[3072]{0}', space=vmem, size = 0xc00, scoped, tag = 'input window, operand 4, single buffered']
    #allocation11 [shape = 'u8[24576]{0}', space=vmem, size = 0x6000, scoped, tag = 'output window, operand 0']
    %10 = vsyncpa [#allocation3], 0
    %s11 = scalar_lea.sflag [#allocation3], 1
    %12 = vsyncpa %s11, 0
    %13 = vsyncpa [#allocation6], 0
    %14 = vsyncpa [#allocation9], 0
    %15 = vsyncpa [#allocation4], 0
    %s16 = scalar_lea.sflag [#allocation4], 1
    %17 = vsyncpa %s16, 0
    loop: start=0, step=1, limit=4
    $region2: #{clip_encoder_forward.13} parent=1 // loop_pre_header
      _
    $region3: #{clip_encoder_forward.13} parent=1 // loop_header
      %s19 = sphi 0, %s23
      %p20 = scmp.ge.s32.totalorder %s19, 4
      %s29 = sphi 0, %s31
      %s32 = sphi 0, %s29
      %s33 = sphi 0, %s32
      %s49 = sphi 0, %s33
      %s53 = sphi 0, %s53
      %s55 = sphi 0, %s53
      %s56 = sphi 0, %s55
      %s70 = sphi 0, %s56
      %s74 = sphi 0, %s74
      %s76 = sphi 0, %s74
      %s77 = sphi 0, %s76
      %s91 = sphi 0, %s77
      %s95 = sphi 0, %s95
      %s97 = sphi 0, %s95
      %s98 = sphi 0, %s97
      %s112 = sphi 0, %s98
      %s116 = sphi 0, %s116
      %s118 = sphi 0, %s116
      %s119 = sphi 0, %s118
      %s133 = sphi 0, %s119
      %s139 = sphi 0, %s141
      %s142 = sphi 0, %s139
      %s143 = sphi 0, %s142
      %s159 = sphi 0, %s143
    $region4: #{clip_encoder_forward.13} parent=1 // loop_header_branch
      %22 = sbr.rel (%p20) target = $region8
    $region5: #{clip_encoder_forward.13} parent=1 // loop_body
      %s24 = ssub.s32 %s19, 1
      %s25 = ssub.s32 %s19, 2
      %s26 = sadd.s32 %s19, 1
      %s27 = ssub.s32 %s19, %s26
      %p28 = scmp.eq.s32.totalorder %s27, 0
      %s30 = sadd.s32 %s29, 1
      %s31 = scalar_select %p28, %s29, %s30
      %p34 = pneg %p28
      %p35 = scmp.eq.s32.totalorder %s19, 1
      %p36 = por %p34, %p35
      %p37 = scmp.ne.s32.totalorder %s29, %s32
      %p38 = scmp.eq.s32.totalorder %s19, 0
      %p39 = por %p37, %p38
      %p40 = scmp.ne.s32.totalorder %s29, %s32
      %p41 = scmp.eq.s32.totalorder %s24, 1
      %p42 = por %p40, %p41
      %p43 = scmp.ne.s32.totalorder %s32, %s33
      %p44 = scmp.eq.s32.totalorder %s24, 0
      %p45 = por %p43, %p44
      %p46 = scmp.ne.s32.totalorder %s32, %s33
      %p47 = scmp.eq.s32.totalorder %s25, 1
      %p48 = por %p46, %p47
      %p50 = scmp.ne.s32.totalorder %s33, %s49
      %p51 = scmp.eq.s32.totalorder %s25, 0
      %p52 = por %p50, %p51
      %s54 = sadd.s32 %s53, 1
      %p57 = scmp.eq.s32.totalorder %s19, 1
      %p58 = scmp.ne.s32.totalorder %s53, %s55
      %p59 = scmp.eq.s32.totalorder %s19, 0
      %p60 = por %p58, %p59
      %p61 = scmp.ne.s32.totalorder %s53, %s55
      %p62 = scmp.eq.s32.totalorder %s24, 1
      %p63 = por %p61, %p62
      %p64 = scmp.ne.s32.totalorder %s55, %s56
      %p65 = scmp.eq.s32.totalorder %s24, 0
      %p66 = por %p64, %p65
      %p67 = scmp.ne.s32.totalorder %s55, %s56
      %p68 = scmp.eq.s32.totalorder %s25, 1
      %p69 = por %p67, %p68
      %p71 = scmp.ne.s32.totalorder %s56, %s70
      %p72 = scmp.eq.s32.totalorder %s25, 0
      %p73 = por %p71, %p72
      %s75 = sadd.s32 %s74, 1
      %p78 = scmp.eq.s32.totalorder %s19, 1
      %p79 = scmp.ne.s32.totalorder %s74, %s76
      %p80 = scmp.eq.s32.totalorder %s19, 0
      %p81 = por %p79, %p80
      %p82 = scmp.ne.s32.totalorder %s74, %s76
      %p83 = scmp.eq.s32.totalorder %s24, 1
      %p84 = por %p82, %p83
      %p85 = scmp.ne.s32.totalorder %s76, %s77
      %p86 = scmp.eq.s32.totalorder %s24, 0
      %p87 = por %p85, %p86
      %p88 = scmp.ne.s32.totalorder %s76, %s77
      %p89 = scmp.eq.s32.totalorder %s25, 1
      %p90 = por %p88, %p89
      %p92 = scmp.ne.s32.totalorder %s77, %s91
      %p93 = scmp.eq.s32.totalorder %s25, 0
      %p94 = por %p92, %p93
      %s96 = sadd.s32 %s95, 1
      %p99 = scmp.eq.s32.totalorder %s19, 1
      %p100 = scmp.ne.s32.totalorder %s95, %s97
      %p101 = scmp.eq.s32.totalorder %s19, 0
      %p102 = por %p100, %p101
      %p103 = scmp.ne.s32.totalorder %s95, %s97
      %p104 = scmp.eq.s32.totalorder %s24, 1
      %p105 = por %p103, %p104
      %p106 = scmp.ne.s32.totalorder %s97, %s98
      %p107 = scmp.eq.s32.totalorder %s24, 0
      %p108 = por %p106, %p107
      %p109 = scmp.ne.s32.totalorder %s97, %s98
      %p110 = scmp.eq.s32.totalorder %s25, 1
      %p111 = por %p109, %p110
      %p113 = scmp.ne.s32.totalorder %s98, %s112
      %p114 = scmp.eq.s32.totalorder %s25, 0
      %p115 = por %p113, %p114
      %s117 = sadd.s32 %s116, 1
      %p120 = scmp.eq.s32.totalorder %s19, 1
      %p121 = scmp.ne.s32.totalorder %s116, %s118
      %p122 = scmp.eq.s32.totalorder %s19, 0
      %p123 = por %p121, %p122
      %p124 = scmp.ne.s32.totalorder %s116, %s118
      %p125 = scmp.eq.s32.totalorder %s24, 1
      %p126 = por %p124, %p125
      %p127 = scmp.ne.s32.totalorder %s118, %s119
      %p128 = scmp.eq.s32.totalorder %s24, 0
      %p129 = por %p127, %p128
      %p130 = scmp.ne.s32.totalorder %s118, %s119
      %p131 = scmp.eq.s32.totalorder %s25, 1
      %p132 = por %p130, %p131
      %p134 = scmp.ne.s32.totalorder %s119, %s133
      %p135 = scmp.eq.s32.totalorder %s25, 0
      %p136 = por %p134, %p135
      %s137 = ssub.s32 %s19, %s26
      %p138 = scmp.eq.s32.totalorder %s137, 0
      %s140 = sadd.s32 %s139, 1
      %s141 = scalar_select %p138, %s139, %s140
      %p144 = pneg %p138
      %p145 = scmp.eq.s32.totalorder %s19, 1
      %p146 = por %p144, %p145
      %p147 = scmp.ne.s32.totalorder %s139, %s142
      %p148 = scmp.eq.s32.totalorder %s19, 0
      %p149 = por %p147, %p148
      %p150 = scmp.ne.s32.totalorder %s139, %s142
      %p151 = scmp.eq.s32.totalorder %s24, 1
      %p152 = por %p150, %p151
      %p153 = scmp.ne.s32.totalorder %s142, %s143
      %p154 = scmp.eq.s32.totalorder %s24, 0
      %p155 = por %p153, %p154
      %p156 = scmp.ne.s32.totalorder %s142, %s143
      %p157 = scmp.eq.s32.totalorder %s25, 1
      %p158 = por %p156, %p157
      %p160 = scmp.ne.s32.totalorder %s143, %s159
      %p161 = scmp.eq.s32.totalorder %s25, 0
      %p162 = por %p160, %p161
      %p163 = scmp.le.s32.totalorder 1, %s19
      %p164 = scmp.lt.s32.totalorder %s19, 3
      %p165 = pnand %p163, %p164
      %p166 = pneg %p165
      // Predicated region
      $region9: #{clip_encoder_forward.13} parent=5 // pred_check
        _
      $region10: #{clip_encoder_forward.13} parent=5 // pred_check_branch
        %168 = sbr.rel (%p165) target = $region12
      $region11: #{clip_encoder_forward.13} parent=5 // pred_region
        %s169 = ssub.s32 %s19, 1
        // Predicated region
        $region13: #{clip_encoder_forward.13} parent=11 // pred_check
          %p170 = pneg %p66
        $region14: #{clip_encoder_forward.13} parent=11 // pred_check_branch
          %172 = sbr.rel (%p170) target = $region16
        $region15: #{clip_encoder_forward.13} parent=11 // pred_region
          %s174 = ssub.s32 32, 32
          %175 = vsyncadd [#allocation6], %s174
          %s177 = sshll.u32 [#allocation5], 4
          %s178 = int_to_ptr.vmem [resolvable:$true] %s177
          %180 = dma.hbm_to_vmem [thread:$0]  %s1, 32, %s178, [#allocation6]
        $region16: #{clip_encoder_forward.13} parent=11 // pred_fallthru
          _
        // Predicated region
        $region17: #{clip_encoder_forward.13} parent=11 // pred_check
          %p181 = pneg %p87
        $region18: #{clip_encoder_forward.13} parent=11 // pred_check_branch
          %183 = sbr.rel (%p181) target = $region20
        $region19: #{clip_encoder_forward.13} parent=11 // pred_region
          %s185 = ssub.s32 32, 32
          %186 = vsyncadd [#allocation6], %s185
          %s188 = sshll.u32 [#allocation7], 4
          %s189 = int_to_ptr.vmem [resolvable:$true] %s188
          %191 = dma.hbm_to_vmem [thread:$0]  %s2, 32, %s189, [#allocation6]
        $region20: #{clip_encoder_forward.13} parent=11 // pred_fallthru
          _
        // Predicated region
        $region21: #{clip_encoder_forward.13} parent=11 // pred_check
          %p192 = pneg %p108
        $region22: #{clip_encoder_forward.13} parent=11 // pred_check_branch
          %194 = sbr.rel (%p192) target = $region24
        $region23: #{clip_encoder_forward.13} parent=11 // pred_region
          %s196 = ssub.s32 12288, 12288
          %197 = vsyncadd [#allocation9], %s196
          %s198 = sshll.u32 [#allocation8], 4
          %s199 = int_to_ptr.vmem [resolvable:$true] %s198
          %204 = dma.hbm_to_vmem [thread:$0]  %s3, 12288, %s199, [#allocation9], 384, 384, 24
        $region24: #{clip_encoder_forward.13} parent=11 // pred_fallthru
          _
        // Predicated region
        $region25: #{clip_encoder_forward.13} parent=11 // pred_check
          %p205 = pneg %p129
        $region26: #{clip_encoder_forward.13} parent=11 // pred_check_branch
          %207 = sbr.rel (%p205) target = $region28
        $region27: #{clip_encoder_forward.13} parent=11 // pred_region
          %s209 = ssub.s32 96, 96
          %210 = vsyncadd [#allocation9], %s209
          %s212 = sshll.u32 [#allocation10], 4
          %s213 = int_to_ptr.vmem [resolvable:$true] %s212
          %215 = dma.hbm_to_vmem [thread:$0]  %s4, 96, %s213, [#allocation9]
        $region28: #{clip_encoder_forward.13} parent=11 // pred_fallthru
          _
      $region12: #{clip_encoder_forward.13} parent=5 // pred_fallthru
        _
      %p216 = scmp.lt.s32.totalorder %s19, 2
      // Predicated region
      $region29: #{clip_encoder_forward.13} parent=5 // pred_check
        %p217 = pneg %p216
      $region30: #{clip_encoder_forward.13} parent=5 // pred_check_branch
        %219 = sbr.rel (%p217) target = $region32
      $region31: #{clip_encoder_forward.13} parent=5 // pred_region
        // Predicated region
        $region33: #{clip_encoder_forward.13} parent=31 // pred_check
          %p220 = pneg %p39
        $region34: #{clip_encoder_forward.13} parent=31 // pred_check_branch
          %222 = sbr.rel (%p220) target = $region36
        $region35: #{clip_encoder_forward.13} parent=31 // pred_region
          %s223 = sand.u32 %s29, 1
          %s224 = scalar_lea.sflag [#allocation3], %s223
          %s225 = sand.u32 %s29, 1
          %s226 = smul.addr %s225, 8
          %s227 = scalar_lea.vmem [#allocation2], %s226
          %s229 = ssub.s32 128, 128
          %230 = vsyncadd %s224, %s229
          %s231 = smul.addr %s19, 2
          %s232 = smul.addr %s231, 64
          %s233 = scalar_lea.hbm %s0, %s232
          %s235 = sshll.u32 %s227, 4
          %s236 = int_to_ptr.vmem [resolvable:$true] %s235
          %238 = dma.hbm_to_vmem [thread:$0]  %s233, 128, %s236, %s224
        $region36: #{clip_encoder_forward.13} parent=31 // pred_fallthru
          _
      $region32: #{clip_encoder_forward.13} parent=5 // pred_fallthru
        _
      %p239 = scmp.le.s32.totalorder 1, %s19
      %p240 = scmp.lt.s32.totalorder %s19, 3
      %p241 = pnand %p239, %p240
      %p242 = pneg %p241
      // Predicated region
      $region37: #{clip_encoder_forward.13} parent=5 // pred_check
        _
      $region38: #{clip_encoder_forward.13} parent=5 // pred_check_branch
        %244 = sbr.rel (%p241) target = $region40
      $region39: #{clip_encoder_forward.13} parent=5 // pred_region
        %s245 = ssub.s32 %s19, 1
        %s246 = sand.u32 %s32, 1
        %s247 = scalar_lea.sflag [#allocation3], %s246
        %s248 = sand.u32 %s32, 1
        %s249 = smul.addr %s248, 8
        %s250 = scalar_lea.vmem [#allocation2], %s249
        // Predicated region
        $region41: #{clip_encoder_forward.13} parent=39 // pred_check
          %p251 = pneg %p45
        $region42: #{clip_encoder_forward.13} parent=39 // pred_check_branch
          %253 = sbr.rel (%p251) target = $region44
        $region43: #{clip_encoder_forward.13} parent=39 // pred_region
          %254 = dma.done %s247, 128
        $region44: #{clip_encoder_forward.13} parent=39 // pred_fallthru
          _
        // Predicated region
        $region45: #{clip_encoder_forward.13} parent=39 // pred_check
          %p255 = pneg %p66
        $region46: #{clip_encoder_forward.13} parent=39 // pred_check_branch
          %257 = sbr.rel (%p255) target = $region48
        $region47: #{clip_encoder_forward.13} parent=39 // pred_region
          %258 = dma.done [#allocation6], 32
        $region48: #{clip_encoder_forward.13} parent=39 // pred_fallthru
          _
        // Predicated region
        $region49: #{clip_encoder_forward.13} parent=39 // pred_check
          %p259 = pneg %p87
        $region50: #{clip_encoder_forward.13} parent=39 // pred_check_branch
          %261 = sbr.rel (%p259) target = $region52
        $region51: #{clip_encoder_forward.13} parent=39 // pred_region
          %262 = dma.done [#allocation6], 32
        $region52: #{clip_encoder_forward.13} parent=39 // pred_fallthru
          _
        // Predicated region
        $region53: #{clip_encoder_forward.13} parent=39 // pred_check
          %p263 = pneg %p108
        $region54: #{clip_encoder_forward.13} parent=39 // pred_check_branch
          %265 = sbr.rel (%p263) target = $region56
        $region55: #{clip_encoder_forward.13} parent=39 // pred_region
          %266 = dma.done [#allocation9], 12288
        $region56: #{clip_encoder_forward.13} parent=39 // pred_fallthru
          _
        // Predicated region
        $region57: #{clip_encoder_forward.13} parent=39 // pred_check
          %p267 = pneg %p129
        $region58: #{clip_encoder_forward.13} parent=39 // pred_check_branch
          %269 = sbr.rel (%p267) target = $region60
        $region59: #{clip_encoder_forward.13} parent=39 // pred_region
          %270 = dma.done [#allocation9], 96
        $region60: #{clip_encoder_forward.13} parent=39 // pred_fallthru
          _
        %s271 = sand.u32 %s32, 1
        %s272 = scalar_lea.sflag [#allocation3], %s271
        %s273 = sand.u32 %s32, 1
        %s274 = smul.addr %s273, 8
        %s275 = scalar_lea.vmem [#allocation2], %s274
        %p276 = pneg %p45
        %p277 = pneg %p42
        %p278 = pneg %p66
        %p279 = pneg %p63
        %p280 = pneg %p87
        %p281 = pneg %p84
        %p282 = pneg %p108
        %p283 = pneg %p105
        %p284 = pneg %p129
        %p285 = pneg %p126
        %p286 = pneg %p155
        %p287 = pneg %p152
        %s288 = sand.u32 %s142, 1
        %s289 = scalar_lea.sflag [#allocation4], %s288
        %s290 = sand.u32 %s142, 1
        %s291 = smul.addr %s290, 24
        %s292 = scalar_lea.vmem [#allocation11], %s291
        %v293 = vld [vmem:[%s250] sm:$0xff]
        %v294 = vunpack.c.l.bf16 %v293
        %v295 = vunpack.c.h.bf16 %v293
        %v296 = vld [vmem:[#allocation5] sm:$0x3]
        %v297 = vld [vmem:[#allocation7] sm:$0x3]
        %v298 = vadd.f32 %v294, %v295
        %299 = vadd.xlane.f32.xlu0 %v298
        %v300 = vpop.xlane.xlu0 %299
        %v301 = vrcp.pop 256.0
        %v302 = vmul.f32 %v300, %v301
        %v303 = vsub.f32 %v294, %v302
        %v304 = vsub.f32 %v295, %v302
        %v305 = vmul.f32 %v303, %v303
        %v306 = vmul.f32 %v304, %v304
        %v307 = vadd.f32 %v305, %v306
        %308 = vadd.xlane.f32.xlu0 %v307
        %v309 = vpop.xlane.xlu0 %308
        %v310 = vmul.f32 %v309, %v301
        %v311 = vadd.f32 %v310, 1e-05
        %v312 = vrsqrt.pop %v311
        %v313 = vmul.f32 %v303, %v312
        %v314 = vmul.f32 %v304, %v312
        %v316 = vlaneseq
        %v317 = vshrl.u32 %v316, 7
        %v318 = vsub.s32 0, %v317
        %v319 = vrot.slane %v296, %v318
        %v320 = vlaneseq
        %v321 = vshrl.u32 %v320, 7
        %v322 = vsub.s32 1, %v321
        %v323 = vrot.slane %v296, %v322
        %v326 = vmul.f32 %v313, %v319
        %v327 = vmul.f32 %v314, %v323
        %v329 = vlaneseq
        %v330 = vshrl.u32 %v329, 7
        %v331 = vsub.s32 0, %v330
        %v332 = vrot.slane %v297, %v331
        %v333 = vlaneseq
        %v334 = vshrl.u32 %v333, 7
        %v335 = vsub.s32 1, %v334
        %v336 = vrot.slane %v297, %v335
        %v339 = vadd.f32 %v326, %v332
        %v340 = vadd.f32 %v327, %v336
        %v341 = vpack.c.bf16 %v339, %v339
        %v342 = vpack.c.bf16 %v340, %v340
        %v343 = vld [vmem:[#allocation8] sm:$0xff]
        %v344 = vld [vmem:[#allocation8 + $0x8] sm:$0xff]
        %v345 = vld [vmem:[#allocation8 + $0x10] sm:$0xff]
        %v346 = vld [vmem:[#allocation8 + $0x18] sm:$0xff]
        %v347 = vld [vmem:[#allocation8 + $0x20] sm:$0xff]
        %v348 = vld [vmem:[#allocation8 + $0x28] sm:$0xff]
        %v349 = vld [vmem:[#allocation8 + $0x30] sm:$0xff]
        %v350 = vld [vmem:[#allocation8 + $0x38] sm:$0xff]
        %v351 = vld [vmem:[#allocation8 + $0x40] sm:$0xff]
        %v352 = vld [vmem:[#allocation8 + $0x48] sm:$0xff]
        %v353 = vld [vmem:[#allocation8 + $0x50] sm:$0xff]
        %v354 = vld [vmem:[#allocation8 + $0x58] sm:$0xff]
        %v355 = vld [vmem:[#allocation8 + $0x60] sm:$0xff]
        %v356 = vld [vmem:[#allocation8 + $0x68] sm:$0xff]
        %v357 = vld [vmem:[#allocation8 + $0x70] sm:$0xff]
        %v358 = vld [vmem:[#allocation8 + $0x78] sm:$0xff]
        %v359 = vld [vmem:[#allocation8 + $0x80] sm:$0xff]
        %v360 = vld [vmem:[#allocation8 + $0x88] sm:$0xff]
        %v361 = vld [vmem:[#allocation8 + $0x90] sm:$0xff]
        %v362 = vld [vmem:[#allocation8 + $0x98] sm:$0xff]
        %v363 = vld [vmem:[#allocation8 + $0xa0] sm:$0xff]
        %v364 = vld [vmem:[#allocation8 + $0xa8] sm:$0xff]
        %v365 = vld [vmem:[#allocation8 + $0xb0] sm:$0xff]
        %v366 = vld [vmem:[#allocation8 + $0xb8] sm:$0xff]
        %v367 = vld [vmem:[#allocation8 + $0xc0] sm:$0xff]
        %v368 = vld [vmem:[#allocation8 + $0xc8] sm:$0xff]
        %v369 = vld [vmem:[#allocation8 + $0xd0] sm:$0xff]
        %v370 = vld [vmem:[#allocation8 + $0xd8] sm:$0xff]
        %v371 = vld [vmem:[#allocation8 + $0xe0] sm:$0xff]
        %v372 = vld [vmem:[#allocation8 + $0xe8] sm:$0xff]
        %v373 = vld [vmem:[#allocation8 + $0xf0] sm:$0xff]
        %v374 = vld [vmem:[#allocation8 + $0xf8] sm:$0xff]
        %v375 = vld [vmem:[#allocation8 + $0x100] sm:$0xff]
        %v376 = vld [vmem:[#allocation8 + $0x108] sm:$0xff]
        %v377 = vld [vmem:[#allocation8 + $0x110] sm:$0xff]
        %v378 = vld [vmem:[#allocation8 + $0x118] sm:$0xff]
        %v379 = vld [vmem:[#allocation8 + $0x120] sm:$0xff]
        %v380 = vld [vmem:[#allocation8 + $0x128] sm:$0xff]
        %v381 = vld [vmem:[#allocation8 + $0x130] sm:$0xff]
        %v382 = vld [vmem:[#allocation8 + $0x138] sm:$0xff]
        %v383 = vld [vmem:[#allocation8 + $0x140] sm:$0xff]
        %v384 = vld [vmem:[#allocation8 + $0x148] sm:$0xff]
        %v385 = vld [vmem:[#allocation8 + $0x150] sm:$0xff]
        %v386 = vld [vmem:[#allocation8 + $0x158] sm:$0xff]
        %v387 = vld [vmem:[#allocation8 + $0x160] sm:$0xff]
        %v388 = vld [vmem:[#allocation8 + $0x168] sm:$0xff]
        %v389 = vld [vmem:[#allocation8 + $0x170] sm:$0xff]
        %v390 = vld [vmem:[#allocation8 + $0x178] sm:$0xff]
        %v391 = vld [vmem:[#allocation8 + $0x180] sm:$0xff]
        %v392 = vld [vmem:[#allocation8 + $0x188] sm:$0xff]
        %v393 = vld [vmem:[#allocation8 + $0x190] sm:$0xff]
        %v394 = vld [vmem:[#allocation8 + $0x198] sm:$0xff]
        %v395 = vld [vmem:[#allocation8 + $0x1a0] sm:$0xff]
        %v396 = vld [vmem:[#allocation8 + $0x1a8] sm:$0xff]
        %v397 = vld [vmem:[#allocation8 + $0x1b0] sm:$0xff]
        %v398 = vld [vmem:[#allocation8 + $0x1b8] sm:$0xff]
        %v399 = vld [vmem:[#allocation8 + $0x1c0] sm:$0xff]
        %v400 = vld [vmem:[#allocation8 + $0x1c8] sm:$0xff]
        %v401 = vld [vmem:[#allocation8 + $0x1d0] sm:$0xff]
        %v402 = vld [vmem:[#allocation8 + $0x1d8] sm:$0xff]
        %v403 = vld [vmem:[#allocation8 + $0x1e0] sm:$0xff]
        %v404 = vld [vmem:[#allocation8 + $0x1e8] sm:$0xff]
        %v405 = vld [vmem:[#allocation8 + $0x1f0] sm:$0xff]
        %v406 = vld [vmem:[#allocation8 + $0x1f8] sm:$0xff]
        %v407 = vld [vmem:[#allocation8 + $0x200] sm:$0xff]
        %v408 = vld [vmem:[#allocation8 + $0x208] sm:$0xff]
        %v409 = vld [vmem:[#allocation8 + $0x210] sm:$0xff]
        %v410 = vld [vmem:[#allocation8 + $0x218] sm:$0xff]
        %v411 = vld [vmem:[#allocation8 + $0x220] sm:$0xff]
        %v412 = vld [vmem:[#allocation8 + $0x228] sm:$0xff]
        %v413 = vld [vmem:[#allocation8 + $0x230] sm:$0xff]
        %v414 = vld [vmem:[#allocation8 + $0x238] sm:$0xff]
        %v415 = vld [vmem:[#allocation8 + $0x240] sm:$0xff]
        %v416 = vld [vmem:[#allocation8 + $0x248] sm:$0xff]
        %v417 = vld [vmem:[#allocation8 + $0x250] sm:$0xff]
        %v418 = vld [vmem:[#allocation8 + $0x258] sm:$0xff]
        %v419 = vld [vmem:[#allocation8 + $0x260] sm:$0xff]
        %v420 = vld [vmem:[#allocation8 + $0x268] sm:$0xff]
        %v421 = vld [vmem:[#allocation8 + $0x270] sm:$0xff]
        %v422 = vld [vmem:[#allocation8 + $0x278] sm:$0xff]
        %v423 = vld [vmem:[#allocation8 + $0x280] sm:$0xff]
        %v424 = vld [vmem:[#allocation8 + $0x288] sm:$0xff]
        %v425 = vld [vmem:[#allocation8 + $0x290] sm:$0xff]
        %v426 = vld [vmem:[#allocation8 + $0x298] sm:$0xff]
        %v427 = vld [vmem:[#allocation8 + $0x2a0] sm:$0xff]
        %v428 = vld [vmem:[#allocation8 + $0x2a8] sm:$0xff]
        %v429 = vld [vmem:[#allocation8 + $0x2b0] sm:$0xff]
        %v430 = vld [vmem:[#allocation8 + $0x2b8] sm:$0xff]
        %v431 = vld [vmem:[#allocation8 + $0x2c0] sm:$0xff]
        %v432 = vld [vmem:[#allocation8 + $0x2c8] sm:$0xff]
        %v433 = vld [vmem:[#allocation8 + $0x2d0] sm:$0xff]
        %v434 = vld [vmem:[#allocation8 + $0x2d8] sm:$0xff]
        %v435 = vld [vmem:[#allocation8 + $0x2e0] sm:$0xff]
        %v436 = vld [vmem:[#allocation8 + $0x2e8] sm:$0xff]
        %v437 = vld [vmem:[#allocation8 + $0x2f0] sm:$0xff]
        %v438 = vld [vmem:[#allocation8 + $0x2f8] sm:$0xff]
        %v439 = vld [vmem:[#allocation10] sm:$0x3f]
        %v441 = vlaneseq
        %v442 = vshrl.u32 %v441, 7
        %v443 = vsub.s32 0, %v442
        %v444 = vrot.slane %v439, %v443
        %v445 = vlaneseq
        %v446 = vshrl.u32 %v445, 7
        %v447 = vsub.s32 1, %v446
        %v448 = vrot.slane %v439, %v447
        %v449 = vlaneseq
        %v450 = vshrl.u32 %v449, 7
        %v451 = vsub.s32 2, %v450
        %v452 = vrot.slane %v439, %v451
        %v453 = vlaneseq
        %v454 = vshrl.u32 %v453, 7
        %v455 = vsub.s32 3, %v454
        %v456 = vrot.slane %v439, %v455
        %v457 = vlaneseq
        %v458 = vshrl.u32 %v457, 7
        %v459 = vsub.s32 4, %v458
        %v460 = vrot.slane %v439, %v459
        %v461 = vlaneseq
        %v462 = vshrl.u32 %v461, 7
        %v463 = vsub.s32 5, %v462
        %v464 = vrot.slane %v439, %v463
        %v567 = vunpack.c.l.b16 %v343
        %v568 = vunpack.c.h.b16 %v343
        %v569 = vunpack.c.l.b16 %v344
        %v570 = vunpack.c.h.b16 %v344
        %v571 = vunpack.c.l.b16 %v345
        %v572 = vunpack.c.h.b16 %v345
        %v573 = vunpack.c.l.b16 %v346
        %v574 = vunpack.c.h.b16 %v346
        %v575 = vunpack.c.l.b16 %v347
        %v576 = vunpack.c.h.b16 %v347
        %v577 = vunpack.c.l.b16 %v348
        %v578 = vunpack.c.h.b16 %v348
        %v579 = vunpack.c.l.b16 %v349
        %v580 = vunpack.c.h.b16 %v349
        %v581 = vunpack.c.l.b16 %v350
        %v582 = vunpack.c.h.b16 %v350
        %v583 = vunpack.c.l.b16 %v351
        %v584 = vunpack.c.h.b16 %v351
        %v585 = vunpack.c.l.b16 %v352
        %v586 = vunpack.c.h.b16 %v352
        %v587 = vunpack.c.l.b16 %v353
        %v588 = vunpack.c.h.b16 %v353
        %v589 = vunpack.c.l.b16 %v354
        %v590 = vunpack.c.h.b16 %v354
        %v591 = vunpack.c.l.b16 %v355
        %v592 = vunpack.c.h.b16 %v355
        %v593 = vunpack.c.l.b16 %v356
        %v594 = vunpack.c.h.b16 %v356
        %v595 = vunpack.c.l.b16 %v357
        %v596 = vunpack.c.h.b16 %v357
        %v597 = vunpack.c.l.b16 %v358
        %v598 = vunpack.c.h.b16 %v358
        %v599 = vunpack.c.l.b16 %v359
        %v600 = vunpack.c.h.b16 %v359
        %v601 = vunpack.c.l.b16 %v360
        %v602 = vunpack.c.h.b16 %v360
        %v603 = vunpack.c.l.b16 %v361
        %v604 = vunpack.c.h.b16 %v361
        %v605 = vunpack.c.l.b16 %v362
        %v606 = vunpack.c.h.b16 %v362
        %v607 = vunpack.c.l.b16 %v363
        %v608 = vunpack.c.h.b16 %v363
        %v609 = vunpack.c.l.b16 %v364
        %v610 = vunpack.c.h.b16 %v364
        %v611 = vunpack.c.l.b16 %v365
        %v612 = vunpack.c.h.b16 %v365
        %v613 = vunpack.c.l.b16 %v366
        %v614 = vunpack.c.h.b16 %v366
        %v615 = vunpack.c.l.b16 %v367
        %v616 = vunpack.c.h.b16 %v367
        %v617 = vunpack.c.l.b16 %v368
        %v618 = vunpack.c.h.b16 %v368
        %v619 = vunpack.c.l.b16 %v369
        %v620 = vunpack.c.h.b16 %v369
        %v621 = vunpack.c.l.b16 %v370
        %v622 = vunpack.c.h.b16 %v370
        %v623 = vunpack.c.l.b16 %v371
        %v624 = vunpack.c.h.b16 %v371
        %v625 = vunpack.c.l.b16 %v372
        %v626 = vunpack.c.h.b16 %v372
        %v627 = vunpack.c.l.b16 %v373
        %v628 = vunpack.c.h.b16 %v373
        %v629 = vunpack.c.l.b16 %v374
        %v630 = vunpack.c.h.b16 %v374
        %v631 = vunpack.c.l.b16 %v375
        %v632 = vunpack.c.h.b16 %v375
        %v633 = vunpack.c.l.b16 %v376
        %v634 = vunpack.c.h.b16 %v376
        %v635 = vunpack.c.l.b16 %v377
        %v636 = vunpack.c.h.b16 %v377
        %v637 = vunpack.c.l.b16 %v378
        %v638 = vunpack.c.h.b16 %v378
        %v639 = vunpack.c.l.b16 %v379
        %v640 = vunpack.c.h.b16 %v379
        %v641 = vunpack.c.l.b16 %v380
        %v642 = vunpack.c.h.b16 %v380
        %v643 = vunpack.c.l.b16 %v381
        %v644 = vunpack.c.h.b16 %v381
        %v645 = vunpack.c.l.b16 %v382
        %v646 = vunpack.c.h.b16 %v382
        %v647 = vunpack.c.l.b16 %v383
        %v648 = vunpack.c.h.b16 %v383
        %v649 = vunpack.c.l.b16 %v384
        %v650 = vunpack.c.h.b16 %v384
        %v651 = vunpack.c.l.b16 %v385
        %v652 = vunpack.c.h.b16 %v385
        %v653 = vunpack.c.l.b16 %v386
        %v654 = vunpack.c.h.b16 %v386
        %v655 = vunpack.c.l.b16 %v387
        %v656 = vunpack.c.h.b16 %v387
        %v657 = vunpack.c.l.b16 %v388
        %v658 = vunpack.c.h.b16 %v388
        %v659 = vunpack.c.l.b16 %v389
        %v660 = vunpack.c.h.b16 %v389
        %v661 = vunpack.c.l.b16 %v390
        %v662 = vunpack.c.h.b16 %v390
        %v663 = vunpack.c.l.b16 %v391
        %v664 = vunpack.c.h.b16 %v391
        %v665 = vunpack.c.l.b16 %v392
        %v666 = vunpack.c.h.b16 %v392
        %v667 = vunpack.c.l.b16 %v393
        %v668 = vunpack.c.h.b16 %v393
        %v669 = vunpack.c.l.b16 %v394
        %v670 = vunpack.c.h.b16 %v394
        %v671 = vunpack.c.l.b16 %v395
        %v672 = vunpack.c.h.b16 %v395
        %v673 = vunpack.c.l.b16 %v396
        %v674 = vunpack.c.h.b16 %v396
        %v675 = vunpack.c.l.b16 %v397
        %v676 = vunpack.c.h.b16 %v397
        %v677 = vunpack.c.l.b16 %v398
        %v678 = vunpack.c.h.b16 %v398
        %v679 = vunpack.c.l.b16 %v399
        %v680 = vunpack.c.h.b16 %v399
        %v681 = vunpack.c.l.b16 %v400
        %v682 = vunpack.c.h.b16 %v400
        %v683 = vunpack.c.l.b16 %v401
        %v684 = vunpack.c.h.b16 %v401
        %v685 = vunpack.c.l.b16 %v402
        %v686 = vunpack.c.h.b16 %v402
        %v687 = vunpack.c.l.b16 %v403
        %v688 = vunpack.c.h.b16 %v403
        %v689 = vunpack.c.l.b16 %v404
        %v690 = vunpack.c.h.b16 %v404
        %v691 = vunpack.c.l.b16 %v405
        %v692 = vunpack.c.h.b16 %v405
        %v693 = vunpack.c.l.b16 %v406
        %v694 = vunpack.c.h.b16 %v406
        %v695 = vunpack.c.l.b16 %v407
        %v696 = vunpack.c.h.b16 %v407
        %v697 = vunpack.c.l.b16 %v408
        %v698 = vunpack.c.h.b16 %v408
        %v699 = vunpack.c.l.b16 %v409
        %v700 = vunpack.c.h.b16 %v409
        %v701 = vunpack.c.l.b16 %v410
        %v702 = vunpack.c.h.b16 %v410
        %v703 = vunpack.c.l.b16 %v411
        %v704 = vunpack.c.h.b16 %v411
        %v705 = vunpack.c.l.b16 %v412
        %v706 = vunpack.c.h.b16 %v412
        %v707 = vunpack.c.l.b16 %v413
        %v708 = vunpack.c.h.b16 %v413
        %v709 = vunpack.c.l.b16 %v414
        %v710 = vunpack.c.h.b16 %v414
        %v711 = vunpack.c.l.b16 %v415
        %v712 = vunpack.c.h.b16 %v415
        %v713 = vunpack.c.l.b16 %v416
        %v714 = vunpack.c.h.b16 %v416
        %v715 = vunpack.c.l.b16 %v417
        %v716 = vunpack.c.h.b16 %v417
        %v717 = vunpack.c.l.b16 %v418
        %v718 = vunpack.c.h.b16 %v418
        %v719 = vunpack.c.l.b16 %v419
        %v720 = vunpack.c.h.b16 %v419
        %v721 = vunpack.c.l.b16 %v420
        %v722 = vunpack.c.h.b16 %v420
        %v723 = vunpack.c.l.b16 %v421
        %v724 = vunpack.c.h.b16 %v421
        %v725 = vunpack.c.l.b16 %v422
        %v726 = vunpack.c.h.b16 %v422
        %v727 = vunpack.c.l.b16 %v423
        %v728 = vunpack.c.h.b16 %v423
        %v729 = vunpack.c.l.b16 %v424
        %v730 = vunpack.c.h.b16 %v424
        %v731 = vunpack.c.l.b16 %v425
        %v732 = vunpack.c.h.b16 %v425
        %v733 = vunpack.c.l.b16 %v426
        %v734 = vunpack.c.h.b16 %v426
        %v735 = vunpack.c.l.b16 %v427
        %v736 = vunpack.c.h.b16 %v427
        %v737 = vunpack.c.l.b16 %v428
        %v738 = vunpack.c.h.b16 %v428
        %v739 = vunpack.c.l.b16 %v429
        %v740 = vunpack.c.h.b16 %v429
        %v741 = vunpack.c.l.b16 %v430
        %v742 = vunpack.c.h.b16 %v430
        %v743 = vunpack.c.l.b16 %v431
        %v744 = vunpack.c.h.b16 %v431
        %v745 = vunpack.c.l.b16 %v432
        %v746 = vunpack.c.h.b16 %v432
        %v747 = vunpack.c.l.b16 %v433
        %v748 = vunpack.c.h.b16 %v433
        %v749 = vunpack.c.l.b16 %v434
        %v750 = vunpack.c.h.b16 %v434
        %v751 = vunpack.c.l.b16 %v435
        %v752 = vunpack.c.h.b16 %v435
        %v753 = vunpack.c.l.b16 %v436
        %v754 = vunpack.c.h.b16 %v436
        %v755 = vunpack.c.l.b16 %v437
        %v756 = vunpack.c.h.b16 %v437
        %v757 = vunpack.c.l.b16 %v438
        %v758 = vunpack.c.h.b16 %v438
        %v759 = vpack.c.b16 %v573, %v567
        %v760 = vpack.c.b16 %v574, %v568
        %v761 = vpack.c.b16 %v575, %v569
        %v762 = vpack.c.b16 %v576, %v570
        %v763 = vpack.c.b16 %v577, %v571
        %v764 = vpack.c.b16 %v578, %v572
        %v765 = vpack.c.b16 %v585, %v579
        %v766 = vpack.c.b16 %v586, %v580
        %v767 = vpack.c.b16 %v587, %v581
        %v768 = vpack.c.b16 %v588, %v582
        %v769 = vpack.c.b16 %v589, %v583
        %v770 = vpack.c.b16 %v590, %v584
        %v771 = vpack.c.b16 %v597, %v591
        %v772 = vpack.c.b16 %v598, %v592
        %v773 = vpack.c.b16 %v599, %v593
        %v774 = vpack.c.b16 %v600, %v594
        %v775 = vpack.c.b16 %v601, %v595
        %v776 = vpack.c.b16 %v602, %v596
        %v777 = vpack.c.b16 %v609, %v603
        %v778 = vpack.c.b16 %v610, %v604
        %v779 = vpack.c.b16 %v611, %v605
        %v780 = vpack.c.b16 %v612, %v606
        %v781 = vpack.c.b16 %v613, %v607
        %v782 = vpack.c.b16 %v614, %v608
        %v783 = vpack.c.b16 %v621, %v615
        %v784 = vpack.c.b16 %v622, %v616
        %v785 = vpack.c.b16 %v623, %v617
        %v786 = vpack.c.b16 %v624, %v618
        %v787 = vpack.c.b16 %v625, %v619
        %v788 = vpack.c.b16 %v626, %v620
        %v789 = vpack.c.b16 %v633, %v627
        %v790 = vpack.c.b16 %v634, %v628
        %v791 = vpack.c.b16 %v635, %v629
        %v792 = vpack.c.b16 %v636, %v630
        %v793 = vpack.c.b16 %v637, %v631
        %v794 = vpack.c.b16 %v638, %v632
        %v795 = vpack.c.b16 %v645, %v639
        %v796 = vpack.c.b16 %v646, %v640
        %v797 = vpack.c.b16 %v647, %v641
        %v798 = vpack.c.b16 %v648, %v642
        %v799 = vpack.c.b16 %v649, %v643
        %v800 = vpack.c.b16 %v650, %v644
        %v801 = vpack.c.b16 %v657, %v651
        %v802 = vpack.c.b16 %v658, %v652
        %v803 = vpack.c.b16 %v659, %v653
        %v804 = vpack.c.b16 %v660, %v654
        %v805 = vpack.c.b16 %v661, %v655
        %v806 = vpack.c.b16 %v662, %v656
        %v807 = vpack.c.b16 %v669, %v663
        %v808 = vpack.c.b16 %v670, %v664
        %v809 = vpack.c.b16 %v671, %v665
        %v810 = vpack.c.b16 %v672, %v666
        %v811 = vpack.c.b16 %v673, %v667
        %v812 = vpack.c.b16 %v674, %v668
        %v813 = vpack.c.b16 %v681, %v675
        %v814 = vpack.c.b16 %v682, %v676
        %v815 = vpack.c.b16 %v683, %v677
        %v816 = vpack.c.b16 %v684, %v678
        %v817 = vpack.c.b16 %v685, %v679
        %v818 = vpack.c.b16 %v686, %v680
        %v819 = vpack.c.b16 %v693, %v687
        %v820 = vpack.c.b16 %v694, %v688
        %v821 = vpack.c.b16 %v695, %v689
        %v822 = vpack.c.b16 %v696, %v690
        %v823 = vpack.c.b16 %v697, %v691
        %v824 = vpack.c.b16 %v698, %v692
        %v825 = vpack.c.b16 %v705, %v699
        %v826 = vpack.c.b16 %v706, %v700
        %v827 = vpack.c.b16 %v707, %v701
        %v828 = vpack.c.b16 %v708, %v702
        %v829 = vpack.c.b16 %v709, %v703
        %v830 = vpack.c.b16 %v710, %v704
        %v831 = vpack.c.b16 %v717, %v711
        %v832 = vpack.c.b16 %v718, %v712
        %v833 = vpack.c.b16 %v719, %v713
        %v834 = vpack.c.b16 %v720, %v714
        %v835 = vpack.c.b16 %v721, %v715
        %v836 = vpack.c.b16 %v722, %v716
        %v837 = vpack.c.b16 %v729, %v723
        %v838 = vpack.c.b16 %v730, %v724
        %v839 = vpack.c.b16 %v731, %v725
        %v840 = vpack.c.b16 %v732, %v726
        %v841 = vpack.c.b16 %v733, %v727
        %v842 = vpack.c.b16 %v734, %v728
        %v843 = vpack.c.b16 %v741, %v735
        %v844 = vpack.c.b16 %v742, %v736
        %v845 = vpack.c.b16 %v743, %v737
        %v846 = vpack.c.b16 %v744, %v738
        %v847 = vpack.c.b16 %v745, %v739
        %v848 = vpack.c.b16 %v746, %v740
        %v849 = vpack.c.b16 %v753, %v747
        %v850 = vpack.c.b16 %v754, %v748
        %v851 = vpack.c.b16 %v755, %v749
        %v852 = vpack.c.b16 %v756, %v750
        %v853 = vpack.c.b16 %v757, %v751
        %v854 = vpack.c.b16 %v758, %v752
        %951 = vmatprep.subr.bf16.mxu0 %v760
        %952 = vmatpush1.bf16.msra.mxu0 %v759
        %953 = vmatprep.subr.bf16.mxu0 %v766
        %954 = vmatpush1.bf16.msra.mxu0 %v765
        %955 = vmatprep.subr.bf16.mxu0 %v772
        %956 = vmatpush1.bf16.msra.mxu0 %v771
        %957 = vmatprep.subr.bf16.mxu0 %v778
        %958 = vmatpush1.bf16.msra.mxu0 %v777
        %959 = vmatprep.subr.bf16.mxu0 %v784
        %960 = vmatpush1.bf16.msra.mxu0 %v783
        %961 = vmatprep.subr.bf16.mxu0 %v790
        %962 = vmatpush1.bf16.msra.mxu0 %v789
        %963 = vmatprep.subr.bf16.mxu0 %v796
        %964 = vmatpush1.bf16.msra.mxu0 %v795
        %965 = vmatprep.subr.bf16.mxu0 %v802
        %966 = vmatpush1.bf16.msra.mxu0 %v801
        %967 = vmatprep.subr.bf16.mxu0 %v808
        %968 = vmatpush1.bf16.msra.mxu0 %v807
        %969 = vmatprep.subr.bf16.mxu0 %v814
        %970 = vmatpush1.bf16.msra.mxu0 %v813
        %971 = vmatprep.subr.bf16.mxu0 %v820
        %972 = vmatpush1.bf16.msra.mxu0 %v819
        %973 = vmatprep.subr.bf16.mxu0 %v826
        %974 = vmatpush1.bf16.msra.mxu0 %v825
        %975 = vmatprep.subr.bf16.mxu0 %v832
        %976 = vmatpush1.bf16.msra.mxu0 %v831
        %977 = vmatprep.subr.bf16.mxu0 %v838
        %978 = vmatpush1.bf16.msra.mxu0 %v837
        %979 = vmatprep.subr.bf16.mxu0 %v844
        %980 = vmatpush1.bf16.msra.mxu0 %v843
        %981 = vmatprep.subr.bf16.mxu0 %v850
        %982 = vmatpush1.bf16.msra.mxu0 %v849
        %983 = vmatprep.mubr.bf16.mxu0 %v342
        %984 = vmatmul.mubr.bf16.gmra.mrb[0].mxu0 %v341
        %v985 = vpop.f32.mrb[0].mxu0
        %v986 = vadd.f32 %v444, %v985
        %v987 = vpop.f32.mrb[0].mxu0
        %v988 = vadd.f32 %v448, %v987
        %v989 = vpop.f32.mrb[0].mxu0
        %v990 = vpop.f32.mrb[0].mxu0
        %991 = vdwg.mxu0
        %992 = vmatprep.subr.bf16.mxu0 %v762
        %993 = vmatpush1.bf16.msra.mxu0 %v761
        %994 = vmatprep.subr.bf16.mxu0 %v768
        %995 = vmatpush1.bf16.msra.mxu0 %v767
        %996 = vmatprep.subr.bf16.mxu0 %v774
        %997 = vmatpush1.bf16.msra.mxu0 %v773
        %998 = vmatprep.subr.bf16.mxu0 %v780
        %999 = vmatpush1.bf16.msra.mxu0 %v779
        %1000 = vmatprep.subr.bf16.mxu0 %v786
        %1001 = vmatpush1.bf16.msra.mxu0 %v785
        %1002 = vmatprep.subr.bf16.mxu0 %v792
        %1003 = vmatpush1.bf16.msra.mxu0 %v791
        %1004 = vmatprep.subr.bf16.mxu0 %v798
        %1005 = vmatpush1.bf16.msra.mxu0 %v797
        %1006 = vmatprep.subr.bf16.mxu0 %v804
        %1007 = vmatpush1.bf16.msra.mxu0 %v803
        %1008 = vmatprep.subr.bf16.mxu0 %v810
        %1009 = vmatpush1.bf16.msra.mxu0 %v809
        %1010 = vmatprep.subr.bf16.mxu0 %v816
        %1011 = vmatpush1.bf16.msra.mxu0 %v815
        %1012 = vmatprep.subr.bf16.mxu0 %v822
        %1013 = vmatpush1.bf16.msra.mxu0 %v821
        %1014 = vmatprep.subr.bf16.mxu0 %v828
        %1015 = vmatpush1.bf16.msra.mxu0 %v827
        %1016 = vmatprep.subr.bf16.mxu0 %v834
        %1017 = vmatpush1.bf16.msra.mxu0 %v833
        %1018 = vmatprep.subr.bf16.mxu0 %v840
        %1019 = vmatpush1.bf16.msra.mxu0 %v839
        %1020 = vmatprep.subr.bf16.mxu0 %v846
        %1021 = vmatpush1.bf16.msra.mxu0 %v845
        %1022 = vmatprep.subr.bf16.mxu0 %v852
        %1023 = vmatpush1.bf16.msra.mxu0 %v851
        %1024 = vmatprep.mubr.bf16.mxu0 %v342
        %1025 = vmatmul.mubr.bf16.gmra.mrb[0].mxu0 %v341
        %v1026 = vpop.f32.mrb[0].mxu0
        %v1027 = vadd.f32 %v452, %v1026
        %v1028 = vpop.f32.mrb[0].mxu0
        %v1029 = vadd.f32 %v456, %v1028
        %v1030 = vpop.f32.mrb[0].mxu0
        %v1031 = vpop.f32.mrb[0].mxu0
        %1032 = vdwg.mxu0
        %1033 = vmatprep.subr.bf16.mxu0 %v764
        %1034 = vmatpush1.bf16.msra.mxu0 %v763
        %1035 = vmatprep.subr.bf16.mxu0 %v770
        %1036 = vmatpush1.bf16.msra.mxu0 %v769
        %1037 = vmatprep.subr.bf16.mxu0 %v776
        %1038 = vmatpush1.bf16.msra.mxu0 %v775
        %1039 = vmatprep.subr.bf16.mxu0 %v782
        %1040 = vmatpush1.bf16.msra.mxu0 %v781
        %1041 = vmatprep.subr.bf16.mxu0 %v788
        %1042 = vmatpush1.bf16.msra.mxu0 %v787
        %1043 = vmatprep.subr.bf16.mxu0 %v794
        %1044 = vmatpush1.bf16.msra.mxu0 %v793
        %1045 = vmatprep.subr.bf16.mxu0 %v800
        %1046 = vmatpush1.bf16.msra.mxu0 %v799
        %1047 = vmatprep.subr.bf16.mxu0 %v806
        %1048 = vmatpush1.bf16.msra.mxu0 %v805
        %1049 = vmatprep.subr.bf16.mxu0 %v812
        %1050 = vmatpush1.bf16.msra.mxu0 %v811
        %1051 = vmatprep.subr.bf16.mxu0 %v818
        %1052 = vmatpush1.bf16.msra.mxu0 %v817
        %1053 = vmatprep.subr.bf16.mxu0 %v824
        %1054 = vmatpush1.bf16.msra.mxu0 %v823
        %1055 = vmatprep.subr.bf16.mxu0 %v830
        %1056 = vmatpush1.bf16.msra.mxu0 %v829
        %1057 = vmatprep.subr.bf16.mxu0 %v836
        %1058 = vmatpush1.bf16.msra.mxu0 %v835
        %1059 = vmatprep.subr.bf16.mxu0 %v842
        %1060 = vmatpush1.bf16.msra.mxu0 %v841
        %1061 = vmatprep.subr.bf16.mxu0 %v848
        %1062 = vmatpush1.bf16.msra.mxu0 %v847
        %1063 = vmatprep.subr.bf16.mxu0 %v854
        %1064 = vmatpush1.bf16.msra.mxu0 %v853
        %1065 = vmatprep.mubr.bf16.mxu0 %v342
        %1066 = vmatmul.mubr.bf16.gmra.mrb[0].mxu0 %v341
        %v1067 = vpop.f32.mrb[0].mxu0
        %v1068 = vadd.f32 %v460, %v1067
        %v1069 = vpop.f32.mrb[0].mxu0
        %v1070 = vadd.f32 %v464, %v1069
        %v1071 = vpop.f32.mrb[0].mxu0
        %v1072 = vpop.f32.mrb[0].mxu0
        %1073 = vdwg.mxu0
        %v1074 = vpack.c.bf16 %v986, %v986
        %v1075 = vpack.c.bf16 %v988, %v988
        %v1076 = vpack.c.bf16 %v1027, %v1027
        %v1077 = vpack.c.bf16 %v1029, %v1029
        %v1078 = vpack.c.bf16 %v1068, %v1068
        %v1079 = vpack.c.bf16 %v1070, %v1070
        %v1086 = vunpack.c.l.b16 %v1074
        %v1087 = vunpack.c.l.b16 %v1075
        %v1088 = vunpack.c.l.b16 %v1076
        %v1089 = vunpack.c.l.b16 %v1077
        %v1090 = vunpack.c.l.b16 %v1078
        %v1091 = vunpack.c.l.b16 %v1079
        %v1092 = vpack.c.b16 %v1087, %v1086
        %v1093 = vpack.c.b16 %v1089, %v1088
        %v1094 = vpack.c.b16 %v1091, %v1090
        %1098 = vst [vmem:[%s292] sm:$0xff] %v1092
        %1099 = vst [vmem:[%s292 + $0x8] sm:$0xff] %v1093
        %1100 = vst [vmem:[%s292 + $0x10] sm:$0xff] %v1094
        %s1101 = sand.u32 %s142, 1
        %s1102 = scalar_lea.sflag [#allocation4], %s1101
        %s1103 = sand.u32 %s142, 1
        %s1104 = smul.addr %s1103, 24
        %s1105 = scalar_lea.vmem [#allocation11], %s1104
        // Predicated region
        $region61: #{clip_encoder_forward.13} parent=39 // pred_check
          %p1106 = pneg %p152
        $region62: #{clip_encoder_forward.13} parent=39 // pred_check_branch
          %1108 = sbr.rel (%p1106) target = $region64
        $region63: #{clip_encoder_forward.13} parent=39 // pred_region
          %s1110 = ssub.s32 384, 384
          %1111 = vsyncadd %s1102, %s1110
          %s1112 = smul.addr %s24, 6
          %s1113 = smul.addr %s1112, 64
          %s1114 = scalar_lea.hbm %s5, %s1113
          %s1116 = sshll.u32 %s1105, 4
          %s1117 = int_to_ptr.vmem [resolvable:$true] %s1116
          %1119 = dma.vmem_to_hbm [thread:$0]  %s1117, 384, %s1114, %s1102
        $region64: #{clip_encoder_forward.13} parent=39 // pred_fallthru
          _
      $region40: #{clip_encoder_forward.13} parent=5 // pred_fallthru
        _
      %p1120 = scmp.le.s32.totalorder 2, %s19
      // Predicated region
      $region65: #{clip_encoder_forward.13} parent=5 // pred_check
        %p1121 = pneg %p1120
      $region66: #{clip_encoder_forward.13} parent=5 // pred_check_branch
        %1123 = sbr.rel (%p1121) target = $region68
      $region67: #{clip_encoder_forward.13} parent=5 // pred_region
        %s1124 = ssub.s32 %s19, 2
        // Predicated region
        $region69: #{clip_encoder_forward.13} parent=67 // pred_check
          %p1125 = pneg %p158
        $region70: #{clip_encoder_forward.13} parent=67 // pred_check_branch
          %1127 = sbr.rel (%p1125) target = $region72
        $region71: #{clip_encoder_forward.13} parent=67 // pred_region
          %s1128 = sand.u32 %s143, 1
          %s1129 = scalar_lea.sflag [#allocation4], %s1128
          %s1130 = sand.u32 %s143, 1
          %s1131 = smul.addr %s1130, 24
          %s1132 = scalar_lea.vmem [#allocation11], %s1131
          %1133 = dma.done %s1129, 384
        $region72: #{clip_encoder_forward.13} parent=67 // pred_fallthru
          _
      $region68: #{clip_encoder_forward.13} parent=5 // pred_fallthru
        _
    $region6: #{clip_encoder_forward.13} parent=1 // loop_footer
      %s23 = sadd.s32 1, %s19
    $region7: #{clip_encoder_forward.13} parent=1 // loop_footer_branch
      %18 = sbr.rel target = $region3
    $region8: #{clip_encoder_forward.13} parent=1 // loop_exit
      _
    %1134 = vsyncpa [#allocation3], 1
    %s1135 = scalar_lea.sflag [#allocation3], 1
    %1136 = vsyncpa %s1135, 1
    %1137 = vsyncpa [#allocation6], 1
    %1138 = vsyncpa [#allocation9], 1
    %1139 = vsyncpa [#allocation4], 1
    %s1140 = scalar_lea.sflag [#allocation4], 1
    %1141 = vsyncpa %s1140, 1

// kernel: clip_encoder_forward.15
$region0: #{clip_encoder_forward.15}
  #allocation0 [shape = 'u32[]', space=smem, size = 0x4, offset = 0x4, fixed_abs, tag = 'smem constant byte address 0x4 - core index']
  #allocation1 [shape = 'u32[144,128]{1,0:T(1,128)}', space=vmem, size = 0x12000, scoped, tag = 'internal scratch']
  %s0 = inlined_call_operand.hbm [shape: bf16[16,256], index: 0, kind: input, shape index: {}]
  %s1 = inlined_call_operand.hbm [shape: bf16[256,256], index: 1, kind: input, shape index: {}]
  %s2 = inlined_call_operand.hbm [shape: f32[1,256], index: 2, kind: input, shape index: {}]
  %s3 = inlined_call_operand.hbm [shape: bf16[16,256], index: 3, kind: input, shape index: {}]
  %s4 = inlined_call_operand.hbm [shape: bf16[16,256], index: 4, kind: output, shape index: {}]
  %s5 = sld [smem:[#allocation0]]
  $region65: #{clip_encoder_forward.15} parent=0
    _
  %s7 = ssub.s32 1, %s5
  %s8 = scalar_select 0, %s7, %s5
  $region1: #{clip_encoder_forward.15} parent=0
    #allocation2 [shape = 'u8[8192]{0}', space=vmem, size = 0x2000, scoped, tag = 'input window, operand 0']
    #allocation3 [shape = 's32[2]{0}', space=sflag, size = 0x8, scoped, tag = 'scoped memory for clip_encoder_forward.15']
    #allocation4 [shape = 's32[2]{0}', space=sflag, size = 0x8, scoped, tag = 'scoped memory for clip_encoder_forward.15']
    #allocation5 [shape = 'u8[131072]{0}', space=vmem, size = 0x20000, scoped, tag = 'input window, operand 1, single buffered']
    #allocation6 [shape = 's32[1]{0}', space=sflag, size = 0x4, scoped, tag = 'scoped memory for clip_encoder_forward.15']
    #allocation7 [shape = 'u8[1024]{0}', space=vmem, size = 0x400, scoped, tag = 'input window, operand 2, single buffered']
    #allocation8 [shape = 'u8[8192]{0}', space=vmem, size = 0x2000, scoped, tag = 'input window, operand 3']
    #allocation9 [shape = 's32[2]{0}', space=sflag, size = 0x8, scoped, tag = 'scoped memory for clip_encoder_forward.15']
    #allocation10 [shape = 'u8[8192]{0}', space=vmem, size = 0x2000, scoped, tag = 'output window, operand 0']
    %9 = vsyncpa [#allocation3], 0
    %s10 = scalar_lea.sflag [#allocation3], 1
    %11 = vsyncpa %s10, 0
    %12 = vsyncpa [#allocation6], 0
    %13 = vsyncpa [#allocation9], 0
    %s14 = scalar_lea.sflag [#allocation9], 1
    %15 = vsyncpa %s14, 0
    %16 = vsyncpa [#allocation4], 0
    %s17 = scalar_lea.sflag [#allocation4], 1
    %18 = vsyncpa %s17, 0
    loop: start=0, step=1, limit=4
    $region2: #{clip_encoder_forward.15} parent=1 // loop_pre_header
      _
    $region3: #{clip_encoder_forward.15} parent=1 // loop_header
      %s20 = sphi 0, %s24
      %p21 = scmp.ge.s32.totalorder %s20, 4
      %s30 = sphi 0, %s32
      %s33 = sphi 0, %s30
      %s34 = sphi 0, %s33
      %s50 = sphi 0, %s34
      %s54 = sphi 0, %s54
      %s56 = sphi 0, %s54
      %s57 = sphi 0, %s56
      %s71 = sphi 0, %s57
      %s75 = sphi 0, %s75
      %s77 = sphi 0, %s75
      %s78 = sphi 0, %s77
      %s92 = sphi 0, %s78
      %s98 = sphi 0, %s100
      %s101 = sphi 0, %s98
      %s102 = sphi 0, %s101
      %s118 = sphi 0, %s102
      %s124 = sphi 0, %s126
      %s127 = sphi 0, %s124
      %s128 = sphi 0, %s127
      %s144 = sphi 0, %s128
    $region4: #{clip_encoder_forward.15} parent=1 // loop_header_branch
      %23 = sbr.rel (%p21) target = $region8
    $region5: #{clip_encoder_forward.15} parent=1 // loop_body
      %s25 = ssub.s32 %s20, 1
      %s26 = ssub.s32 %s20, 2
      %s27 = sadd.s32 %s20, 1
      %s28 = ssub.s32 %s20, %s27
      %p29 = scmp.eq.s32.totalorder %s28, 0
      %s31 = sadd.s32 %s30, 1
      %s32 = scalar_select %p29, %s30, %s31
      %p35 = pneg %p29
      %p36 = scmp.eq.s32.totalorder %s20, 1
      %p37 = por %p35, %p36
      %p38 = scmp.ne.s32.totalorder %s30, %s33
      %p39 = scmp.eq.s32.totalorder %s20, 0
      %p40 = por %p38, %p39
      %p41 = scmp.ne.s32.totalorder %s30, %s33
      %p42 = scmp.eq.s32.totalorder %s25, 1
      %p43 = por %p41, %p42
      %p44 = scmp.ne.s32.totalorder %s33, %s34
      %p45 = scmp.eq.s32.totalorder %s25, 0
      %p46 = por %p44, %p45
      %p47 = scmp.ne.s32.totalorder %s33, %s34
      %p48 = scmp.eq.s32.totalorder %s26, 1
      %p49 = por %p47, %p48
      %p51 = scmp.ne.s32.totalorder %s34, %s50
      %p52 = scmp.eq.s32.totalorder %s26, 0
      %p53 = por %p51, %p52
      %s55 = sadd.s32 %s54, 1
      %p58 = scmp.eq.s32.totalorder %s20, 1
      %p59 = scmp.ne.s32.totalorder %s54, %s56
      %p60 = scmp.eq.s32.totalorder %s20, 0
      %p61 = por %p59, %p60
      %p62 = scmp.ne.s32.totalorder %s54, %s56
      %p63 = scmp.eq.s32.totalorder %s25, 1
      %p64 = por %p62, %p63
      %p65 = scmp.ne.s32.totalorder %s56, %s57
      %p66 = scmp.eq.s32.totalorder %s25, 0
      %p67 = por %p65, %p66
      %p68 = scmp.ne.s32.totalorder %s56, %s57
      %p69 = scmp.eq.s32.totalorder %s26, 1
      %p70 = por %p68, %p69
      %p72 = scmp.ne.s32.totalorder %s57, %s71
      %p73 = scmp.eq.s32.totalorder %s26, 0
      %p74 = por %p72, %p73
      %s76 = sadd.s32 %s75, 1
      %p79 = scmp.eq.s32.totalorder %s20, 1
      %p80 = scmp.ne.s32.totalorder %s75, %s77
      %p81 = scmp.eq.s32.totalorder %s20, 0
      %p82 = por %p80, %p81
      %p83 = scmp.ne.s32.totalorder %s75, %s77
      %p84 = scmp.eq.s32.totalorder %s25, 1
      %p85 = por %p83, %p84
      %p86 = scmp.ne.s32.totalorder %s77, %s78
      %p87 = scmp.eq.s32.totalorder %s25, 0
      %p88 = por %p86, %p87
      %p89 = scmp.ne.s32.totalorder %s77, %s78
      %p90 = scmp.eq.s32.totalorder %s26, 1
      %p91 = por %p89, %p90
      %p93 = scmp.ne.s32.totalorder %s78, %s92
      %p94 = scmp.eq.s32.totalorder %s26, 0
      %p95 = por %p93, %p94
      %s96 = ssub.s32 %s20, %s27
      %p97 = scmp.eq.s32.totalorder %s96, 0
      %s99 = sadd.s32 %s98, 1
      %s100 = scalar_select %p97, %s98, %s99
      %p103 = pneg %p97
      %p104 = scmp.eq.s32.totalorder %s20, 1
      %p105 = por %p103, %p104
      %p106 = scmp.ne.s32.totalorder %s98, %s101
      %p107 = scmp.eq.s32.totalorder %s20, 0
      %p108 = por %p106, %p107
      %p109 = scmp.ne.s32.totalorder %s98, %s101
      %p110 = scmp.eq.s32.totalorder %s25, 1
      %p111 = por %p109, %p110
      %p112 = scmp.ne.s32.totalorder %s101, %s102
      %p113 = scmp.eq.s32.totalorder %s25, 0
      %p114 = por %p112, %p113
      %p115 = scmp.ne.s32.totalorder %s101, %s102
      %p116 = scmp.eq.s32.totalorder %s26, 1
      %p117 = por %p115, %p116
      %p119 = scmp.ne.s32.totalorder %s102, %s118
      %p120 = scmp.eq.s32.totalorder %s26, 0
      %p121 = por %p119, %p120
      %s122 = ssub.s32 %s20, %s27
      %p123 = scmp.eq.s32.totalorder %s122, 0
      %s125 = sadd.s32 %s124, 1
      %s126 = scalar_select %p123, %s124, %s125
      %p129 = pneg %p123
      %p130 = scmp.eq.s32.totalorder %s20, 1
      %p131 = por %p129, %p130
      %p132 = scmp.ne.s32.totalorder %s124, %s127
      %p133 = scmp.eq.s32.totalorder %s20, 0
      %p134 = por %p132, %p133
      %p135 = scmp.ne.s32.totalorder %s124, %s127
      %p136 = scmp.eq.s32.totalorder %s25, 1
      %p137 = por %p135, %p136
      %p138 = scmp.ne.s32.totalorder %s127, %s128
      %p139 = scmp.eq.s32.totalorder %s25, 0
      %p140 = por %p138, %p139
      %p141 = scmp.ne.s32.totalorder %s127, %s128
      %p142 = scmp.eq.s32.totalorder %s26, 1
      %p143 = por %p141, %p142
      %p145 = scmp.ne.s32.totalorder %s128, %s144
      %p146 = scmp.eq.s32.totalorder %s26, 0
      %p147 = por %p145, %p146
      %p148 = scmp.le.s32.totalorder 1, %s20
      %p149 = scmp.lt.s32.totalorder %s20, 3
      %p150 = pnand %p148, %p149
      %p151 = pneg %p150
      // Predicated region
      $region9: #{clip_encoder_forward.15} parent=5 // pred_check
        _
      $region10: #{clip_encoder_forward.15} parent=5 // pred_check_branch
        %153 = sbr.rel (%p150) target = $region12
      $region11: #{clip_encoder_forward.15} parent=5 // pred_region
        %s154 = ssub.s32 %s20, 1
        // Predicated region
        $region13: #{clip_encoder_forward.15} parent=11 // pred_check
          %p155 = pneg %p67
        $region14: #{clip_encoder_forward.15} parent=11 // pred_check_branch
          %157 = sbr.rel (%p155) target = $region16
        $region15: #{clip_encoder_forward.15} parent=11 // pred_region
          %s159 = ssub.s32 4096, 4096
          %160 = vsyncadd [#allocation6], %s159
          %s161 = sshll.u32 [#allocation5], 4
          %s162 = int_to_ptr.vmem [resolvable:$true] %s161
          %167 = dma.hbm_to_vmem [thread:$0]  %s1, 4096, %s162, [#allocation6], 128, 128, 8
        $region16: #{clip_encoder_forward.15} parent=11 // pred_fallthru
          _
        // Predicated region
        $region17: #{clip_encoder_forward.15} parent=11 // pred_check
          %p168 = pneg %p88
        $region18: #{clip_encoder_forward.15} parent=11 // pred_check_branch
          %170 = sbr.rel (%p168) target = $region20
        $region19: #{clip_encoder_forward.15} parent=11 // pred_region
          %s172 = ssub.s32 32, 32
          %173 = vsyncadd [#allocation6], %s172
          %s175 = sshll.u32 [#allocation7], 4
          %s176 = int_to_ptr.vmem [resolvable:$true] %s175
          %178 = dma.hbm_to_vmem [thread:$0]  %s2, 32, %s176, [#allocation6]
        $region20: #{clip_encoder_forward.15} parent=11 // pred_fallthru
          _
      $region12: #{clip_encoder_forward.15} parent=5 // pred_fallthru
        _
      %p179 = scmp.lt.s32.totalorder %s20, 2
      // Predicated region
      $region21: #{clip_encoder_forward.15} parent=5 // pred_check
        %p180 = pneg %p179
      $region22: #{clip_encoder_forward.15} parent=5 // pred_check_branch
        %182 = sbr.rel (%p180) target = $region24
      $region23: #{clip_encoder_forward.15} parent=5 // pred_region
        // Predicated region
        $region25: #{clip_encoder_forward.15} parent=23 // pred_check
          %p183 = pneg %p40
        $region26: #{clip_encoder_forward.15} parent=23 // pred_check_branch
          %185 = sbr.rel (%p183) target = $region28
        $region27: #{clip_encoder_forward.15} parent=23 // pred_region
          %s186 = sand.u32 %s30, 1
          %s187 = scalar_lea.sflag [#allocation3], %s186
          %s188 = sand.u32 %s30, 1
          %s189 = smul.addr %s188, 8
          %s190 = scalar_lea.vmem [#allocation2], %s189
          %s192 = ssub.s32 128, 128
          %193 = vsyncadd %s187, %s192
          %s194 = smul.addr %s20, 2
          %s195 = smul.addr %s194, 64
          %s196 = scalar_lea.hbm %s0, %s195
          %s198 = sshll.u32 %s190, 4
          %s199 = int_to_ptr.vmem [resolvable:$true] %s198
          %201 = dma.hbm_to_vmem [thread:$0]  %s196, 128, %s199, %s187
        $region28: #{clip_encoder_forward.15} parent=23 // pred_fallthru
          _
        // Predicated region
        $region29: #{clip_encoder_forward.15} parent=23 // pred_check
          %p202 = pneg %p108
        $region30: #{clip_encoder_forward.15} parent=23 // pred_check_branch
          %204 = sbr.rel (%p202) target = $region32
        $region31: #{clip_encoder_forward.15} parent=23 // pred_region
          %s205 = sand.u32 %s98, 1
          %s206 = scalar_lea.sflag [#allocation9], %s205
          %s207 = sand.u32 %s98, 1
          %s208 = smul.addr %s207, 8
          %s209 = scalar_lea.vmem [#allocation8], %s208
          %s211 = ssub.s32 128, 128
          %212 = vsyncadd %s206, %s211
          %s213 = smul.addr %s20, 2
          %s214 = smul.addr %s213, 64
          %s215 = scalar_lea.hbm %s3, %s214
          %s217 = sshll.u32 %s209, 4
          %s218 = int_to_ptr.vmem [resolvable:$true] %s217
          %220 = dma.hbm_to_vmem [thread:$0]  %s215, 128, %s218, %s206
        $region32: #{clip_encoder_forward.15} parent=23 // pred_fallthru
          _
      $region24: #{clip_encoder_forward.15} parent=5 // pred_fallthru
        _
      %p221 = scmp.le.s32.totalorder 1, %s20
      %p222 = scmp.lt.s32.totalorder %s20, 3
      %p223 = pnand %p221, %p222
      %p224 = pneg %p223
      // Predicated region
      $region33: #{clip_encoder_forward.15} parent=5 // pred_check
        _
      $region34: #{clip_encoder_forward.15} parent=5 // pred_check_branch
        %226 = sbr.rel (%p223) target = $region36
      $region35: #{clip_encoder_forward.15} parent=5 // pred_region
        %s227 = ssub.s32 %s20, 1
        %s228 = sand.u32 %s33, 1
        %s229 = scalar_lea.sflag [#allocation3], %s228
        %s230 = sand.u32 %s33, 1
        %s231 = smul.addr %s230, 8
        %s232 = scalar_lea.vmem [#allocation2], %s231
        // Predicated region
        $region37: #{clip_encoder_forward.15} parent=35 // pred_check
          %p233 = pneg %p46
        $region38: #{clip_encoder_forward.15} parent=35 // pred_check_branch
          %235 = sbr.rel (%p233) target = $region40
        $region39: #{clip_encoder_forward.15} parent=35 // pred_region
          %236 = dma.done %s229, 128
        $region40: #{clip_encoder_forward.15} parent=35 // pred_fallthru
          _
        // Predicated region
        $region41: #{clip_encoder_forward.15} parent=35 // pred_check
          %p237 = pneg %p67
        $region42: #{clip_encoder_forward.15} parent=35 // pred_check_branch
          %239 = sbr.rel (%p237) target = $region44
        $region43: #{clip_encoder_forward.15} parent=35 // pred_region
          %240 = dma.done [#allocation6], 4096
        $region44: #{clip_encoder_forward.15} parent=35 // pred_fallthru
          _
        // Predicated region
        $region45: #{clip_encoder_forward.15} parent=35 // pred_check
          %p241 = pneg %p88
        $region46: #{clip_encoder_forward.15} parent=35 // pred_check_branch
          %243 = sbr.rel (%p241) target = $region48
        $region47: #{clip_encoder_forward.15} parent=35 // pred_region
          %244 = dma.done [#allocation6], 32
        $region48: #{clip_encoder_forward.15} parent=35 // pred_fallthru
          _
        %s245 = sand.u32 %s101, 1
        %s246 = scalar_lea.sflag [#allocation9], %s245
        %s247 = sand.u32 %s101, 1
        %s248 = smul.addr %s247, 8
        %s249 = scalar_lea.vmem [#allocation8], %s248
        // Predicated region
        $region49: #{clip_encoder_forward.15} parent=35 // pred_check
          %p250 = pneg %p114
        $region50: #{clip_encoder_forward.15} parent=35 // pred_check_branch
          %252 = sbr.rel (%p250) target = $region52
        $region51: #{clip_encoder_forward.15} parent=35 // pred_region
          %253 = dma.done %s246, 128
        $region52: #{clip_encoder_forward.15} parent=35 // pred_fallthru
          _
        %s254 = sand.u32 %s33, 1
        %s255 = scalar_lea.sflag [#allocation3], %s254
        %s256 = sand.u32 %s33, 1
        %s257 = smul.addr %s256, 8
        %s258 = scalar_lea.vmem [#allocation2], %s257
        %p259 = pneg %p46
        %p260 = pneg %p43
        %p261 = pneg %p67
        %p262 = pneg %p64
        %p263 = pneg %p88
        %p264 = pneg %p85
        %s265 = sand.u32 %s101, 1
        %s266 = scalar_lea.sflag [#allocation9], %s265
        %s267 = sand.u32 %s101, 1
        %s268 = smul.addr %s267, 8
        %s269 = scalar_lea.vmem [#allocation8], %s268
        %p270 = pneg %p114
        %p271 = pneg %p111
        %p272 = pneg %p140
        %p273 = pneg %p137
        %s274 = sand.u32 %s127, 1
        %s275 = scalar_lea.sflag [#allocation4], %s274
        %s276 = sand.u32 %s127, 1
        %s277 = smul.addr %s276, 8
        %s278 = scalar_lea.vmem [#allocation10], %s277
        %v279 = vld [vmem:[%s232] sm:$0xff]
        %v280 = vld [vmem:[#allocation5] sm:$0xff]
        %v281 = vld [vmem:[#allocation5 + $0x8] sm:$0xff]
        %v282 = vld [vmem:[#allocation5 + $0x10] sm:$0xff]
        %v283 = vld [vmem:[#allocation5 + $0x18] sm:$0xff]
        %v284 = vld [vmem:[#allocation5 + $0x20] sm:$0xff]
        %v285 = vld [vmem:[#allocation5 + $0x28] sm:$0xff]
        %v286 = vld [vmem:[#allocation5 + $0x30] sm:$0xff]
        %v287 = vld [vmem:[#allocation5 + $0x38] sm:$0xff]
        %v288 = vld [vmem:[#allocation5 + $0x40] sm:$0xff]
        %v289 = vld [vmem:[#allocation5 + $0x48] sm:$0xff]
        %v290 = vld [vmem:[#allocation5 + $0x50] sm:$0xff]
        %v291 = vld [vmem:[#allocation5 + $0x58] sm:$0xff]
        %v292 = vld [vmem:[#allocation5 + $0x60] sm:$0xff]
        %v293 = vld [vmem:[#allocation5 + $0x68] sm:$0xff]
        %v294 = vld [vmem:[#allocation5 + $0x70] sm:$0xff]
        %v295 = vld [vmem:[#allocation5 + $0x78] sm:$0xff]
        %v296 = vld [vmem:[#allocation5 + $0x80] sm:$0xff]
        %v297 = vld [vmem:[#allocation5 + $0x88] sm:$0xff]
        %v298 = vld [vmem:[#allocation5 + $0x90] sm:$0xff]
        %v299 = vld [vmem:[#allocation5 + $0x98] sm:$0xff]
        %v300 = vld [vmem:[#allocation5 + $0xa0] sm:$0xff]
        %v301 = vld [vmem:[#allocation5 + $0xa8] sm:$0xff]
        %v302 = vld [vmem:[#allocation5 + $0xb0] sm:$0xff]
        %v303 = vld [vmem:[#allocation5 + $0xb8] sm:$0xff]
        %v304 = vld [vmem:[#allocation5 + $0xc0] sm:$0xff]
        %v305 = vld [vmem:[#allocation5 + $0xc8] sm:$0xff]
        %v306 = vld [vmem:[#allocation5 + $0xd0] sm:$0xff]
        %v307 = vld [vmem:[#allocation5 + $0xd8] sm:$0xff]
        %v308 = vld [vmem:[#allocation5 + $0xe0] sm:$0xff]
        %v309 = vld [vmem:[#allocation5 + $0xe8] sm:$0xff]
        %v310 = vld [vmem:[#allocation5 + $0xf0] sm:$0xff]
        %v311 = vld [vmem:[#allocation5 + $0xf8] sm:$0xff]
        %v312 = vld [vmem:[#allocation7] sm:$0x3]
        %v314 = vlaneseq
        %v315 = vshrl.u32 %v314, 7
        %v316 = vsub.s32 0, %v315
        %v317 = vrot.slane %v312, %v316
        %v318 = vlaneseq
        %v319 = vshrl.u32 %v318, 7
        %v320 = vsub.s32 1, %v319
        %v321 = vrot.slane %v312, %v320
        %v325 = vunpack.c.l.b16 %v279
        %v326 = vunpack.c.h.b16 %v279
        %v327 = vpack.c.b16 %v325, %v325
        %v328 = vpack.c.b16 %v326, %v326
        %v363 = vunpack.c.l.b16 %v280
        %v364 = vunpack.c.h.b16 %v280
        %v365 = vunpack.c.l.b16 %v281
        %v366 = vunpack.c.h.b16 %v281
        %v367 = vunpack.c.l.b16 %v282
        %v368 = vunpack.c.h.b16 %v282
        %v369 = vunpack.c.l.b16 %v283
        %v370 = vunpack.c.h.b16 %v283
        %v371 = vunpack.c.l.b16 %v284
        %v372 = vunpack.c.h.b16 %v284
        %v373 = vunpack.c.l.b16 %v285
        %v374 = vunpack.c.h.b16 %v285
        %v375 = vunpack.c.l.b16 %v286
        %v376 = vunpack.c.h.b16 %v286
        %v377 = vunpack.c.l.b16 %v287
        %v378 = vunpack.c.h.b16 %v287
        %v379 = vunpack.c.l.b16 %v288
        %v380 = vunpack.c.h.b16 %v288
        %v381 = vunpack.c.l.b16 %v289
        %v382 = vunpack.c.h.b16 %v289
        %v383 = vunpack.c.l.b16 %v290
        %v384 = vunpack.c.h.b16 %v290
        %v385 = vunpack.c.l.b16 %v291
        %v386 = vunpack.c.h.b16 %v291
        %v387 = vunpack.c.l.b16 %v292
        %v388 = vunpack.c.h.b16 %v292
        %v389 = vunpack.c.l.b16 %v293
        %v390 = vunpack.c.h.b16 %v293
        %v391 = vunpack.c.l.b16 %v294
        %v392 = vunpack.c.h.b16 %v294
        %v393 = vunpack.c.l.b16 %v295
        %v394 = vunpack.c.h.b16 %v295
        %v395 = vunpack.c.l.b16 %v296
        %v396 = vunpack.c.h.b16 %v296
        %v397 = vunpack.c.l.b16 %v297
        %v398 = vunpack.c.h.b16 %v297
        %v399 = vunpack.c.l.b16 %v298
        %v400 = vunpack.c.h.b16 %v298
        %v401 = vunpack.c.l.b16 %v299
        %v402 = vunpack.c.h.b16 %v299
        %v403 = vunpack.c.l.b16 %v300
        %v404 = vunpack.c.h.b16 %v300
        %v405 = vunpack.c.l.b16 %v301
        %v406 = vunpack.c.h.b16 %v301
        %v407 = vunpack.c.l.b16 %v302
        %v408 = vunpack.c.h.b16 %v302
        %v409 = vunpack.c.l.b16 %v303
        %v410 = vunpack.c.h.b16 %v303
        %v411 = vunpack.c.l.b16 %v304
        %v412 = vunpack.c.h.b16 %v304
        %v413 = vunpack.c.l.b16 %v305
        %v414 = vunpack.c.h.b16 %v305
        %v415 = vunpack.c.l.b16 %v306
        %v416 = vunpack.c.h.b16 %v306
        %v417 = vunpack.c.l.b16 %v307
        %v418 = vunpack.c.h.b16 %v307
        %v419 = vunpack.c.l.b16 %v308
        %v420 = vunpack.c.h.b16 %v308
        %v421 = vunpack.c.l.b16 %v309
        %v422 = vunpack.c.h.b16 %v309
        %v423 = vunpack.c.l.b16 %v310
        %v424 = vunpack.c.h.b16 %v310
        %v425 = vunpack.c.l.b16 %v311
        %v426 = vunpack.c.h.b16 %v311
        %v427 = vpack.c.b16 %v365, %v363
        %v428 = vpack.c.b16 %v366, %v364
        %v429 = vpack.c.b16 %v369, %v367
        %v430 = vpack.c.b16 %v370, %v368
        %v431 = vpack.c.b16 %v373, %v371
        %v432 = vpack.c.b16 %v374, %v372
        %v433 = vpack.c.b16 %v377, %v375
        %v434 = vpack.c.b16 %v378, %v376
        %v435 = vpack.c.b16 %v381, %v379
        %v436 = vpack.c.b16 %v382, %v380
        %v437 = vpack.c.b16 %v385, %v383
        %v438 = vpack.c.b16 %v386, %v384
        %v439 = vpack.c.b16 %v389, %v387
        %v440 = vpack.c.b16 %v390, %v388
        %v441 = vpack.c.b16 %v393, %v391
        %v442 = vpack.c.b16 %v394, %v392
        %v443 = vpack.c.b16 %v397, %v395
        %v444 = vpack.c.b16 %v398, %v396
        %v445 = vpack.c.b16 %v401, %v399
        %v446 = vpack.c.b16 %v402, %v400
        %v447 = vpack.c.b16 %v405, %v403
        %v448 = vpack.c.b16 %v406, %v404
        %v449 = vpack.c.b16 %v409, %v407
        %v450 = vpack.c.b16 %v410, %v408
        %v451 = vpack.c.b16 %v413, %v411
        %v452 = vpack.c.b16 %v414, %v412
        %v453 = vpack.c.b16 %v417, %v415
        %v454 = vpack.c.b16 %v418, %v416
        %v455 = vpack.c.b16 %v421, %v419
        %v456 = vpack.c.b16 %v422, %v420
        %v457 = vpack.c.b16 %v425, %v423
        %v458 = vpack.c.b16 %v426, %v424
        %491 = vmatprep.subr.bf16.mxu0 %v428
        %492 = vmatpush1.bf16.msra.mxu0 %v427
        %493 = vmatprep.subr.bf16.mxu0 %v430
        %494 = vmatpush1.bf16.msra.mxu0 %v429
        %495 = vmatprep.subr.bf16.mxu0 %v432
        %496 = vmatpush1.bf16.msra.mxu0 %v431
        %497 = vmatprep.subr.bf16.mxu0 %v434
        %498 = vmatpush1.bf16.msra.mxu0 %v433
        %499 = vmatprep.subr.bf16.mxu0 %v436
        %500 = vmatpush1.bf16.msra.mxu0 %v435
        %501 = vmatprep.subr.bf16.mxu0 %v438
        %502 = vmatpush1.bf16.msra.mxu0 %v437
        %503 = vmatprep.subr.bf16.mxu0 %v440
        %504 = vmatpush1.bf16.msra.mxu0 %v439
        %505 = vmatprep.subr.bf16.mxu0 %v442
        %506 = vmatpush1.bf16.msra.mxu0 %v441
        %507 = vmatprep.subr.bf16.mxu0 %v444
        %508 = vmatpush1.bf16.msra.mxu0 %v443
        %509 = vmatprep.subr.bf16.mxu0 %v446
        %510 = vmatpush1.bf16.msra.mxu0 %v445
        %511 = vmatprep.subr.bf16.mxu0 %v448
        %512 = vmatpush1.bf16.msra.mxu0 %v447
        %513 = vmatprep.subr.bf16.mxu0 %v450
        %514 = vmatpush1.bf16.msra.mxu0 %v449
        %515 = vmatprep.subr.bf16.mxu0 %v452
        %516 = vmatpush1.bf16.msra.mxu0 %v451
        %517 = vmatprep.subr.bf16.mxu0 %v454
        %518 = vmatpush1.bf16.msra.mxu0 %v453
        %519 = vmatprep.subr.bf16.mxu0 %v456
        %520 = vmatpush1.bf16.msra.mxu0 %v455
        %521 = vmatprep.subr.bf16.mxu0 %v458
        %522 = vmatpush1.bf16.msra.mxu0 %v457
        %523 = vmatprep.mubr.bf16.mxu0 %v328
        %524 = vmatmul.mubr.bf16.gmra.mrb[0].mxu0 %v327
        %v525 = vpop.f32.mrb[0].mxu0
        %v526 = vadd.f32 %v317, %v525
        %v527 = vpop.f32.mrb[0].mxu0
        %v528 = vadd.f32 %v321, %v527
        %v529 = vpop.f32.mrb[0].mxu0
        %v530 = vpop.f32.mrb[0].mxu0
        %531 = vdwg.mxu0
        %v532 = vld [vmem:[%s249] sm:$0xff]
        %v533 = vunpack.c.l.bf16 %v532
        %v534 = vunpack.c.h.bf16 %v532
        %v535 = vadd.f32 %v526, %v533
        %v536 = vadd.f32 %v528, %v534
        %v537 = vpack.c.bf16 %v535, %v535
        %v538 = vpack.c.bf16 %v536, %v536
        %v541 = vunpack.c.l.b16 %v537
        %v542 = vunpack.c.l.b16 %v538
        %v543 = vpack.c.b16 %v542, %v541
        %545 = vst [vmem:[%s278] sm:$0xff] %v543
        %s546 = sand.u32 %s127, 1
        %s547 = scalar_lea.sflag [#allocation4], %s546
        %s548 = sand.u32 %s127, 1
        %s549 = smul.addr %s548, 8
        %s550 = scalar_lea.vmem [#allocation10], %s549
        // Predicated region
        $region53: #{clip_encoder_forward.15} parent=35 // pred_check
          %p551 = pneg %p137
        $region54: #{clip_encoder_forward.15} parent=35 // pred_check_branch
          %553 = sbr.rel (%p551) target = $region56
        $region55: #{clip_encoder_forward.15} parent=35 // pred_region
          %s555 = ssub.s32 128, 128
          %556 = vsyncadd %s547, %s555
          %s557 = smul.addr %s25, 2
          %s558 = smul.addr %s557, 64
          %s559 = scalar_lea.hbm %s4, %s558
          %s561 = sshll.u32 %s550, 4
          %s562 = int_to_ptr.vmem [resolvable:$true] %s561
          %564 = dma.vmem_to_hbm [thread:$0]  %s562, 128, %s559, %s547
        $region56: #{clip_encoder_forward.15} parent=35 // pred_fallthru
          _
      $region36: #{clip_encoder_forward.15} parent=5 // pred_fallthru
        _
      %p565 = scmp.le.s32.totalorder 2, %s20
      // Predicated region
      $region57: #{clip_encoder_forward.15} parent=5 // pred_check
        %p566 = pneg %p565
      $region58: #{clip_encoder_forward.15} parent=5 // pred_check_branch
        %568 = sbr.rel (%p566) target = $region60
      $region59: #{clip_encoder_forward.15} parent=5 // pred_region
        %s569 = ssub.s32 %s20, 2
        // Predicated region
        $region61: #{clip_encoder_forward.15} parent=59 // pred_check
          %p570 = pneg %p143
        $region62: #{clip_encoder_forward.15} parent=59 // pred_check_branch
          %572 = sbr.rel (%p570) target = $region64
        $region63: #{clip_encoder_forward.15} parent=59 // pred_region
          %s573 = sand.u32 %s128, 1
          %s574 = scalar_lea.sflag [#allocation4], %s573
          %s575 = sand.u32 %s128, 1
          %s576 = smul.addr %s575, 8
          %s577 = scalar_lea.vmem [#allocation10], %s576
          %578 = dma.done %s574, 128
        $region64: #{clip_encoder_forward.15} parent=59 // pred_fallthru
          _
      $region60: #{clip_encoder_forward.15} parent=5 // pred_fallthru
        _
    $region6: #{clip_encoder_forward.15} parent=1 // loop_footer
      %s24 = sadd.s32 1, %s20
    $region7: #{clip_encoder_forward.15} parent=1 // loop_footer_branch
      %19 = sbr.rel target = $region3
    $region8: #{clip_encoder_forward.15} parent=1 // loop_exit
      _
    %579 = vsyncpa [#allocation3], 1
    %s580 = scalar_lea.sflag [#allocation3], 1
    %581 = vsyncpa %s580, 1
    %582 = vsyncpa [#allocation6], 1
    %583 = vsyncpa [#allocation9], 1
    %s584 = scalar_lea.sflag [#allocation9], 1
    %585 = vsyncpa %s584, 1
    %586 = vsyncpa [#allocation4], 1
    %s587 = scalar_lea.sflag [#allocation4], 1
    %588 = vsyncpa %s587, 1

// kernel: clip_encoder_forward.21
$region0: #{clip_encoder_forward.21}
  #allocation0 [shape = 'u32[]', space=smem, size = 0x4, offset = 0x4, fixed_abs, tag = 'smem constant byte address 0x4 - core index']
  #allocation1 [shape = 'u32[144,128]{1,0:T(1,128)}', space=vmem, size = 0x12000, scoped, tag = 'internal scratch']
  %s0 = inlined_call_operand.hbm [shape: bf16[2,256], index: 0, kind: input, shape index: {}]
  %s1 = inlined_call_operand.hbm [shape: f32[1,256], index: 1, kind: input, shape index: {}]
  %s2 = inlined_call_operand.hbm [shape: f32[1,256], index: 2, kind: input, shape index: {}]
  %s3 = inlined_call_operand.hbm [shape: bf16[256,128], index: 3, kind: input, shape index: {}]
  %s4 = inlined_call_operand.hbm [shape: f32[1,128], index: 4, kind: input, shape index: {}]
  %s5 = inlined_call_operand.hbm [shape: f32[2,128], index: 5, kind: output, shape index: {}]
  %s6 = sld [smem:[#allocation0]]
  $region50: #{clip_encoder_forward.21} parent=0
    _
  %s8 = ssub.s32 1, %s6
  %s9 = scalar_select 0, %s8, %s6
  $region1: #{clip_encoder_forward.21} parent=0
    #allocation2 [shape = 'u8[1024]{0}', space=vmem, size = 0x400, scoped, tag = 'input window, operand 0, single buffered']
    #allocation3 [shape = 's32[1]{0}', space=sflag, size = 0x4, scoped, tag = 'scoped memory for clip_encoder_forward.21']
    #allocation4 [shape = 's32[1]{0}', space=sflag, size = 0x4, scoped, tag = 'scoped memory for clip_encoder_forward.21']
    #allocation5 [shape = 'u8[1024]{0}', space=vmem, size = 0x400, scoped, tag = 'input window, operand 1, single buffered']
    #allocation6 [shape = 's32[1]{0}', space=sflag, size = 0x4, scoped, tag = 'scoped memory for clip_encoder_forward.21']
    #allocation7 [shape = 'u8[1024]{0}', space=vmem, size = 0x400, scoped, tag = 'input window, operand 2, single buffered']
    #allocation8 [shape = 'u8[65536]{0}', space=vmem, size = 0x10000, scoped, tag = 'input window, operand 3, single buffered']
    #allocation9 [shape = 's32[1]{0}', space=sflag, size = 0x4, scoped, tag = 'scoped memory for clip_encoder_forward.21']
    #allocation10 [shape = 'u8[512]{0}', space=vmem, size = 0x400, scoped, tag = 'input window, operand 4, single buffered']
    #allocation11 [shape = 'u8[1024]{0}', space=vmem, size = 0x400, scoped, tag = 'output window, operand 0, single buffered']
    %10 = vsyncpa [#allocation3], 0
    %11 = vsyncpa [#allocation6], 0
    %12 = vsyncpa [#allocation9], 0
    %13 = vsyncpa [#allocation4], 0
    // Predicated region
    $region2: #{clip_encoder_forward.21} parent=1 // pred_check
      _
    $region3: #{clip_encoder_forward.21} parent=1 // pred_check_branch
      %15 = sbr.rel (0) target = $region5
    $region4: #{clip_encoder_forward.21} parent=1 // pred_region
      %s17 = ssub.s32 32, 32
      %18 = vsyncadd [#allocation3], %s17
      %s20 = sshll.u32 [#allocation2], 4
      %s21 = int_to_ptr.vmem [resolvable:$true] %s20
      %23 = dma.hbm_to_vmem [thread:$0]  %s0, 32, %s21, [#allocation3]
    $region5: #{clip_encoder_forward.21} parent=1 // pred_fallthru
      _
    // Predicated region
    $region6: #{clip_encoder_forward.21} parent=1 // pred_check
      _
    $region7: #{clip_encoder_forward.21} parent=1 // pred_check_branch
      %25 = sbr.rel (0) target = $region9
    $region8: #{clip_encoder_forward.21} parent=1 // pred_region
      %s27 = ssub.s32 32, 32
      %28 = vsyncadd [#allocation6], %s27
      %s30 = sshll.u32 [#allocation5], 4
      %s31 = int_to_ptr.vmem [resolvable:$true] %s30
      %33 = dma.hbm_to_vmem [thread:$0]  %s1, 32, %s31, [#allocation6]
    $region9: #{clip_encoder_forward.21} parent=1 // pred_fallthru
      _
    // Predicated region
    $region10: #{clip_encoder_forward.21} parent=1 // pred_check
      _
    $region11: #{clip_encoder_forward.21} parent=1 // pred_check_branch
      %35 = sbr.rel (0) target = $region13
    $region12: #{clip_encoder_forward.21} parent=1 // pred_region
      %s37 = ssub.s32 32, 32
      %38 = vsyncadd [#allocation6], %s37
      %s40 = sshll.u32 [#allocation7], 4
      %s41 = int_to_ptr.vmem [resolvable:$true] %s40
      %43 = dma.hbm_to_vmem [thread:$0]  %s2, 32, %s41, [#allocation6]
    $region13: #{clip_encoder_forward.21} parent=1 // pred_fallthru
      _
    // Predicated region
    $region14: #{clip_encoder_forward.21} parent=1 // pred_check
      _
    $region15: #{clip_encoder_forward.21} parent=1 // pred_check_branch
      %45 = sbr.rel (0) target = $region17
    $region16: #{clip_encoder_forward.21} parent=1 // pred_region
      %s47 = ssub.s32 2048, 2048
      %48 = vsyncadd [#allocation9], %s47
      %s49 = sshll.u32 [#allocation8], 4
      %s50 = int_to_ptr.vmem [resolvable:$true] %s49
      %55 = dma.hbm_to_vmem [thread:$0]  %s3, 2048, %s50, [#allocation9], 64, 64, 4
    $region17: #{clip_encoder_forward.21} parent=1 // pred_fallthru
      _
    // Predicated region
    $region18: #{clip_encoder_forward.21} parent=1 // pred_check
      _
    $region19: #{clip_encoder_forward.21} parent=1 // pred_check_branch
      %57 = sbr.rel (0) target = $region21
    $region20: #{clip_encoder_forward.21} parent=1 // pred_region
      %s59 = ssub.s32 16, 16
      %60 = vsyncadd [#allocation9], %s59
      %s62 = sshll.u32 [#allocation10], 4
      %s63 = int_to_ptr.vmem [resolvable:$true] %s62
      %65 = dma.hbm_to_vmem [thread:$0]  %s4, 16, %s63, [#allocation9]
    $region21: #{clip_encoder_forward.21} parent=1 // pred_fallthru
      _
    // Predicated region
    $region22: #{clip_encoder_forward.21} parent=1 // pred_check
      _
    $region23: #{clip_encoder_forward.21} parent=1 // pred_check_branch
      %67 = sbr.rel (0) target = $region25
    $region24: #{clip_encoder_forward.21} parent=1 // pred_region
      %68 = dma.done [#allocation3], 32
    $region25: #{clip_encoder_forward.21} parent=1 // pred_fallthru
      _
    // Predicated region
    $region26: #{clip_encoder_forward.21} parent=1 // pred_check
      _
    $region27: #{clip_encoder_forward.21} parent=1 // pred_check_branch
      %70 = sbr.rel (0) target = $region29
    $region28: #{clip_encoder_forward.21} parent=1 // pred_region
      %71 = dma.done [#allocation6], 32
    $region29: #{clip_encoder_forward.21} parent=1 // pred_fallthru
      _
    // Predicated region
    $region30: #{clip_encoder_forward.21} parent=1 // pred_check
      _
    $region31: #{clip_encoder_forward.21} parent=1 // pred_check_branch
      %73 = sbr.rel (0) target = $region33
    $region32: #{clip_encoder_forward.21} parent=1 // pred_region
      %74 = dma.done [#allocation6], 32
    $region33: #{clip_encoder_forward.21} parent=1 // pred_fallthru
      _
    // Predicated region
    $region34: #{clip_encoder_forward.21} parent=1 // pred_check
      _
    $region35: #{clip_encoder_forward.21} parent=1 // pred_check_branch
      %76 = sbr.rel (0) target = $region37
    $region36: #{clip_encoder_forward.21} parent=1 // pred_region
      %77 = dma.done [#allocation9], 2048
    $region37: #{clip_encoder_forward.21} parent=1 // pred_fallthru
      _
    // Predicated region
    $region38: #{clip_encoder_forward.21} parent=1 // pred_check
      _
    $region39: #{clip_encoder_forward.21} parent=1 // pred_check_branch
      %79 = sbr.rel (0) target = $region41
    $region40: #{clip_encoder_forward.21} parent=1 // pred_region
      %80 = dma.done [#allocation9], 16
    $region41: #{clip_encoder_forward.21} parent=1 // pred_fallthru
      _
    %v82 = vld [vmem:[#allocation2] sm:$0x3]
    %v83 = vunpack.c.l.bf16 %v82
    %v84 = vld [vmem:[#allocation5] sm:$0x3]
    %v85 = vld [vmem:[#allocation7] sm:$0x3]
    %v88 = vunpack.c.l.s4 1983009808
    %v89 = vunpack.c.0.s8 %v88
    %v90 = vlaneseq
    %v91 = vshrl.u32 %v90, 7
    %v92 = vsub.s32 %v89, %v91
    %v93 = vrot.slane %v83, %v92
    %v94 = vcombine.high %v93, %v93
    %vm97 = vcmask 1041408
    %v98 = vsel %vm97, %v93, 0.0
    %v99 = vsel %vm97, %v94, 0.0
    %v100 = vadd.f32 %v98, %v99
    %101 = vadd.xlane.f32.xlu0 %v100
    %v102 = vpop.xlane.xlu0 %101
    %v103 = vrcp.pop 256.0
    %v104 = vmul.f32 %v102, %v103
    %v107 = vunpack.c.l.s4 269488144
    %v108 = vunpack.c.0.s8 %v107
    %v109 = vlaneseq
    %v110 = vshrl.u32 %v109, 7
    %v111 = vsub.s32 %v108, %v110
    %v112 = vrot.slane %v104, %v111
    %v114 = vsub.f32 %v83, %v112
    %v115 = vmul.f32 %v114, %v114
    %v118 = vunpack.c.l.s4 1983009808
    %v119 = vunpack.c.0.s8 %v118
    %v120 = vlaneseq
    %v121 = vshrl.u32 %v120, 7
    %v122 = vsub.s32 %v119, %v121
    %v123 = vrot.slane %v115, %v122
    %v124 = vcombine.high %v123, %v123
    %v127 = vsel %vm97, %v123, 0.0
    %v128 = vsel %vm97, %v124, 0.0
    %v129 = vadd.f32 %v127, %v128
    %130 = vadd.xlane.f32.xlu0 %v129
    %v131 = vpop.xlane.xlu0 %130
    %v132 = vmul.f32 %v131, %v103
    %v133 = vadd.f32 %v132, 1e-05
    %v134 = vrsqrt.pop %v133
    %v137 = vunpack.c.l.s4 269488144
    %v138 = vunpack.c.0.s8 %v137
    %v139 = vlaneseq
    %v140 = vshrl.u32 %v139, 7
    %v141 = vsub.s32 %v138, %v140
    %v142 = vrot.slane %v134, %v141
    %v144 = vmul.f32 %v114, %v142
    %v146 = vlaneseq
    %v147 = vshrl.u32 %v146, 7
    %v148 = vsub.s32 0, %v147
    %v149 = vrot.slane %v84, %v148
    %v150 = vlaneseq
    %v151 = vshrl.u32 %v150, 7
    %v152 = vsub.s32 1, %v151
    %v153 = vrot.slane %v84, %v152
    %v154 = vcombine.low %v149, %v153
    %v156 = vunpack.c.l.s4 1983009808
    %v157 = vunpack.c.0.s8 %v156
    %v158 = vlaneseq
    %v159 = vshrl.u32 %v158, 7
    %v160 = vsub.s32 %v157, %v159
    %v161 = vrot.slane %v154, %v160
    %v163 = vmul.f32 %v144, %v161
    %v165 = vlaneseq
    %v166 = vshrl.u32 %v165, 7
    %v167 = vsub.s32 0, %v166
    %v168 = vrot.slane %v85, %v167
    %v169 = vlaneseq
    %v170 = vshrl.u32 %v169, 7
    %v171 = vsub.s32 1, %v170
    %v172 = vrot.slane %v85, %v171
    %v173 = vcombine.low %v168, %v172
    %v175 = vunpack.c.l.s4 1983009808
    %v176 = vunpack.c.0.s8 %v175
    %v177 = vlaneseq
    %v178 = vshrl.u32 %v177, 7
    %v179 = vsub.s32 %v176, %v178
    %v180 = vrot.slane %v173, %v179
    %v182 = vadd.f32 %v163, %v180
    %v185 = vunpack.c.l.s4 1983009808
    %v186 = vunpack.c.0.s8 %v185
    %v187 = vlaneseq
    %v188 = vshrl.u32 %v187, 7
    %v189 = vsub.s32 %v186, %v188
    %v190 = vrot.slane %v182, %v189
    %v191 = vcombine.high %v190, %v190
    %v194 = vpack.c.bf16 %v190, %v190
    %v195 = vpack.c.bf16 %v191, %v191
    %v196 = vld [vmem:[#allocation8] sm:$0xf]
    %v197 = vld [vmem:[#allocation8 + $0x4] sm:$0xf]
    %v198 = vld [vmem:[#allocation8 + $0x8] sm:$0xf]
    %v199 = vld [vmem:[#allocation8 + $0xc] sm:$0xf]
    %v200 = vld [vmem:[#allocation8 + $0x10] sm:$0xf]
    %v201 = vld [vmem:[#allocation8 + $0x14] sm:$0xf]
    %v202 = vld [vmem:[#allocation8 + $0x18] sm:$0xf]
    %v203 = vld [vmem:[#allocation8 + $0x1c] sm:$0xf]
    %v204 = vld [vmem:[#allocation8 + $0x20] sm:$0xf]
    %v205 = vld [vmem:[#allocation8 + $0x24] sm:$0xf]
    %v206 = vld [vmem:[#allocation8 + $0x28] sm:$0xf]
    %v207 = vld [vmem:[#allocation8 + $0x2c] sm:$0xf]
    %v208 = vld [vmem:[#allocation8 + $0x30] sm:$0xf]
    %v209 = vld [vmem:[#allocation8 + $0x34] sm:$0xf]
    %v210 = vld [vmem:[#allocation8 + $0x38] sm:$0xf]
    %v211 = vld [vmem:[#allocation8 + $0x3c] sm:$0xf]
    %v212 = vld [vmem:[#allocation8 + $0x40] sm:$0xf]
    %v213 = vld [vmem:[#allocation8 + $0x44] sm:$0xf]
    %v214 = vld [vmem:[#allocation8 + $0x48] sm:$0xf]
    %v215 = vld [vmem:[#allocation8 + $0x4c] sm:$0xf]
    %v216 = vld [vmem:[#allocation8 + $0x50] sm:$0xf]
    %v217 = vld [vmem:[#allocation8 + $0x54] sm:$0xf]
    %v218 = vld [vmem:[#allocation8 + $0x58] sm:$0xf]
    %v219 = vld [vmem:[#allocation8 + $0x5c] sm:$0xf]
    %v220 = vld [vmem:[#allocation8 + $0x60] sm:$0xf]
    %v221 = vld [vmem:[#allocation8 + $0x64] sm:$0xf]
    %v222 = vld [vmem:[#allocation8 + $0x68] sm:$0xf]
    %v223 = vld [vmem:[#allocation8 + $0x6c] sm:$0xf]
    %v224 = vld [vmem:[#allocation8 + $0x70] sm:$0xf]
    %v225 = vld [vmem:[#allocation8 + $0x74] sm:$0xf]
    %v226 = vld [vmem:[#allocation8 + $0x78] sm:$0xf]
    %v227 = vld [vmem:[#allocation8 + $0x7c] sm:$0xf]
    %v228 = vld [vmem:[#allocation10] sm:$0x1]
    %v230 = vlaneseq
    %v231 = vshrl.u32 %v230, 7
    %v232 = vsub.s32 0, %v231
    %v233 = vrot.slane %v228, %v232
    %v267 = vunpack.c.l.b16 %v196
    %v268 = vunpack.c.l.b16 %v197
    %v269 = vunpack.c.l.b16 %v198
    %v270 = vunpack.c.l.b16 %v199
    %v271 = vunpack.c.l.b16 %v200
    %v272 = vunpack.c.l.b16 %v201
    %v273 = vunpack.c.l.b16 %v202
    %v274 = vunpack.c.l.b16 %v203
    %v275 = vunpack.c.l.b16 %v204
    %v276 = vunpack.c.l.b16 %v205
    %v277 = vunpack.c.l.b16 %v206
    %v278 = vunpack.c.l.b16 %v207
    %v279 = vunpack.c.l.b16 %v208
    %v280 = vunpack.c.l.b16 %v209
    %v281 = vunpack.c.l.b16 %v210
    %v282 = vunpack.c.l.b16 %v211
    %v283 = vunpack.c.l.b16 %v212
    %v284 = vunpack.c.l.b16 %v213
    %v285 = vunpack.c.l.b16 %v214
    %v286 = vunpack.c.l.b16 %v215
    %v287 = vunpack.c.l.b16 %v216
    %v288 = vunpack.c.l.b16 %v217
    %v289 = vunpack.c.l.b16 %v218
    %v290 = vunpack.c.l.b16 %v219
    %v291 = vunpack.c.l.b16 %v220
    %v292 = vunpack.c.l.b16 %v221
    %v293 = vunpack.c.l.b16 %v222
    %v294 = vunpack.c.l.b16 %v223
    %v295 = vunpack.c.l.b16 %v224
    %v296 = vunpack.c.l.b16 %v225
    %v297 = vunpack.c.l.b16 %v226
    %v298 = vunpack.c.l.b16 %v227
    %v299 = vpack.c.b16 %v268, %v267
    %v300 = vpack.c.b16 %v270, %v269
    %v301 = vpack.c.b16 %v272, %v271
    %v302 = vpack.c.b16 %v274, %v273
    %v303 = vpack.c.b16 %v276, %v275
    %v304 = vpack.c.b16 %v278, %v277
    %v305 = vpack.c.b16 %v280, %v279
    %v306 = vpack.c.b16 %v282, %v281
    %v307 = vpack.c.b16 %v284, %v283
    %v308 = vpack.c.b16 %v286, %v285
    %v309 = vpack.c.b16 %v288, %v287
    %v310 = vpack.c.b16 %v290, %v289
    %v311 = vpack.c.b16 %v292, %v291
    %v312 = vpack.c.b16 %v294, %v293
    %v313 = vpack.c.b16 %v296, %v295
    %v314 = vpack.c.b16 %v298, %v297
    %331 = vmatprep.subr.bf16.mxu0 0
    %332 = vmatpush1.bf16.msra.mxu0 %v299
    %333 = vmatprep.subr.bf16.mxu0 0
    %334 = vmatpush1.bf16.msra.mxu0 %v300
    %335 = vmatprep.subr.bf16.mxu0 0
    %336 = vmatpush1.bf16.msra.mxu0 %v301
    %337 = vmatprep.subr.bf16.mxu0 0
    %338 = vmatpush1.bf16.msra.mxu0 %v302
    %339 = vmatprep.subr.bf16.mxu0 0
    %340 = vmatpush1.bf16.msra.mxu0 %v303
    %341 = vmatprep.subr.bf16.mxu0 0
    %342 = vmatpush1.bf16.msra.mxu0 %v304
    %343 = vmatprep.subr.bf16.mxu0 0
    %344 = vmatpush1.bf16.msra.mxu0 %v305
    %345 = vmatprep.subr.bf16.mxu0 0
    %346 = vmatpush1.bf16.msra.mxu0 %v306
    %347 = vmatprep.subr.bf16.mxu0 0
    %348 = vmatpush1.bf16.msra.mxu0 %v307
    %349 = vmatprep.subr.bf16.mxu0 0
    %350 = vmatpush1.bf16.msra.mxu0 %v308
    %351 = vmatprep.subr.bf16.mxu0 0
    %352 = vmatpush1.bf16.msra.mxu0 %v309
    %353 = vmatprep.subr.bf16.mxu0 0
    %354 = vmatpush1.bf16.msra.mxu0 %v310
    %355 = vmatprep.subr.bf16.mxu0 0
    %356 = vmatpush1.bf16.msra.mxu0 %v311
    %357 = vmatprep.subr.bf16.mxu0 0
    %358 = vmatpush1.bf16.msra.mxu0 %v312
    %359 = vmatprep.subr.bf16.mxu0 0
    %360 = vmatpush1.bf16.msra.mxu0 %v313
    %361 = vmatprep.subr.bf16.mxu0 0
    %362 = vmatpush1.bf16.msra.mxu0 %v314
    %363 = vmatprep.mubr.bf16.mxu0 %v195
    %364 = vmatmul.mubr.bf16.gmra.mrb[0].mxu0 %v194
    %v365 = vpop.f32.mrb[0].mxu0
    %v366 = vadd.f32 %v233, %v365
    %v367 = vpop.f32.mrb[0].mxu0
    %v368 = vpop.f32.mrb[0].mxu0
    %v369 = vpop.f32.mrb[0].mxu0
    %370 = vdwg.mxu0
    %371 = vst [vmem:[#allocation11] sm:$0x3] %v366
    // Predicated region
    $region42: #{clip_encoder_forward.21} parent=1 // pred_check
      _
    $region43: #{clip_encoder_forward.21} parent=1 // pred_check_branch
      %373 = sbr.rel (0) target = $region45
    $region44: #{clip_encoder_forward.21} parent=1 // pred_region
      %s375 = ssub.s32 32, 32
      %376 = vsyncadd [#allocation4], %s375
      %s378 = sshll.u32 [#allocation11], 4
      %s379 = int_to_ptr.vmem [resolvable:$true] %s378
      %381 = dma.vmem_to_hbm [thread:$0]  %s379, 32, %s5, [#allocation4]
    $region45: #{clip_encoder_forward.21} parent=1 // pred_fallthru
      _
    // Predicated region
    $region46: #{clip_encoder_forward.21} parent=1 // pred_check
      _
    $region47: #{clip_encoder_forward.21} parent=1 // pred_check_branch
      %383 = sbr.rel (0) target = $region49
    $region48: #{clip_encoder_forward.21} parent=1 // pred_region
      %384 = dma.done [#allocation4], 32
    $region49: #{clip_encoder_forward.21} parent=1 // pred_fallthru
      _
    %385 = vsyncpa [#allocation3], 1
    %386 = vsyncpa [#allocation6], 1
    %387 = vsyncpa [#allocation9], 1
    %388 = vsyncpa [#allocation4], 1

// kernel: clip_encoder_forward.16
$region0: #{clip_encoder_forward.16}
  #allocation0 [shape = 'u32[]', space=smem, size = 0x4, offset = 0x4, fixed_abs, tag = 'smem constant byte address 0x4 - core index']
  #allocation1 [shape = 'u32[144,128]{1,0:T(1,128)}', space=vmem, size = 0x12000, scoped, tag = 'internal scratch']
  %s0 = inlined_call_operand.hbm [shape: bf16[16,256], index: 0, kind: input, shape index: {}]
  %s1 = inlined_call_operand.hbm [shape: f32[1,256], index: 1, kind: input, shape index: {}]
  %s2 = inlined_call_operand.hbm [shape: f32[1,256], index: 2, kind: input, shape index: {}]
  %s3 = inlined_call_operand.hbm [shape: bf16[256,1024], index: 3, kind: input, shape index: {}]
  %s4 = inlined_call_operand.hbm [shape: f32[1,1024], index: 4, kind: input, shape index: {}]
  %s5 = inlined_call_operand.hbm [shape: bf16[1024,256], index: 5, kind: input, shape index: {}]
  %s6 = inlined_call_operand.hbm [shape: f32[1,256], index: 6, kind: input, shape index: {}]
  %s7 = inlined_call_operand.hbm [shape: bf16[16,256], index: 7, kind: output, shape index: {}]
  %s8 = sld [smem:[#allocation0]]
  $region89: #{clip_encoder_forward.16} parent=0
    _
  %s10 = ssub.s32 1, %s8
  %s11 = scalar_select 0, %s10, %s8
  $region1: #{clip_encoder_forward.16} parent=0
    #allocation2 [shape = 'u8[8192]{0}', space=vmem, size = 0x2000, scoped, tag = 'input window, operand 0']
    #allocation3 [shape = 's32[2]{0}', space=sflag, size = 0x8, scoped, tag = 'scoped memory for clip_encoder_forward.16']
    #allocation4 [shape = 's32[2]{0}', space=sflag, size = 0x8, scoped, tag = 'scoped memory for clip_encoder_forward.16']
    #allocation5 [shape = 'u8[1024]{0}', space=vmem, size = 0x400, scoped, tag = 'input window, operand 1, single buffered']
    #allocation6 [shape = 's32[1]{0}', space=sflag, size = 0x4, scoped, tag = 'scoped memory for clip_encoder_forward.16']
    #allocation7 [shape = 'u8[1024]{0}', space=vmem, size = 0x400, scoped, tag = 'input window, operand 2, single buffered']
    #allocation8 [shape = 'u8[524288]{0}', space=vmem, size = 0x80000, scoped, tag = 'input window, operand 3, single buffered']
    #allocation9 [shape = 's32[1]{0}', space=sflag, size = 0x4, scoped, tag = 'scoped memory for clip_encoder_forward.16']
    #allocation10 [shape = 'u8[4096]{0}', space=vmem, size = 0x1000, scoped, tag = 'input window, operand 4, single buffered']
    #allocation11 [shape = 'u8[524288]{0}', space=vmem, size = 0x80000, scoped, tag = 'input window, operand 5, single buffered']
    #allocation12 [shape = 's32[1]{0}', space=sflag, size = 0x4, scoped, tag = 'scoped memory for clip_encoder_forward.16']
    #allocation13 [shape = 'u8[1024]{0}', space=vmem, size = 0x400, scoped, tag = 'input window, operand 6, single buffered']
    #allocation14 [shape = 'u8[8192]{0}', space=vmem, size = 0x2000, scoped, tag = 'output window, operand 0']
    %12 = vsyncpa [#allocation3], 0
    %s13 = scalar_lea.sflag [#allocation3], 1
    %14 = vsyncpa %s13, 0
    %15 = vsyncpa [#allocation6], 0
    %16 = vsyncpa [#allocation9], 0
    %17 = vsyncpa [#allocation12], 0
    %18 = vsyncpa [#allocation4], 0
    %s19 = scalar_lea.sflag [#allocation4], 1
    %20 = vsyncpa %s19, 0
    loop: start=0, step=1, limit=4
    $region2: #{clip_encoder_forward.16} parent=1 // loop_pre_header
      _
    $region3: #{clip_encoder_forward.16} parent=1 // loop_header
      %s22 = sphi 0, %s26
      %p23 = scmp.ge.s32.totalorder %s22, 4
      %s32 = sphi 0, %s34
      %s35 = sphi 0, %s32
      %s36 = sphi 0, %s35
      %s52 = sphi 0, %s36
      %s56 = sphi 0, %s56
      %s58 = sphi 0, %s56
      %s59 = sphi 0, %s58
      %s73 = sphi 0, %s59
      %s77 = sphi 0, %s77
      %s79 = sphi 0, %s77
      %s80 = sphi 0, %s79
      %s94 = sphi 0, %s80
      %s98 = sphi 0, %s98
      %s100 = sphi 0, %s98
      %s101 = sphi 0, %s100
      %s115 = sphi 0, %s101
      %s119 = sphi 0, %s119
      %s121 = sphi 0, %s119
      %s122 = sphi 0, %s121
      %s136 = sphi 0, %s122
      %s140 = sphi 0, %s140
      %s142 = sphi 0, %s140
      %s143 = sphi 0, %s142
      %s157 = sphi 0, %s143
      %s161 = sphi 0, %s161
      %s163 = sphi 0, %s161
      %s164 = sphi 0, %s163
      %s178 = sphi 0, %s164
      %s184 = sphi 0, %s186
      %s187 = sphi 0, %s184
      %s188 = sphi 0, %s187
      %s204 = sphi 0, %s188
    $region4: #{clip_encoder_forward.16} parent=1 // loop_header_branch
      %25 = sbr.rel (%p23) target = $region8
    $region5: #{clip_encoder_forward.16} parent=1 // loop_body
      %s27 = ssub.s32 %s22, 1
      %s28 = ssub.s32 %s22, 2
      %s29 = sadd.s32 %s22, 1
      %s30 = ssub.s32 %s22, %s29
      %p31 = scmp.eq.s32.totalorder %s30, 0
      %s33 = sadd.s32 %s32, 1
      %s34 = scalar_select %p31, %s32, %s33
      %p37 = pneg %p31
      %p38 = scmp.eq.s32.totalorder %s22, 1
      %p39 = por %p37, %p38
      %p40 = scmp.ne.s32.totalorder %s32, %s35
      %p41 = scmp.eq.s32.totalorder %s22, 0
      %p42 = por %p40, %p41
      %p43 = scmp.ne.s32.totalorder %s32, %s35
      %p44 = scmp.eq.s32.totalorder %s27, 1
      %p45 = por %p43, %p44
      %p46 = scmp.ne.s32.totalorder %s35, %s36
      %p47 = scmp.eq.s32.totalorder %s27, 0
      %p48 = por %p46, %p47
      %p49 = scmp.ne.s32.totalorder %s35, %s36
      %p50 = scmp.eq.s32.totalorder %s28, 1
      %p51 = por %p49, %p50
      %p53 = scmp.ne.s32.totalorder %s36, %s52
      %p54 = scmp.eq.s32.totalorder %s28, 0
      %p55 = por %p53, %p54
      %s57 = sadd.s32 %s56, 1
      %p60 = scmp.eq.s32.totalorder %s22, 1
      %p61 = scmp.ne.s32.totalorder %s56, %s58
      %p62 = scmp.eq.s32.totalorder %s22, 0
      %p63 = por %p61, %p62
      %p64 = scmp.ne.s32.totalorder %s56, %s58
      %p65 = scmp.eq.s32.totalorder %s27, 1
      %p66 = por %p64, %p65
      %p67 = scmp.ne.s32.totalorder %s58, %s59
      %p68 = scmp.eq.s32.totalorder %s27, 0
      %p69 = por %p67, %p68
      %p70 = scmp.ne.s32.totalorder %s58, %s59
      %p71 = scmp.eq.s32.totalorder %s28, 1
      %p72 = por %p70, %p71
      %p74 = scmp.ne.s32.totalorder %s59, %s73
      %p75 = scmp.eq.s32.totalorder %s28, 0
      %p76 = por %p74, %p75
      %s78 = sadd.s32 %s77, 1
      %p81 = scmp.eq.s32.totalorder %s22, 1
      %p82 = scmp.ne.s32.totalorder %s77, %s79
      %p83 = scmp.eq.s32.totalorder %s22, 0
      %p84 = por %p82, %p83
      %p85 = scmp.ne.s32.totalorder %s77, %s79
      %p86 = scmp.eq.s32.totalorder %s27, 1
      %p87 = por %p85, %p86
      %p88 = scmp.ne.s32.totalorder %s79, %s80
      %p89 = scmp.eq.s32.totalorder %s27, 0
      %p90 = por %p88, %p89
      %p91 = scmp.ne.s32.totalorder %s79, %s80
      %p92 = scmp.eq.s32.totalorder %s28, 1
      %p93 = por %p91, %p92
      %p95 = scmp.ne.s32.totalorder %s80, %s94
      %p96 = scmp.eq.s32.totalorder %s28, 0
      %p97 = por %p95, %p96
      %s99 = sadd.s32 %s98, 1
      %p102 = scmp.eq.s32.totalorder %s22, 1
      %p103 = scmp.ne.s32.totalorder %s98, %s100
      %p104 = scmp.eq.s32.totalorder %s22, 0
      %p105 = por %p103, %p104
      %p106 = scmp.ne.s32.totalorder %s98, %s100
      %p107 = scmp.eq.s32.totalorder %s27, 1
      %p108 = por %p106, %p107
      %p109 = scmp.ne.s32.totalorder %s100, %s101
      %p110 = scmp.eq.s32.totalorder %s27, 0
      %p111 = por %p109, %p110
      %p112 = scmp.ne.s32.totalorder %s100, %s101
      %p113 = scmp.eq.s32.totalorder %s28, 1
      %p114 = por %p112, %p113
      %p116 = scmp.ne.s32.totalorder %s101, %s115
      %p117 = scmp.eq.s32.totalorder %s28, 0
      %p118 = por %p116, %p117
      %s120 = sadd.s32 %s119, 1
      %p123 = scmp.eq.s32.totalorder %s22, 1
      %p124 = scmp.ne.s32.totalorder %s119, %s121
      %p125 = scmp.eq.s32.totalorder %s22, 0
      %p126 = por %p124, %p125
      %p127 = scmp.ne.s32.totalorder %s119, %s121
      %p128 = scmp.eq.s32.totalorder %s27, 1
      %p129 = por %p127, %p128
      %p130 = scmp.ne.s32.totalorder %s121, %s122
      %p131 = scmp.eq.s32.totalorder %s27, 0
      %p132 = por %p130, %p131
      %p133 = scmp.ne.s32.totalorder %s121, %s122
      %p134 = scmp.eq.s32.totalorder %s28, 1
      %p135 = por %p133, %p134
      %p137 = scmp.ne.s32.totalorder %s122, %s136
      %p138 = scmp.eq.s32.totalorder %s28, 0
      %p139 = por %p137, %p138
      %s141 = sadd.s32 %s140, 1
      %p144 = scmp.eq.s32.totalorder %s22, 1
      %p145 = scmp.ne.s32.totalorder %s140, %s142
      %p146 = scmp.eq.s32.totalorder %s22, 0
      %p147 = por %p145, %p146
      %p148 = scmp.ne.s32.totalorder %s140, %s142
      %p149 = scmp.eq.s32.totalorder %s27, 1
      %p150 = por %p148, %p149
      %p151 = scmp.ne.s32.totalorder %s142, %s143
      %p152 = scmp.eq.s32.totalorder %s27, 0
      %p153 = por %p151, %p152
      %p154 = scmp.ne.s32.totalorder %s142, %s143
      %p155 = scmp.eq.s32.totalorder %s28, 1
      %p156 = por %p154, %p155
      %p158 = scmp.ne.s32.totalorder %s143, %s157
      %p159 = scmp.eq.s32.totalorder %s28, 0
      %p160 = por %p158, %p159
      %s162 = sadd.s32 %s161, 1
      %p165 = scmp.eq.s32.totalorder %s22, 1
      %p166 = scmp.ne.s32.totalorder %s161, %s163
      %p167 = scmp.eq.s32.totalorder %s22, 0
      %p168 = por %p166, %p167
      %p169 = scmp.ne.s32.totalorder %s161, %s163
      %p170 = scmp.eq.s32.totalorder %s27, 1
      %p171 = por %p169, %p170
      %p172 = scmp.ne.s32.totalorder %s163, %s164
      %p173 = scmp.eq.s32.totalorder %s27, 0
      %p174 = por %p172, %p173
      %p175 = scmp.ne.s32.totalorder %s163, %s164
      %p176 = scmp.eq.s32.totalorder %s28, 1
      %p177 = por %p175, %p176
      %p179 = scmp.ne.s32.totalorder %s164, %s178
      %p180 = scmp.eq.s32.totalorder %s28, 0
      %p181 = por %p179, %p180
      %s182 = ssub.s32 %s22, %s29
      %p183 = scmp.eq.s32.totalorder %s182, 0
      %s185 = sadd.s32 %s184, 1
      %s186 = scalar_select %p183, %s184, %s185
      %p189 = pneg %p183
      %p190 = scmp.eq.s32.totalorder %s22, 1
      %p191 = por %p189, %p190
      %p192 = scmp.ne.s32.totalorder %s184, %s187
      %p193 = scmp.eq.s32.totalorder %s22, 0
      %p194 = por %p192, %p193
      %p195 = scmp.ne.s32.totalorder %s184, %s187
      %p196 = scmp.eq.s32.totalorder %s27, 1
      %p197 = por %p195, %p196
      %p198 = scmp.ne.s32.totalorder %s187, %s188
      %p199 = scmp.eq.s32.totalorder %s27, 0
      %p200 = por %p198, %p199
      %p201 = scmp.ne.s32.totalorder %s187, %s188
      %p202 = scmp.eq.s32.totalorder %s28, 1
      %p203 = por %p201, %p202
      %p205 = scmp.ne.s32.totalorder %s188, %s204
      %p206 = scmp.eq.s32.totalorder %s28, 0
      %p207 = por %p205, %p206
      %p208 = scmp.le.s32.totalorder 1, %s22
      %p209 = scmp.lt.s32.totalorder %s22, 3
      %p210 = pnand %p208, %p209
      %p211 = pneg %p210
      // Predicated region
      $region9: #{clip_encoder_forward.16} parent=5 // pred_check
        _
      $region10: #{clip_encoder_forward.16} parent=5 // pred_check_branch
        %213 = sbr.rel (%p210) target = $region12
      $region11: #{clip_encoder_forward.16} parent=5 // pred_region
        %s214 = ssub.s32 %s22, 1
        // Predicated region
        $region13: #{clip_encoder_forward.16} parent=11 // pred_check
          %p215 = pneg %p69
        $region14: #{clip_encoder_forward.16} parent=11 // pred_check_branch
          %217 = sbr.rel (%p215) target = $region16
        $region15: #{clip_encoder_forward.16} parent=11 // pred_region
          %s219 = ssub.s32 32, 32
          %220 = vsyncadd [#allocation6], %s219
          %s222 = sshll.u32 [#allocation5], 4
          %s223 = int_to_ptr.vmem [resolvable:$true] %s222
          %225 = dma.hbm_to_vmem [thread:$0]  %s1, 32, %s223, [#allocation6]
        $region16: #{clip_encoder_forward.16} parent=11 // pred_fallthru
          _
        // Predicated region
        $region17: #{clip_encoder_forward.16} parent=11 // pred_check
          %p226 = pneg %p90
        $region18: #{clip_encoder_forward.16} parent=11 // pred_check_branch
          %228 = sbr.rel (%p226) target = $region20
        $region19: #{clip_encoder_forward.16} parent=11 // pred_region
          %s230 = ssub.s32 32, 32
          %231 = vsyncadd [#allocation6], %s230
          %s233 = sshll.u32 [#allocation7], 4
          %s234 = int_to_ptr.vmem [resolvable:$true] %s233
          %236 = dma.hbm_to_vmem [thread:$0]  %s2, 32, %s234, [#allocation6]
        $region20: #{clip_encoder_forward.16} parent=11 // pred_fallthru
          _
        // Predicated region
        $region21: #{clip_encoder_forward.16} parent=11 // pred_check
          %p237 = pneg %p111
        $region22: #{clip_encoder_forward.16} parent=11 // pred_check_branch
          %239 = sbr.rel (%p237) target = $region24
        $region23: #{clip_encoder_forward.16} parent=11 // pred_region
          %s241 = ssub.s32 16384, 16384
          %242 = vsyncadd [#allocation9], %s241
          %s243 = sshll.u32 [#allocation8], 4
          %s244 = int_to_ptr.vmem [resolvable:$true] %s243
          %249 = dma.hbm_to_vmem [thread:$0]  %s3, 16384, %s244, [#allocation9], 512, 512, 32
        $region24: #{clip_encoder_forward.16} parent=11 // pred_fallthru
          _
        // Predicated region
        $region25: #{clip_encoder_forward.16} parent=11 // pred_check
          %p250 = pneg %p132
        $region26: #{clip_encoder_forward.16} parent=11 // pred_check_branch
          %252 = sbr.rel (%p250) target = $region28
        $region27: #{clip_encoder_forward.16} parent=11 // pred_region
          %s254 = ssub.s32 128, 128
          %255 = vsyncadd [#allocation9], %s254
          %s257 = sshll.u32 [#allocation10], 4
          %s258 = int_to_ptr.vmem [resolvable:$true] %s257
          %260 = dma.hbm_to_vmem [thread:$0]  %s4, 128, %s258, [#allocation9]
        $region28: #{clip_encoder_forward.16} parent=11 // pred_fallthru
          _
        // Predicated region
        $region29: #{clip_encoder_forward.16} parent=11 // pred_check
          %p261 = pneg %p153
        $region30: #{clip_encoder_forward.16} parent=11 // pred_check_branch
          %263 = sbr.rel (%p261) target = $region32
        $region31: #{clip_encoder_forward.16} parent=11 // pred_region
          %s265 = ssub.s32 16384, 16384
          %266 = vsyncadd [#allocation12], %s265
          %s267 = sshll.u32 [#allocation11], 4
          %s268 = int_to_ptr.vmem [resolvable:$true] %s267
          %273 = dma.hbm_to_vmem [thread:$0]  %s5, 16384, %s268, [#allocation12], 128, 128, 8
        $region32: #{clip_encoder_forward.16} parent=11 // pred_fallthru
          _
        // Predicated region
        $region33: #{clip_encoder_forward.16} parent=11 // pred_check
          %p274 = pneg %p174
        $region34: #{clip_encoder_forward.16} parent=11 // pred_check_branch
          %276 = sbr.rel (%p274) target = $region36
        $region35: #{clip_encoder_forward.16} parent=11 // pred_region
          %s278 = ssub.s32 32, 32
          %279 = vsyncadd [#allocation12], %s278
          %s281 = sshll.u32 [#allocation13], 4
          %s282 = int_to_ptr.vmem [resolvable:$true] %s281
          %284 = dma.hbm_to_vmem [thread:$0]  %s6, 32, %s282, [#allocation12]
        $region36: #{clip_encoder_forward.16} parent=11 // pred_fallthru
          _
      $region12: #{clip_encoder_forward.16} parent=5 // pred_fallthru
        _
      %p285 = scmp.lt.s32.totalorder %s22, 2
      // Predicated region
      $region37: #{clip_encoder_forward.16} parent=5 // pred_check
        %p286 = pneg %p285
      $region38: #{clip_encoder_forward.16} parent=5 // pred_check_branch
        %288 = sbr.rel (%p286) target = $region40
      $region39: #{clip_encoder_forward.16} parent=5 // pred_region
        // Predicated region
        $region41: #{clip_encoder_forward.16} parent=39 // pred_check
          %p289 = pneg %p42
        $region42: #{clip_encoder_forward.16} parent=39 // pred_check_branch
          %291 = sbr.rel (%p289) target = $region44
        $region43: #{clip_encoder_forward.16} parent=39 // pred_region
          %s292 = sand.u32 %s32, 1
          %s293 = scalar_lea.sflag [#allocation3], %s292
          %s294 = sand.u32 %s32, 1
          %s295 = smul.addr %s294, 8
          %s296 = scalar_lea.vmem [#allocation2], %s295
          %s298 = ssub.s32 128, 128
          %299 = vsyncadd %s293, %s298
          %s300 = smul.addr %s22, 2
          %s301 = smul.addr %s300, 64
          %s302 = scalar_lea.hbm %s0, %s301
          %s304 = sshll.u32 %s296, 4
          %s305 = int_to_ptr.vmem [resolvable:$true] %s304
          %307 = dma.hbm_to_vmem [thread:$0]  %s302, 128, %s305, %s293
        $region44: #{clip_encoder_forward.16} parent=39 // pred_fallthru
          _
      $region40: #{clip_encoder_forward.16} parent=5 // pred_fallthru
        _
      %p308 = scmp.le.s32.totalorder 1, %s22
      %p309 = scmp.lt.s32.totalorder %s22, 3
      %p310 = pnand %p308, %p309
      %p311 = pneg %p310
      // Predicated region
      $region45: #{clip_encoder_forward.16} parent=5 // pred_check
        _
      $region46: #{clip_encoder_forward.16} parent=5 // pred_check_branch
        %313 = sbr.rel (%p310) target = $region48
      $region47: #{clip_encoder_forward.16} parent=5 // pred_region
        %s314 = ssub.s32 %s22, 1
        %s315 = sand.u32 %s35, 1
        %s316 = scalar_lea.sflag [#allocation3], %s315
        %s317 = sand.u32 %s35, 1
        %s318 = smul.addr %s317, 8
        %s319 = scalar_lea.vmem [#allocation2], %s318
        // Predicated region
        $region49: #{clip_encoder_forward.16} parent=47 // pred_check
          %p320 = pneg %p48
        $region50: #{clip_encoder_forward.16} parent=47 // pred_check_branch
          %322 = sbr.rel (%p320) target = $region52
        $region51: #{clip_encoder_forward.16} parent=47 // pred_region
          %323 = dma.done %s316, 128
        $region52: #{clip_encoder_forward.16} parent=47 // pred_fallthru
          _
        // Predicated region
        $region53: #{clip_encoder_forward.16} parent=47 // pred_check
          %p324 = pneg %p69
        $region54: #{clip_encoder_forward.16} parent=47 // pred_check_branch
          %326 = sbr.rel (%p324) target = $region56
        $region55: #{clip_encoder_forward.16} parent=47 // pred_region
          %327 = dma.done [#allocation6], 32
        $region56: #{clip_encoder_forward.16} parent=47 // pred_fallthru
          _
        // Predicated region
        $region57: #{clip_encoder_forward.16} parent=47 // pred_check
          %p328 = pneg %p90
        $region58: #{clip_encoder_forward.16} parent=47 // pred_check_branch
          %330 = sbr.rel (%p328) target = $region60
        $region59: #{clip_encoder_forward.16} parent=47 // pred_region
          %331 = dma.done [#allocation6], 32
        $region60: #{clip_encoder_forward.16} parent=47 // pred_fallthru
          _
        // Predicated region
        $region61: #{clip_encoder_forward.16} parent=47 // pred_check
          %p332 = pneg %p111
        $region62: #{clip_encoder_forward.16} parent=47 // pred_check_branch
          %334 = sbr.rel (%p332) target = $region64
        $region63: #{clip_encoder_forward.16} parent=47 // pred_region
          %335 = dma.done [#allocation9], 16384
        $region64: #{clip_encoder_forward.16} parent=47 // pred_fallthru
          _
        // Predicated region
        $region65: #{clip_encoder_forward.16} parent=47 // pred_check
          %p336 = pneg %p132
        $region66: #{clip_encoder_forward.16} parent=47 // pred_check_branch
          %338 = sbr.rel (%p336) target = $region68
        $region67: #{clip_encoder_forward.16} parent=47 // pred_region
          %339 = dma.done [#allocation9], 128
        $region68: #{clip_encoder_forward.16} parent=47 // pred_fallthru
          _
        // Predicated region
        $region69: #{clip_encoder_forward.16} parent=47 // pred_check
          %p340 = pneg %p153
        $region70: #{clip_encoder_forward.16} parent=47 // pred_check_branch
          %342 = sbr.rel (%p340) target = $region72
        $region71: #{clip_encoder_forward.16} parent=47 // pred_region
          %343 = dma.done [#allocation12], 16384
        $region72: #{clip_encoder_forward.16} parent=47 // pred_fallthru
          _
        // Predicated region
        $region73: #{clip_encoder_forward.16} parent=47 // pred_check
          %p344 = pneg %p174
        $region74: #{clip_encoder_forward.16} parent=47 // pred_check_branch
          %346 = sbr.rel (%p344) target = $region76
        $region75: #{clip_encoder_forward.16} parent=47 // pred_region
          %347 = dma.done [#allocation12], 32
        $region76: #{clip_encoder_forward.16} parent=47 // pred_fallthru
          _
        %s348 = sand.u32 %s35, 1
        %s349 = scalar_lea.sflag [#allocation3], %s348
        %s350 = sand.u32 %s35, 1
        %s351 = smul.addr %s350, 8
        %s352 = scalar_lea.vmem [#allocation2], %s351
        %p353 = pneg %p48
        %p354 = pneg %p45
        %p355 = pneg %p69
        %p356 = pneg %p66
        %p357 = pneg %p90
        %p358 = pneg %p87
        %p359 = pneg %p111
        %p360 = pneg %p108
        %p361 = pneg %p132
        %p362 = pneg %p129
        %p363 = pneg %p153
        %p364 = pneg %p150
        %p365 = pneg %p174
        %p366 = pneg %p171
        %p367 = pneg %p200
        %p368 = pneg %p197
        %s369 = sand.u32 %s187, 1
        %s370 = scalar_lea.sflag [#allocation4], %s369
        %s371 = sand.u32 %s187, 1
        %s372 = smul.addr %s371, 8
        %s373 = scalar_lea.vmem [#allocation14], %s372
        %v374 = vld [vmem:[%s319] sm:$0xff]
        %v375 = vunpack.c.l.bf16 %v374
        %v376 = vunpack.c.h.bf16 %v374
        %v377 = vld [vmem:[#allocation5] sm:$0x3]
        %v378 = vld [vmem:[#allocation7] sm:$0x3]
        %v379 = vadd.f32 %v375, %v376
        %380 = vadd.xlane.f32.xlu0 %v379
        %v381 = vpop.xlane.xlu0 %380
        %v382 = vrcp.pop 256.0
        %v383 = vmul.f32 %v381, %v382
        %v384 = vsub.f32 %v375, %v383
        %v385 = vsub.f32 %v376, %v383
        %v386 = vmul.f32 %v384, %v384
        %v387 = vmul.f32 %v385, %v385
        %v388 = vadd.f32 %v386, %v387
        %389 = vadd.xlane.f32.xlu0 %v388
        %v390 = vpop.xlane.xlu0 %389
        %v391 = vmul.f32 %v390, %v382
        %v392 = vadd.f32 %v391, 1e-05
        %v393 = vrsqrt.pop %v392
        %v394 = vmul.f32 %v384, %v393
        %v395 = vmul.f32 %v385, %v393
        %v397 = vlaneseq
        %v398 = vshrl.u32 %v397, 7
        %v399 = vsub.s32 0, %v398
        %v400 = vrot.slane %v377, %v399
        %v401 = vlaneseq
        %v402 = vshrl.u32 %v401, 7
        %v403 = vsub.s32 1, %v402
        %v404 = vrot.slane %v377, %v403
        %v407 = vmul.f32 %v394, %v400
        %v408 = vmul.f32 %v395, %v404
        %v410 = vlaneseq
        %v411 = vshrl.u32 %v410, 7
        %v412 = vsub.s32 0, %v411
        %v413 = vrot.slane %v378, %v412
        %v414 = vlaneseq
        %v415 = vshrl.u32 %v414, 7
        %v416 = vsub.s32 1, %v415
        %v417 = vrot.slane %v378, %v416
        %v420 = vadd.f32 %v407, %v413
        %v421 = vadd.f32 %v408, %v417
        %v422 = vpack.c.bf16 %v420, %v420
        %v423 = vpack.c.bf16 %v421, %v421
        %v424 = vld [vmem:[#allocation8] sm:$0xff]
        %v425 = vld [vmem:[#allocation8 + $0x8] sm:$0xff]
        %v426 = vld [vmem:[#allocation8 + $0x10] sm:$0xff]
        %v427 = vld [vmem:[#allocation8 + $0x18] sm:$0xff]
        %v428 = vld [vmem:[#allocation8 + $0x20] sm:$0xff]
        %v429 = vld [vmem:[#allocation8 + $0x28] sm:$0xff]
        %v430 = vld [vmem:[#allocation8 + $0x30] sm:$0xff]
        %v431 = vld [vmem:[#allocation8 + $0x38] sm:$0xff]
        %v432 = vld [vmem:[#allocation8 + $0x40] sm:$0xff]
        %v433 = vld [vmem:[#allocation8 + $0x48] sm:$0xff]
        %v434 = vld [vmem:[#allocation8 + $0x50] sm:$0xff]
        %v435 = vld [vmem:[#allocation8 + $0x58] sm:$0xff]
        %v436 = vld [vmem:[#allocation8 + $0x60] sm:$0xff]
        %v437 = vld [vmem:[#allocation8 + $0x68] sm:$0xff]
        %v438 = vld [vmem:[#allocation8 + $0x70] sm:$0xff]
        %v439 = vld [vmem:[#allocation8 + $0x78] sm:$0xff]
        %v440 = vld [vmem:[#allocation8 + $0x80] sm:$0xff]
        %v441 = vld [vmem:[#allocation8 + $0x88] sm:$0xff]
        %v442 = vld [vmem:[#allocation8 + $0x90] sm:$0xff]
        %v443 = vld [vmem:[#allocation8 + $0x98] sm:$0xff]
        %v444 = vld [vmem:[#allocation8 + $0xa0] sm:$0xff]
        %v445 = vld [vmem:[#allocation8 + $0xa8] sm:$0xff]
        %v446 = vld [vmem:[#allocation8 + $0xb0] sm:$0xff]
        %v447 = vld [vmem:[#allocation8 + $0xb8] sm:$0xff]
        %v448 = vld [vmem:[#allocation8 + $0xc0] sm:$0xff]
        %v449 = vld [vmem:[#allocation8 + $0xc8] sm:$0xff]
        %v450 = vld [vmem:[#allocation8 + $0xd0] sm:$0xff]
        %v451 = vld [vmem:[#allocation8 + $0xd8] sm:$0xff]
        %v452 = vld [vmem:[#allocation8 + $0xe0] sm:$0xff]
        %v453 = vld [vmem:[#allocation8 + $0xe8] sm:$0xff]
        %v454 = vld [vmem:[#allocation8 + $0xf0] sm:$0xff]
        %v455 = vld [vmem:[#allocation8 + $0xf8] sm:$0xff]
        %v456 = vld [vmem:[#allocation8 + $0x100] sm:$0xff]
        %v457 = vld [vmem:[#allocation8 + $0x108] sm:$0xff]
        %v458 = vld [vmem:[#allocation8 + $0x110] sm:$0xff]
        %v459 = vld [vmem:[#allocation8 + $0x118] sm:$0xff]
        %v460 = vld [vmem:[#allocation8 + $0x120] sm:$0xff]
        %v461 = vld [vmem:[#allocation8 + $0x128] sm:$0xff]
        %v462 = vld [vmem:[#allocation8 + $0x130] sm:$0xff]
        %v463 = vld [vmem:[#allocation8 + $0x138] sm:$0xff]
        %v464 = vld [vmem:[#allocation8 + $0x140] sm:$0xff]
        %v465 = vld [vmem:[#allocation8 + $0x148] sm:$0xff]
        %v466 = vld [vmem:[#allocation8 + $0x150] sm:$0xff]
        %v467 = vld [vmem:[#allocation8 + $0x158] sm:$0xff]
        %v468 = vld [vmem:[#allocation8 + $0x160] sm:$0xff]
        %v469 = vld [vmem:[#allocation8 + $0x168] sm:$0xff]
        %v470 = vld [vmem:[#allocation8 + $0x170] sm:$0xff]
        %v471 = vld [vmem:[#allocation8 + $0x178] sm:$0xff]
        %v472 = vld [vmem:[#allocation8 + $0x180] sm:$0xff]
        %v473 = vld [vmem:[#allocation8 + $0x188] sm:$0xff]
        %v474 = vld [vmem:[#allocation8 + $0x190] sm:$0xff]
        %v475 = vld [vmem:[#allocation8 + $0x198] sm:$0xff]
        %v476 = vld [vmem:[#allocation8 + $0x1a0] sm:$0xff]
        %v477 = vld [vmem:[#allocation8 + $0x1a8] sm:$0xff]
        %v478 = vld [vmem:[#allocation8 + $0x1b0] sm:$0xff]
        %v479 = vld [vmem:[#allocation8 + $0x1b8] sm:$0xff]
        %v480 = vld [vmem:[#allocation8 + $0x1c0] sm:$0xff]
        %v481 = vld [vmem:[#allocation8 + $0x1c8] sm:$0xff]
        %v482 = vld [vmem:[#allocation8 + $0x1d0] sm:$0xff]
        %v483 = vld [vmem:[#allocation8 + $0x1d8] sm:$0xff]
        %v484 = vld [vmem:[#allocation8 + $0x1e0] sm:$0xff]
        %v485 = vld [vmem:[#allocation8 + $0x1e8] sm:$0xff]
        %v486 = vld [vmem:[#allocation8 + $0x1f0] sm:$0xff]
        %v487 = vld [vmem:[#allocation8 + $0x1f8] sm:$0xff]
        %v488 = vld [vmem:[#allocation8 + $0x200] sm:$0xff]
        %v489 = vld [vmem:[#allocation8 + $0x208] sm:$0xff]
        %v490 = vld [vmem:[#allocation8 + $0x210] sm:$0xff]
        %v491 = vld [vmem:[#allocation8 + $0x218] sm:$0xff]
        %v492 = vld [vmem:[#allocation8 + $0x220] sm:$0xff]
        %v493 = vld [vmem:[#allocation8 + $0x228] sm:$0xff]
        %v494 = vld [vmem:[#allocation8 + $0x230] sm:$0xff]
        %v495 = vld [vmem:[#allocation8 + $0x238] sm:$0xff]
        %v496 = vld [vmem:[#allocation8 + $0x240] sm:$0xff]
        %v497 = vld [vmem:[#allocation8 + $0x248] sm:$0xff]
        %v498 = vld [vmem:[#allocation8 + $0x250] sm:$0xff]
        %v499 = vld [vmem:[#allocation8 + $0x258] sm:$0xff]
        %v500 = vld [vmem:[#allocation8 + $0x260] sm:$0xff]
        %v501 = vld [vmem:[#allocation8 + $0x268] sm:$0xff]
        %v502 = vld [vmem:[#allocation8 + $0x270] sm:$0xff]
        %v503 = vld [vmem:[#allocation8 + $0x278] sm:$0xff]
        %v504 = vld [vmem:[#allocation8 + $0x280] sm:$0xff]
        %v505 = vld [vmem:[#allocation8 + $0x288] sm:$0xff]
        %v506 = vld [vmem:[#allocation8 + $0x290] sm:$0xff]
        %v507 = vld [vmem:[#allocation8 + $0x298] sm:$0xff]
        %v508 = vld [vmem:[#allocation8 + $0x2a0] sm:$0xff]
        %v509 = vld [vmem:[#allocation8 + $0x2a8] sm:$0xff]
        %v510 = vld [vmem:[#allocation8 + $0x2b0] sm:$0xff]
        %v511 = vld [vmem:[#allocation8 + $0x2b8] sm:$0xff]
        %v512 = vld [vmem:[#allocation8 + $0x2c0] sm:$0xff]
        %v513 = vld [vmem:[#allocation8 + $0x2c8] sm:$0xff]
        %v514 = vld [vmem:[#allocation8 + $0x2d0] sm:$0xff]
        %v515 = vld [vmem:[#allocation8 + $0x2d8] sm:$0xff]
        %v516 = vld [vmem:[#allocation8 + $0x2e0] sm:$0xff]
        %v517 = vld [vmem:[#allocation8 + $0x2e8] sm:$0xff]
        %v518 = vld [vmem:[#allocation8 + $0x2f0] sm:$0xff]
        %v519 = vld [vmem:[#allocation8 + $0x2f8] sm:$0xff]
        %v520 = vld [vmem:[#allocation8 + $0x300] sm:$0xff]
        %v521 = vld [vmem:[#allocation8 + $0x308] sm:$0xff]
        %v522 = vld [vmem:[#allocation8 + $0x310] sm:$0xff]
        %v523 = vld [vmem:[#allocation8 + $0x318] sm:$0xff]
        %v524 = vld [vmem:[#allocation8 + $0x320] sm:$0xff]
        %v525 = vld [vmem:[#allocation8 + $0x328] sm:$0xff]
        %v526 = vld [vmem:[#allocation8 + $0x330] sm:$0xff]
        %v527 = vld [vmem:[#allocation8 + $0x338] sm:$0xff]
        %v528 = vld [vmem:[#allocation8 + $0x340] sm:$0xff]
        %v529 = vld [vmem:[#allocation8 + $0x348] sm:$0xff]
        %v530 = vld [vmem:[#allocation8 + $0x350] sm:$0xff]
        %v531 = vld [vmem:[#allocation8 + $0x358] sm:$0xff]
        %v532 = vld [vmem:[#allocation8 + $0x360] sm:$0xff]
        %v533 = vld [vmem:[#allocation8 + $0x368] sm:$0xff]
        %v534 = vld [vmem:[#allocation8 + $0x370] sm:$0xff]
        %v535 = vld [vmem:[#allocation8 + $0x378] sm:$0xff]
        %v536 = vld [vmem:[#allocation8 + $0x380] sm:$0xff]
        %v537 = vld [vmem:[#allocation8 + $0x388] sm:$0xff]
        %v538 = vld [vmem:[#allocation8 + $0x390] sm:$0xff]
        %v539 = vld [vmem:[#allocation8 + $0x398] sm:$0xff]
        %v540 = vld [vmem:[#allocation8 + $0x3a0] sm:$0xff]
        %v541 = vld [vmem:[#allocation8 + $0x3a8] sm:$0xff]
        %v542 = vld [vmem:[#allocation8 + $0x3b0] sm:$0xff]
        %v543 = vld [vmem:[#allocation8 + $0x3b8] sm:$0xff]
        %v544 = vld [vmem:[#allocation8 + $0x3c0] sm:$0xff]
        %v545 = vld [vmem:[#allocation8 + $0x3c8] sm:$0xff]
        %v546 = vld [vmem:[#allocation8 + $0x3d0] sm:$0xff]
        %v547 = vld [vmem:[#allocation8 + $0x3d8] sm:$0xff]
        %v548 = vld [vmem:[#allocation8 + $0x3e0] sm:$0xff]
        %v549 = vld [vmem:[#allocation8 + $0x3e8] sm:$0xff]
        %v550 = vld [vmem:[#allocation8 + $0x3f0] sm:$0xff]
        %v551 = vld [vmem:[#allocation8 + $0x3f8] sm:$0xff]
        %v552 = vld [vmem:[#allocation10] sm:$0xff]
        %v554 = vlaneseq
        %v555 = vshrl.u32 %v554, 7
        %v556 = vsub.s32 0, %v555
        %v557 = vrot.slane %v552, %v556
        %v558 = vlaneseq
        %v559 = vshrl.u32 %v558, 7
        %v560 = vsub.s32 1, %v559
        %v561 = vrot.slane %v552, %v560
        %v562 = vlaneseq
        %v563 = vshrl.u32 %v562, 7
        %v564 = vsub.s32 2, %v563
        %v565 = vrot.slane %v552, %v564
        %v566 = vlaneseq
        %v567 = vshrl.u32 %v566, 7
        %v568 = vsub.s32 3, %v567
        %v569 = vrot.slane %v552, %v568
        %v570 = vlaneseq
        %v571 = vshrl.u32 %v570, 7
        %v572 = vsub.s32 4, %v571
        %v573 = vrot.slane %v552, %v572
        %v574 = vlaneseq
        %v575 = vshrl.u32 %v574, 7
        %v576 = vsub.s32 5, %v575
        %v577 = vrot.slane %v552, %v576
        %v578 = vlaneseq
        %v579 = vshrl.u32 %v578, 7
        %v580 = vsub.s32 6, %v579
        %v581 = vrot.slane %v552, %v580
        %v582 = vlaneseq
        %v583 = vshrl.u32 %v582, 7
        %v584 = vsub.s32 7, %v583
        %v585 = vrot.slane %v552, %v584
        %v722 = vunpack.c.l.b16 %v424
        %v723 = vunpack.c.h.b16 %v424
        %v724 = vunpack.c.l.b16 %v425
        %v725 = vunpack.c.h.b16 %v425
        %v726 = vunpack.c.l.b16 %v426
        %v727 = vunpack.c.h.b16 %v426
        %v728 = vunpack.c.l.b16 %v427
        %v729 = vunpack.c.h.b16 %v427
        %v730 = vunpack.c.l.b16 %v428
        %v731 = vunpack.c.h.b16 %v428
        %v732 = vunpack.c.l.b16 %v429
        %v733 = vunpack.c.h.b16 %v429
        %v734 = vunpack.c.l.b16 %v430
        %v735 = vunpack.c.h.b16 %v430
        %v736 = vunpack.c.l.b16 %v431
        %v737 = vunpack.c.h.b16 %v431
        %v738 = vunpack.c.l.b16 %v432
        %v739 = vunpack.c.h.b16 %v432
        %v740 = vunpack.c.l.b16 %v433
        %v741 = vunpack.c.h.b16 %v433
        %v742 = vunpack.c.l.b16 %v434
        %v743 = vunpack.c.h.b16 %v434
        %v744 = vunpack.c.l.b16 %v435
        %v745 = vunpack.c.h.b16 %v435
        %v746 = vunpack.c.l.b16 %v436
        %v747 = vunpack.c.h.b16 %v436
        %v748 = vunpack.c.l.b16 %v437
        %v749 = vunpack.c.h.b16 %v437
        %v750 = vunpack.c.l.b16 %v438
        %v751 = vunpack.c.h.b16 %v438
        %v752 = vunpack.c.l.b16 %v439
        %v753 = vunpack.c.h.b16 %v439
        %v754 = vunpack.c.l.b16 %v440
        %v755 = vunpack.c.h.b16 %v440
        %v756 = vunpack.c.l.b16 %v441
        %v757 = vunpack.c.h.b16 %v441
        %v758 = vunpack.c.l.b16 %v442
        %v759 = vunpack.c.h.b16 %v442
        %v760 = vunpack.c.l.b16 %v443
        %v761 = vunpack.c.h.b16 %v443
        %v762 = vunpack.c.l.b16 %v444
        %v763 = vunpack.c.h.b16 %v444
        %v764 = vunpack.c.l.b16 %v445
        %v765 = vunpack.c.h.b16 %v445
        %v766 = vunpack.c.l.b16 %v446
        %v767 = vunpack.c.h.b16 %v446
        %v768 = vunpack.c.l.b16 %v447
        %v769 = vunpack.c.h.b16 %v447
        %v770 = vunpack.c.l.b16 %v448
        %v771 = vunpack.c.h.b16 %v448
        %v772 = vunpack.c.l.b16 %v449
        %v773 = vunpack.c.h.b16 %v449
        %v774 = vunpack.c.l.b16 %v450
        %v775 = vunpack.c.h.b16 %v450
        %v776 = vunpack.c.l.b16 %v451
        %v777 = vunpack.c.h.b16 %v451
        %v778 = vunpack.c.l.b16 %v452
        %v779 = vunpack.c.h.b16 %v452
        %v780 = vunpack.c.l.b16 %v453
        %v781 = vunpack.c.h.b16 %v453
        %v782 = vunpack.c.l.b16 %v454
        %v783 = vunpack.c.h.b16 %v454
        %v784 = vunpack.c.l.b16 %v455
        %v785 = vunpack.c.h.b16 %v455
        %v786 = vunpack.c.l.b16 %v456
        %v787 = vunpack.c.h.b16 %v456
        %v788 = vunpack.c.l.b16 %v457
        %v789 = vunpack.c.h.b16 %v457
        %v790 = vunpack.c.l.b16 %v458
        %v791 = vunpack.c.h.b16 %v458
        %v792 = vunpack.c.l.b16 %v459
        %v793 = vunpack.c.h.b16 %v459
        %v794 = vunpack.c.l.b16 %v460
        %v795 = vunpack.c.h.b16 %v460
        %v796 = vunpack.c.l.b16 %v461
        %v797 = vunpack.c.h.b16 %v461
        %v798 = vunpack.c.l.b16 %v462
        %v799 = vunpack.c.h.b16 %v462
        %v800 = vunpack.c.l.b16 %v463
        %v801 = vunpack.c.h.b16 %v463
        %v802 = vunpack.c.l.b16 %v464
        %v803 = vunpack.c.h.b16 %v464
        %v804 = vunpack.c.l.b16 %v465
        %v805 = vunpack.c.h.b16 %v465
        %v806 = vunpack.c.l.b16 %v466
        %v807 = vunpack.c.h.b16 %v466
        %v808 = vunpack.c.l.b16 %v467
        %v809 = vunpack.c.h.b16 %v467
        %v810 = vunpack.c.l.b16 %v468
        %v811 = vunpack.c.h.b16 %v468
        %v812 = vunpack.c.l.b16 %v469
        %v813 = vunpack.c.h.b16 %v469
        %v814 = vunpack.c.l.b16 %v470
        %v815 = vunpack.c.h.b16 %v470
        %v816 = vunpack.c.l.b16 %v471
        %v817 = vunpack.c.h.b16 %v471
        %v818 = vunpack.c.l.b16 %v472
        %v819 = vunpack.c.h.b16 %v472
        %v820 = vunpack.c.l.b16 %v473
        %v821 = vunpack.c.h.b16 %v473
        %v822 = vunpack.c.l.b16 %v474
        %v823 = vunpack.c.h.b16 %v474
        %v824 = vunpack.c.l.b16 %v475
        %v825 = vunpack.c.h.b16 %v475
        %v826 = vunpack.c.l.b16 %v476
        %v827 = vunpack.c.h.b16 %v476
        %v828 = vunpack.c.l.b16 %v477
        %v829 = vunpack.c.h.b16 %v477
        %v830 = vunpack.c.l.b16 %v478
        %v831 = vunpack.c.h.b16 %v478
        %v832 = vunpack.c.l.b16 %v479
        %v833 = vunpack.c.h.b16 %v479
        %v834 = vunpack.c.l.b16 %v480
        %v835 = vunpack.c.h.b16 %v480
        %v836 = vunpack.c.l.b16 %v481
        %v837 = vunpack.c.h.b16 %v481
        %v838 = vunpack.c.l.b16 %v482
        %v839 = vunpack.c.h.b16 %v482
        %v840 = vunpack.c.l.b16 %v483
        %v841 = vunpack.c.h.b16 %v483
        %v842 = vunpack.c.l.b16 %v484
        %v843 = vunpack.c.h.b16 %v484
        %v844 = vunpack.c.l.b16 %v485
        %v845 = vunpack.c.h.b16 %v485
        %v846 = vunpack.c.l.b16 %v486
        %v847 = vunpack.c.h.b16 %v486
        %v848 = vunpack.c.l.b16 %v487
        %v849 = vunpack.c.h.b16 %v487
        %v850 = vunpack.c.l.b16 %v488
        %v851 = vunpack.c.h.b16 %v488
        %v852 = vunpack.c.l.b16 %v489
        %v853 = vunpack.c.h.b16 %v489
        %v854 = vunpack.c.l.b16 %v490
        %v855 = vunpack.c.h.b16 %v490
        %v856 = vunpack.c.l.b16 %v491
        %v857 = vunpack.c.h.b16 %v491
        %v858 = vunpack.c.l.b16 %v492
        %v859 = vunpack.c.h.b16 %v492
        %v860 = vunpack.c.l.b16 %v493
        %v861 = vunpack.c.h.b16 %v493
        %v862 = vunpack.c.l.b16 %v494
        %v863 = vunpack.c.h.b16 %v494
        %v864 = vunpack.c.l.b16 %v495
        %v865 = vunpack.c.h.b16 %v495
        %v866 = vunpack.c.l.b16 %v496
        %v867 = vunpack.c.h.b16 %v496
        %v868 = vunpack.c.l.b16 %v497
        %v869 = vunpack.c.h.b16 %v497
        %v870 = vunpack.c.l.b16 %v498
        %v871 = vunpack.c.h.b16 %v498
        %v872 = vunpack.c.l.b16 %v499
        %v873 = vunpack.c.h.b16 %v499
        %v874 = vunpack.c.l.b16 %v500
        %v875 = vunpack.c.h.b16 %v500
        %v876 = vunpack.c.l.b16 %v501
        %v877 = vunpack.c.h.b16 %v501
        %v878 = vunpack.c.l.b16 %v502
        %v879 = vunpack.c.h.b16 %v502
        %v880 = vunpack.c.l.b16 %v503
        %v881 = vunpack.c.h.b16 %v503
        %v882 = vunpack.c.l.b16 %v504
        %v883 = vunpack.c.h.b16 %v504
        %v884 = vunpack.c.l.b16 %v505
        %v885 = vunpack.c.h.b16 %v505
        %v886 = vunpack.c.l.b16 %v506
        %v887 = vunpack.c.h.b16 %v506
        %v888 = vunpack.c.l.b16 %v507
        %v889 = vunpack.c.h.b16 %v507
        %v890 = vunpack.c.l.b16 %v508
        %v891 = vunpack.c.h.b16 %v508
        %v892 = vunpack.c.l.b16 %v509
        %v893 = vunpack.c.h.b16 %v509
        %v894 = vunpack.c.l.b16 %v510
        %v895 = vunpack.c.h.b16 %v510
        %v896 = vunpack.c.l.b16 %v511
        %v897 = vunpack.c.h.b16 %v511
        %v898 = vunpack.c.l.b16 %v512
        %v899 = vunpack.c.h.b16 %v512
        %v900 = vunpack.c.l.b16 %v513
        %v901 = vunpack.c.h.b16 %v513
        %v902 = vunpack.c.l.b16 %v514
        %v903 = vunpack.c.h.b16 %v514
        %v904 = vunpack.c.l.b16 %v515
        %v905 = vunpack.c.h.b16 %v515
        %v906 = vunpack.c.l.b16 %v516
        %v907 = vunpack.c.h.b16 %v516
        %v908 = vunpack.c.l.b16 %v517
        %v909 = vunpack.c.h.b16 %v517
        %v910 = vunpack.c.l.b16 %v518
        %v911 = vunpack.c.h.b16 %v518
        %v912 = vunpack.c.l.b16 %v519
        %v913 = vunpack.c.h.b16 %v519
        %v914 = vunpack.c.l.b16 %v520
        %v915 = vunpack.c.h.b16 %v520
        %v916 = vunpack.c.l.b16 %v521
        %v917 = vunpack.c.h.b16 %v521
        %v918 = vunpack.c.l.b16 %v522
        %v919 = vunpack.c.h.b16 %v522
        %v920 = vunpack.c.l.b16 %v523
        %v921 = vunpack.c.h.b16 %v523
        %v922 = vunpack.c.l.b16 %v524
        %v923 = vunpack.c.h.b16 %v524
        %v924 = vunpack.c.l.b16 %v525
        %v925 = vunpack.c.h.b16 %v525
        %v926 = vunpack.c.l.b16 %v526
        %v927 = vunpack.c.h.b16 %v526
        %v928 = vunpack.c.l.b16 %v527
        %v929 = vunpack.c.h.b16 %v527
        %v930 = vunpack.c.l.b16 %v528
        %v931 = vunpack.c.h.b16 %v528
        %v932 = vunpack.c.l.b16 %v529
        %v933 = vunpack.c.h.b16 %v529
        %v934 = vunpack.c.l.b16 %v530
        %v935 = vunpack.c.h.b16 %v530
        %v936 = vunpack.c.l.b16 %v531
        %v937 = vunpack.c.h.b16 %v531
        %v938 = vunpack.c.l.b16 %v532
        %v939 = vunpack.c.h.b16 %v532
        %v940 = vunpack.c.l.b16 %v533
        %v941 = vunpack.c.h.b16 %v533
        %v942 = vunpack.c.l.b16 %v534
        %v943 = vunpack.c.h.b16 %v534
        %v944 = vunpack.c.l.b16 %v535
        %v945 = vunpack.c.h.b16 %v535
        %v946 = vunpack.c.l.b16 %v536
        %v947 = vunpack.c.h.b16 %v536
        %v948 = vunpack.c.l.b16 %v537
        %v949 = vunpack.c.h.b16 %v537
        %v950 = vunpack.c.l.b16 %v538
        %v951 = vunpack.c.h.b16 %v538
        %v952 = vunpack.c.l.b16 %v539
        %v953 = vunpack.c.h.b16 %v539
        %v954 = vunpack.c.l.b16 %v540
        %v955 = vunpack.c.h.b16 %v540
        %v956 = vunpack.c.l.b16 %v541
        %v957 = vunpack.c.h.b16 %v541
        %v958 = vunpack.c.l.b16 %v542
        %v959 = vunpack.c.h.b16 %v542
        %v960 = vunpack.c.l.b16 %v543
        %v961 = vunpack.c.h.b16 %v543
        %v962 = vunpack.c.l.b16 %v544
        %v963 = vunpack.c.h.b16 %v544
        %v964 = vunpack.c.l.b16 %v545
        %v965 = vunpack.c.h.b16 %v545
        %v966 = vunpack.c.l.b16 %v546
        %v967 = vunpack.c.h.b16 %v546
        %v968 = vunpack.c.l.b16 %v547
        %v969 = vunpack.c.h.b16 %v547
        %v970 = vunpack.c.l.b16 %v548
        %v971 = vunpack.c.h.b16 %v548
        %v972 = vunpack.c.l.b16 %v549
        %v973 = vunpack.c.h.b16 %v549
        %v974 = vunpack.c.l.b16 %v550
        %v975 = vunpack.c.h.b16 %v550
        %v976 = vunpack.c.l.b16 %v551
        %v977 = vunpack.c.h.b16 %v551
        %v978 = vpack.c.b16 %v730, %v722
        %v979 = vpack.c.b16 %v731, %v723
        %v980 = vpack.c.b16 %v732, %v724
        %v981 = vpack.c.b16 %v733, %v725
        %v982 = vpack.c.b16 %v734, %v726
        %v983 = vpack.c.b16 %v735, %v727
        %v984 = vpack.c.b16 %v736, %v728
        %v985 = vpack.c.b16 %v737, %v729
        %v986 = vpack.c.b16 %v746, %v738
        %v987 = vpack.c.b16 %v747, %v739
        %v988 = vpack.c.b16 %v748, %v740
        %v989 = vpack.c.b16 %v749, %v741
        %v990 = vpack.c.b16 %v750, %v742
        %v991 = vpack.c.b16 %v751, %v743
        %v992 = vpack.c.b16 %v752, %v744
        %v993 = vpack.c.b16 %v753, %v745
        %v994 = vpack.c.b16 %v762, %v754
        %v995 = vpack.c.b16 %v763, %v755
        %v996 = vpack.c.b16 %v764, %v756
        %v997 = vpack.c.b16 %v765, %v757
        %v998 = vpack.c.b16 %v766, %v758
        %v999 = vpack.c.b16 %v767, %v759
        %v1000 = vpack.c.b16 %v768, %v760
        %v1001 = vpack.c.b16 %v769, %v761
        %v1002 = vpack.c.b16 %v778, %v770
        %v1003 = vpack.c.b16 %v779, %v771
        %v1004 = vpack.c.b16 %v780, %v772
        %v1005 = vpack.c.b16 %v781, %v773
        %v1006 = vpack.c.b16 %v782, %v774
        %v1007 = vpack.c.b16 %v783, %v775
        %v1008 = vpack.c.b16 %v784, %v776
        %v1009 = vpack.c.b16 %v785, %v777
        %v1010 = vpack.c.b16 %v794, %v786
        %v1011 = vpack.c.b16 %v795, %v787
        %v1012 = vpack.c.b16 %v796, %v788
        %v1013 = vpack.c.b16 %v797, %v789
        %v1014 = vpack.c.b16 %v798, %v790
        %v1015 = vpack.c.b16 %v799, %v791
        %v1016 = vpack.c.b16 %v800, %v792
        %v1017 = vpack.c.b16 %v801, %v793
        %v1018 = vpack.c.b16 %v810, %v802
        %v1019 = vpack.c.b16 %v811, %v803
        %v1020 = vpack.c.b16 %v812, %v804
        %v1021 = vpack.c.b16 %v813, %v805
        %v1022 = vpack.c.b16 %v814, %v806
        %v1023 = vpack.c.b16 %v815, %v807
        %v1024 = vpack.c.b16 %v816, %v808
        %v1025 = vpack.c.b16 %v817, %v809
        %v1026 = vpack.c.b16 %v826, %v818
        %v1027 = vpack.c.b16 %v827, %v819
        %v1028 = vpack.c.b16 %v828, %v820
        %v1029 = vpack.c.b16 %v829, %v821
        %v1030 = vpack.c.b16 %v830, %v822
        %v1031 = vpack.c.b16 %v831, %v823
        %v1032 = vpack.c.b16 %v832, %v824
        %v1033 = vpack.c.b16 %v833, %v825
        %v1034 = vpack.c.b16 %v842, %v834
        %v1035 = vpack.c.b16 %v843, %v835
        %v1036 = vpack.c.b16 %v844, %v836
        %v1037 = vpack.c.b16 %v845, %v837
        %v1038 = vpack.c.b16 %v846, %v838
        %v1039 = vpack.c.b16 %v847, %v839
        %v1040 = vpack.c.b16 %v848, %v840
        %v1041 = vpack.c.b16 %v849, %v841
        %v1042 = vpack.c.b16 %v858, %v850
        %v1043 = vpack.c.b16 %v859, %v851
        %v1044 = vpack.c.b16 %v860, %v852
        %v1045 = vpack.c.b16 %v861, %v853
        %v1046 = vpack.c.b16 %v862, %v854
        %v1047 = vpack.c.b16 %v863, %v855
        %v1048 = vpack.c.b16 %v864, %v856
        %v1049 = vpack.c.b16 %v865, %v857
        %v1050 = vpack.c.b16 %v874, %v866
        %v1051 = vpack.c.b16 %v875, %v867
        %v1052 = vpack.c.b16 %v876, %v868
        %v1053 = vpack.c.b16 %v877, %v869
        %v1054 = vpack.c.b16 %v878, %v870
        %v1055 = vpack.c.b16 %v879, %v871
        %v1056 = vpack.c.b16 %v880, %v872
        %v1057 = vpack.c.b16 %v881, %v873
        %v1058 = vpack.c.b16 %v890, %v882
        %v1059 = vpack.c.b16 %v891, %v883
        %v1060 = vpack.c.b16 %v892, %v884
        %v1061 = vpack.c.b16 %v893, %v885
        %v1062 = vpack.c.b16 %v894, %v886
        %v1063 = vpack.c.b16 %v895, %v887
        %v1064 = vpack.c.b16 %v896, %v888
        %v1065 = vpack.c.b16 %v897, %v889
        %v1066 = vpack.c.b16 %v906, %v898
        %v1067 = vpack.c.b16 %v907, %v899
        %v1068 = vpack.c.b16 %v908, %v900
        %v1069 = vpack.c.b16 %v909, %v901
        %v1070 = vpack.c.b16 %v910, %v902
        %v1071 = vpack.c.b16 %v911, %v903
        %v1072 = vpack.c.b16 %v912, %v904
        %v1073 = vpack.c.b16 %v913, %v905
        %v1074 = vpack.c.b16 %v922, %v914
        %v1075 = vpack.c.b16 %v923, %v915
        %v1076 = vpack.c.b16 %v924, %v916
        %v1077 = vpack.c.b16 %v925, %v917
        %v1078 = vpack.c.b16 %v926, %v918
        %v1079 = vpack.c.b16 %v927, %v919
        %v1080 = vpack.c.b16 %v928, %v920
        %v1081 = vpack.c.b16 %v929, %v921
        %v1082 = vpack.c.b16 %v938, %v930
        %v1083 = vpack.c.b16 %v939, %v931
        %v1084 = vpack.c.b16 %v940, %v932
        %v1085 = vpack.c.b16 %v941, %v933
        %v1086 = vpack.c.b16 %v942, %v934
        %v1087 = vpack.c.b16 %v943, %v935
        %v1088 = vpack.c.b16 %v944, %v936
        %v1089 = vpack.c.b16 %v945, %v937
        %v1090 = vpack.c.b16 %v954, %v946
        %v1091 = vpack.c.b16 %v955, %v947
        %v1092 = vpack.c.b16 %v956, %v948
        %v1093 = vpack.c.b16 %v957, %v949
        %v1094 = vpack.c.b16 %v958, %v950
        %v1095 = vpack.c.b16 %v959, %v951
        %v1096 = vpack.c.b16 %v960, %v952
        %v1097 = vpack.c.b16 %v961, %v953
        %v1098 = vpack.c.b16 %v970, %v962
        %v1099 = vpack.c.b16 %v971, %v963
        %v1100 = vpack.c.b16 %v972, %v964
        %v1101 = vpack.c.b16 %v973, %v965
        %v1102 = vpack.c.b16 %v974, %v966
        %v1103 = vpack.c.b16 %v975, %v967
        %v1104 = vpack.c.b16 %v976, %v968
        %v1105 = vpack.c.b16 %v977, %v969
        %1234 = vmatprep.subr.bf16.mxu0 %v979
        %1235 = vmatpush1.bf16.msra.mxu0 %v978
        %1236 = vmatprep.subr.bf16.mxu0 %v987
        %1237 = vmatpush1.bf16.msra.mxu0 %v986
        %1238 = vmatprep.subr.bf16.mxu0 %v995
        %1239 = vmatpush1.bf16.msra.mxu0 %v994
        %1240 = vmatprep.subr.bf16.mxu0 %v1003
        %1241 = vmatpush1.bf16.msra.mxu0 %v1002
        %1242 = vmatprep.subr.bf16.mxu0 %v1011
        %1243 = vmatpush1.bf16.msra.mxu0 %v1010
        %1244 = vmatprep.subr.bf16.mxu0 %v1019
        %1245 = vmatpush1.bf16.msra.mxu0 %v1018
        %1246 = vmatprep.subr.bf16.mxu0 %v1027
        %1247 = vmatpush1.bf16.msra.mxu0 %v1026
        %1248 = vmatprep.subr.bf16.mxu0 %v1035
        %1249 = vmatpush1.bf16.msra.mxu0 %v1034
        %1250 = vmatprep.subr.bf16.mxu0 %v1043
        %1251 = vmatpush1.bf16.msra.mxu0 %v1042
        %1252 = vmatprep.subr.bf16.mxu0 %v1051
        %1253 = vmatpush1.bf16.msra.mxu0 %v1050
        %1254 = vmatprep.subr.bf16.mxu0 %v1059
        %1255 = vmatpush1.bf16.msra.mxu0 %v1058
        %1256 = vmatprep.subr.bf16.mxu0 %v1067
        %1257 = vmatpush1.bf16.msra.mxu0 %v1066
        %1258 = vmatprep.subr.bf16.mxu0 %v1075
        %1259 = vmatpush1.bf16.msra.mxu0 %v1074
        %1260 = vmatprep.subr.bf16.mxu0 %v1083
        %1261 = vmatpush1.bf16.msra.mxu0 %v1082
        %1262 = vmatprep.subr.bf16.mxu0 %v1091
        %1263 = vmatpush1.bf16.msra.mxu0 %v1090
        %1264 = vmatprep.subr.bf16.mxu0 %v1099
        %1265 = vmatpush1.bf16.msra.mxu0 %v1098
        %1266 = vmatprep.mubr.bf16.mxu0 %v423
        %1267 = vmatmul.mubr.bf16.gmra.mrb[0].mxu0 %v422
        %v1268 = vpop.f32.mrb[0].mxu0
        %v1269 = vadd.f32 %v557, %v1268
        %v1270 = vpop.f32.mrb[0].mxu0
        %v1271 = vadd.f32 %v561, %v1270
        %v1272 = vpop.f32.mrb[0].mxu0
        %v1273 = vpop.f32.mrb[0].mxu0
        %1274 = vdwg.mxu0
        %1275 = vmatprep.subr.bf16.mxu0 %v981
        %1276 = vmatpush1.bf16.msra.mxu0 %v980
        %1277 = vmatprep.subr.bf16.mxu0 %v989
        %1278 = vmatpush1.bf16.msra.mxu0 %v988
        %1279 = vmatprep.subr.bf16.mxu0 %v997
        %1280 = vmatpush1.bf16.msra.mxu0 %v996
        %1281 = vmatprep.subr.bf16.mxu0 %v1005
        %1282 = vmatpush1.bf16.msra.mxu0 %v1004
        %1283 = vmatprep.subr.bf16.mxu0 %v1013
        %1284 = vmatpush1.bf16.msra.mxu0 %v1012
        %1285 = vmatprep.subr.bf16.mxu0 %v1021
        %1286 = vmatpush1.bf16.msra.mxu0 %v1020
        %1287 = vmatprep.subr.bf16.mxu0 %v1029
        %1288 = vmatpush1.bf16.msra.mxu0 %v1028
        %1289 = vmatprep.subr.bf16.mxu0 %v1037
        %1290 = vmatpush1.bf16.msra.mxu0 %v1036
        %1291 = vmatprep.subr.bf16.mxu0 %v1045
        %1292 = vmatpush1.bf16.msra.mxu0 %v1044
        %1293 = vmatprep.subr.bf16.mxu0 %v1053
        %1294 = vmatpush1.bf16.msra.mxu0 %v1052
        %1295 = vmatprep.subr.bf16.mxu0 %v1061
        %1296 = vmatpush1.bf16.msra.mxu0 %v1060
        %1297 = vmatprep.subr.bf16.mxu0 %v1069
        %1298 = vmatpush1.bf16.msra.mxu0 %v1068
        %1299 = vmatprep.subr.bf16.mxu0 %v1077
        %1300 = vmatpush1.bf16.msra.mxu0 %v1076
        %1301 = vmatprep.subr.bf16.mxu0 %v1085
        %1302 = vmatpush1.bf16.msra.mxu0 %v1084
        %1303 = vmatprep.subr.bf16.mxu0 %v1093
        %1304 = vmatpush1.bf16.msra.mxu0 %v1092
        %1305 = vmatprep.subr.bf16.mxu0 %v1101
        %1306 = vmatpush1.bf16.msra.mxu0 %v1100
        %1307 = vmatprep.mubr.bf16.mxu0 %v423
        %1308 = vmatmul.mubr.bf16.gmra.mrb[0].mxu0 %v422
        %v1309 = vpop.f32.mrb[0].mxu0
        %v1310 = vadd.f32 %v565, %v1309
        %v1311 = vpop.f32.mrb[0].mxu0
        %v1312 = vadd.f32 %v569, %v1311
        %v1313 = vpop.f32.mrb[0].mxu0
        %v1314 = vpop.f32.mrb[0].mxu0
        %1315 = vdwg.mxu0
        %1316 = vmatprep.subr.bf16.mxu0 %v983
        %1317 = vmatpush1.bf16.msra.mxu0 %v982
        %1318 = vmatprep.subr.bf16.mxu0 %v991
        %1319 = vmatpush1.bf16.msra.mxu0 %v990
        %1320 = vmatprep.subr.bf16.mxu0 %v999
        %1321 = vmatpush1.bf16.msra.mxu0 %v998
        %1322 = vmatprep.subr.bf16.mxu0 %v1007
        %1323 = vmatpush1.bf16.msra.mxu0 %v1006
        %1324 = vmatprep.subr.bf16.mxu0 %v1015
        %1325 = vmatpush1.bf16.msra.mxu0 %v1014
        %1326 = vmatprep.subr.bf16.mxu0 %v1023
        %1327 = vmatpush1.bf16.msra.mxu0 %v1022
        %1328 = vmatprep.subr.bf16.mxu0 %v1031
        %1329 = vmatpush1.bf16.msra.mxu0 %v1030
        %1330 = vmatprep.subr.bf16.mxu0 %v1039
        %1331 = vmatpush1.bf16.msra.mxu0 %v1038
        %1332 = vmatprep.subr.bf16.mxu0 %v1047
        %1333 = vmatpush1.bf16.msra.mxu0 %v1046
        %1334 = vmatprep.subr.bf16.mxu0 %v1055
        %1335 = vmatpush1.bf16.msra.mxu0 %v1054
        %1336 = vmatprep.subr.bf16.mxu0 %v1063
        %1337 = vmatpush1.bf16.msra.mxu0 %v1062
        %1338 = vmatprep.subr.bf16.mxu0 %v1071
        %1339 = vmatpush1.bf16.msra.mxu0 %v1070
        %1340 = vmatprep.subr.bf16.mxu0 %v1079
        %1341 = vmatpush1.bf16.msra.mxu0 %v1078
        %1342 = vmatprep.subr.bf16.mxu0 %v1087
        %1343 = vmatpush1.bf16.msra.mxu0 %v1086
        %1344 = vmatprep.subr.bf16.mxu0 %v1095
        %1345 = vmatpush1.bf16.msra.mxu0 %v1094
        %1346 = vmatprep.subr.bf16.mxu0 %v1103
        %1347 = vmatpush1.bf16.msra.mxu0 %v1102
        %1348 = vmatprep.mubr.bf16.mxu0 %v423
        %1349 = vmatmul.mubr.bf16.gmra.mrb[0].mxu0 %v422
        %v1350 = vpop.f32.mrb[0].mxu0
        %v1351 = vadd.f32 %v573, %v1350
        %v1352 = vpop.f32.mrb[0].mxu0
        %v1353 = vadd.f32 %v577, %v1352
        %v1354 = vpop.f32.mrb[0].mxu0
        %v1355 = vpop.f32.mrb[0].mxu0
        %1356 = vdwg.mxu0
        %1357 = vmatprep.subr.bf16.mxu0 %v985
        %1358 = vmatpush1.bf16.msra.mxu0 %v984
        %1359 = vmatprep.subr.bf16.mxu0 %v993
        %1360 = vmatpush1.bf16.msra.mxu0 %v992
        %1361 = vmatprep.subr.bf16.mxu0 %v1001
        %1362 = vmatpush1.bf16.msra.mxu0 %v1000
        %1363 = vmatprep.subr.bf16.mxu0 %v1009
        %1364 = vmatpush1.bf16.msra.mxu0 %v1008
        %1365 = vmatprep.subr.bf16.mxu0 %v1017
        %1366 = vmatpush1.bf16.msra.mxu0 %v1016
        %1367 = vmatprep.subr.bf16.mxu0 %v1025
        %1368 = vmatpush1.bf16.msra.mxu0 %v1024
        %1369 = vmatprep.subr.bf16.mxu0 %v1033
        %1370 = vmatpush1.bf16.msra.mxu0 %v1032
        %1371 = vmatprep.subr.bf16.mxu0 %v1041
        %1372 = vmatpush1.bf16.msra.mxu0 %v1040
        %1373 = vmatprep.subr.bf16.mxu0 %v1049
        %1374 = vmatpush1.bf16.msra.mxu0 %v1048
        %1375 = vmatprep.subr.bf16.mxu0 %v1057
        %1376 = vmatpush1.bf16.msra.mxu0 %v1056
        %1377 = vmatprep.subr.bf16.mxu0 %v1065
        %1378 = vmatpush1.bf16.msra.mxu0 %v1064
        %1379 = vmatprep.subr.bf16.mxu0 %v1073
        %1380 = vmatpush1.bf16.msra.mxu0 %v1072
        %1381 = vmatprep.subr.bf16.mxu0 %v1081
        %1382 = vmatpush1.bf16.msra.mxu0 %v1080
        %1383 = vmatprep.subr.bf16.mxu0 %v1089
        %1384 = vmatpush1.bf16.msra.mxu0 %v1088
        %1385 = vmatprep.subr.bf16.mxu0 %v1097
        %1386 = vmatpush1.bf16.msra.mxu0 %v1096
        %1387 = vmatprep.subr.bf16.mxu0 %v1105
        %1388 = vmatpush1.bf16.msra.mxu0 %v1104
        %1389 = vmatprep.mubr.bf16.mxu0 %v423
        %1390 = vmatmul.mubr.bf16.gmra.mrb[0].mxu0 %v422
        %v1391 = vpop.f32.mrb[0].mxu0
        %v1392 = vadd.f32 %v581, %v1391
        %v1393 = vpop.f32.mrb[0].mxu0
        %v1394 = vadd.f32 %v585, %v1393
        %v1395 = vpop.f32.mrb[0].mxu0
        %v1396 = vpop.f32.mrb[0].mxu0
        %1397 = vdwg.mxu0
        %v1398 = vmul.f32 %v1269, -1.702
        %v1399 = vmul.f32 %v1271, -1.702
        %v1400 = vmul.f32 %v1310, -1.702
        %v1401 = vmul.f32 %v1312, -1.702
        %v1402 = vmul.f32 %v1351, -1.702
        %v1403 = vmul.f32 %v1353, -1.702
        %v1404 = vmul.f32 %v1392, -1.702
        %v1405 = vmul.f32 %v1394, -1.702
        %v1406 = vmul.f32 %v1398, 1.442695
        %v1407 = vpow.pop %v1406
        %v1408 = vmul.f32 %v1399, 1.442695
        %v1409 = vpow.pop %v1408
        %v1410 = vmul.f32 %v1400, 1.442695
        %v1411 = vpow.pop %v1410
        %v1412 = vmul.f32 %v1401, 1.442695
        %v1413 = vpow.pop %v1412
        %v1414 = vmul.f32 %v1402, 1.442695
        %v1415 = vpow.pop %v1414
        %v1416 = vmul.f32 %v1403, 1.442695
        %v1417 = vpow.pop %v1416
        %v1418 = vmul.f32 %v1404, 1.442695
        %v1419 = vpow.pop %v1418
        %v1420 = vmul.f32 %v1405, 1.442695
        %v1421 = vpow.pop %v1420
        %v1422 = vadd.f32 %v1407, 1.0
        %v1423 = vadd.f32 %v1409, 1.0
        %v1424 = vadd.f32 %v1411, 1.0
        %v1425 = vadd.f32 %v1413, 1.0
        %v1426 = vadd.f32 %v1415, 1.0
        %v1427 = vadd.f32 %v1417, 1.0
        %v1428 = vadd.f32 %v1419, 1.0
        %v1429 = vadd.f32 %v1421, 1.0
        %v1430 = vrcp.pop %v1422
        %v1431 = vrcp.pop %v1423
        %v1432 = vrcp.pop %v1424
        %v1433 = vrcp.pop %v1425
        %v1434 = vrcp.pop %v1426
        %v1435 = vrcp.pop %v1427
        %v1436 = vrcp.pop %v1428
        %v1437 = vrcp.pop %v1429
        %v1438 = vmul.f32 %v1269, %v1430
        %v1439 = vmul.f32 %v1271, %v1431
        %v1440 = vmul.f32 %v1310, %v1432
        %v1441 = vmul.f32 %v1312, %v1433
        %v1442 = vmul.f32 %v1351, %v1434
        %v1443 = vmul.f32 %v1353, %v1435
        %v1444 = vmul.f32 %v1392, %v1436
        %v1445 = vmul.f32 %v1394, %v1437
        %v1446 = vpack.c.bf16 %v1438, %v1438
        %v1447 = vpack.c.bf16 %v1439, %v1439
        %v1448 = vpack.c.bf16 %v1440, %v1440
        %v1449 = vpack.c.bf16 %v1441, %v1441
        %v1450 = vpack.c.bf16 %v1442, %v1442
        %v1451 = vpack.c.bf16 %v1443, %v1443
        %v1452 = vpack.c.bf16 %v1444, %v1444
        %v1453 = vpack.c.bf16 %v1445, %v1445
        %v1454 = vld [vmem:[#allocation11] sm:$0xff]
        %v1455 = vld [vmem:[#allocation11 + $0x8] sm:$0xff]
        %v1456 = vld [vmem:[#allocation11 + $0x10] sm:$0xff]
        %v1457 = vld [vmem:[#allocation11 + $0x18] sm:$0xff]
        %v1458 = vld [vmem:[#allocation11 + $0x20] sm:$0xff]
        %v1459 = vld [vmem:[#allocation11 + $0x28] sm:$0xff]
        %v1460 = vld [vmem:[#allocation11 + $0x30] sm:$0xff]
        %v1461 = vld [vmem:[#allocation11 + $0x38] sm:$0xff]
        %v1462 = vld [vmem:[#allocation11 + $0x40] sm:$0xff]
        %v1463 = vld [vmem:[#allocation11 + $0x48] sm:$0xff]
        %v1464 = vld [vmem:[#allocation11 + $0x50] sm:$0xff]
        %v1465 = vld [vmem:[#allocation11 + $0x58] sm:$0xff]
        %v1466 = vld [vmem:[#allocation11 + $0x60] sm:$0xff]
        %v1467 = vld [vmem:[#allocation11 + $0x68] sm:$0xff]
        %v1468 = vld [vmem:[#allocation11 + $0x70] sm:$0xff]
        %v1469 = vld [vmem:[#allocation11 + $0x78] sm:$0xff]
        %v1470 = vld [vmem:[#allocation11 + $0x80] sm:$0xff]
        %v1471 = vld [vmem:[#allocation11 + $0x88] sm:$0xff]
        %v1472 = vld [vmem:[#allocation11 + $0x90] sm:$0xff]
        %v1473 = vld [vmem:[#allocation11 + $0x98] sm:$0xff]
        %v1474 = vld [vmem:[#allocation11 + $0xa0] sm:$0xff]
        %v1475 = vld [vmem:[#allocation11 + $0xa8] sm:$0xff]
        %v1476 = vld [vmem:[#allocation11 + $0xb0] sm:$0xff]
        %v1477 = vld [vmem:[#allocation11 + $0xb8] sm:$0xff]
        %v1478 = vld [vmem:[#allocation11 + $0xc0] sm:$0xff]
        %v1479 = vld [vmem:[#allocation11 + $0xc8] sm:$0xff]
        %v1480 = vld [vmem:[#allocation11 + $0xd0] sm:$0xff]
        %v1481 = vld [vmem:[#allocation11 + $0xd8] sm:$0xff]
        %v1482 = vld [vmem:[#allocation11 + $0xe0] sm:$0xff]
        %v1483 = vld [vmem:[#allocation11 + $0xe8] sm:$0xff]
        %v1484 = vld [vmem:[#allocation11 + $0xf0] sm:$0xff]
        %v1485 = vld [vmem:[#allocation11 + $0xf8] sm:$0xff]
        %v1486 = vld [vmem:[#allocation11 + $0x100] sm:$0xff]
        %v1487 = vld [vmem:[#allocation11 + $0x108] sm:$0xff]
        %v1488 = vld [vmem:[#allocation11 + $0x110] sm:$0xff]
        %v1489 = vld [vmem:[#allocation11 + $0x118] sm:$0xff]
        %v1490 = vld [vmem:[#allocation11 + $0x120] sm:$0xff]
        %v1491 = vld [vmem:[#allocation11 + $0x128] sm:$0xff]
        %v1492 = vld [vmem:[#allocation11 + $0x130] sm:$0xff]
        %v1493 = vld [vmem:[#allocation11 + $0x138] sm:$0xff]
        %v1494 = vld [vmem:[#allocation11 + $0x140] sm:$0xff]
        %v1495 = vld [vmem:[#allocation11 + $0x148] sm:$0xff]
        %v1496 = vld [vmem:[#allocation11 + $0x150] sm:$0xff]
        %v1497 = vld [vmem:[#allocation11 + $0x158] sm:$0xff]
        %v1498 = vld [vmem:[#allocation11 + $0x160] sm:$0xff]
        %v1499 = vld [vmem:[#allocation11 + $0x168] sm:$0xff]
        %v1500 = vld [vmem:[#allocation11 + $0x170] sm:$0xff]
        %v1501 = vld [vmem:[#allocation11 + $0x178] sm:$0xff]
        %v1502 = vld [vmem:[#allocation11 + $0x180] sm:$0xff]
        %v1503 = vld [vmem:[#allocation11 + $0x188] sm:$0xff]
        %v1504 = vld [vmem:[#allocation11 + $0x190] sm:$0xff]
        %v1505 = vld [vmem:[#allocation11 + $0x198] sm:$0xff]
        %v1506 = vld [vmem:[#allocation11 + $0x1a0] sm:$0xff]
        %v1507 = vld [vmem:[#allocation11 + $0x1a8] sm:$0xff]
        %v1508 = vld [vmem:[#allocation11 + $0x1b0] sm:$0xff]
        %v1509 = vld [vmem:[#allocation11 + $0x1b8] sm:$0xff]
        %v1510 = vld [vmem:[#allocation11 + $0x1c0] sm:$0xff]
        %v1511 = vld [vmem:[#allocation11 + $0x1c8] sm:$0xff]
        %v1512 = vld [vmem:[#allocation11 + $0x1d0] sm:$0xff]
        %v1513 = vld [vmem:[#allocation11 + $0x1d8] sm:$0xff]
        %v1514 = vld [vmem:[#allocation11 + $0x1e0] sm:$0xff]
        %v1515 = vld [vmem:[#allocation11 + $0x1e8] sm:$0xff]
        %v1516 = vld [vmem:[#allocation11 + $0x1f0] sm:$0xff]
        %v1517 = vld [vmem:[#allocation11 + $0x1f8] sm:$0xff]
        %v1518 = vld [vmem:[#allocation11 + $0x200] sm:$0xff]
        %v1519 = vld [vmem:[#allocation11 + $0x208] sm:$0xff]
        %v1520 = vld [vmem:[#allocation11 + $0x210] sm:$0xff]
        %v1521 = vld [vmem:[#allocation11 + $0x218] sm:$0xff]
        %v1522 = vld [vmem:[#allocation11 + $0x220] sm:$0xff]
        %v1523 = vld [vmem:[#allocation11 + $0x228] sm:$0xff]
        %v1524 = vld [vmem:[#allocation11 + $0x230] sm:$0xff]
        %v1525 = vld [vmem:[#allocation11 + $0x238] sm:$0xff]
        %v1526 = vld [vmem:[#allocation11 + $0x240] sm:$0xff]
        %v1527 = vld [vmem:[#allocation11 + $0x248] sm:$0xff]
        %v1528 = vld [vmem:[#allocation11 + $0x250] sm:$0xff]
        %v1529 = vld [vmem:[#allocation11 + $0x258] sm:$0xff]
        %v1530 = vld [vmem:[#allocation11 + $0x260] sm:$0xff]
        %v1531 = vld [vmem:[#allocation11 + $0x268] sm:$0xff]
        %v1532 = vld [vmem:[#allocation11 + $0x270] sm:$0xff]
        %v1533 = vld [vmem:[#allocation11 + $0x278] sm:$0xff]
        %v1534 = vld [vmem:[#allocation11 + $0x280] sm:$0xff]
        %v1535 = vld [vmem:[#allocation11 + $0x288] sm:$0xff]
        %v1536 = vld [vmem:[#allocation11 + $0x290] sm:$0xff]
        %v1537 = vld [vmem:[#allocation11 + $0x298] sm:$0xff]
        %v1538 = vld [vmem:[#allocation11 + $0x2a0] sm:$0xff]
        %v1539 = vld [vmem:[#allocation11 + $0x2a8] sm:$0xff]
        %v1540 = vld [vmem:[#allocation11 + $0x2b0] sm:$0xff]
        %v1541 = vld [vmem:[#allocation11 + $0x2b8] sm:$0xff]
        %v1542 = vld [vmem:[#allocation11 + $0x2c0] sm:$0xff]
        %v1543 = vld [vmem:[#allocation11 + $0x2c8] sm:$0xff]
        %v1544 = vld [vmem:[#allocation11 + $0x2d0] sm:$0xff]
        %v1545 = vld [vmem:[#allocation11 + $0x2d8] sm:$0xff]
        %v1546 = vld [vmem:[#allocation11 + $0x2e0] sm:$0xff]
        %v1547 = vld [vmem:[#allocation11 + $0x2e8] sm:$0xff]
        %v1548 = vld [vmem:[#allocation11 + $0x2f0] sm:$0xff]
        %v1549 = vld [vmem:[#allocation11 + $0x2f8] sm:$0xff]
        %v1550 = vld [vmem:[#allocation11 + $0x300] sm:$0xff]
        %v1551 = vld [vmem:[#allocation11 + $0x308] sm:$0xff]
        %v1552 = vld [vmem:[#allocation11 + $0x310] sm:$0xff]
        %v1553 = vld [vmem:[#allocation11 + $0x318] sm:$0xff]
        %v1554 = vld [vmem:[#allocation11 + $0x320] sm:$0xff]
        %v1555 = vld [vmem:[#allocation11 + $0x328] sm:$0xff]
        %v1556 = vld [vmem:[#allocation11 + $0x330] sm:$0xff]
        %v1557 = vld [vmem:[#allocation11 + $0x338] sm:$0xff]
        %v1558 = vld [vmem:[#allocation11 + $0x340] sm:$0xff]
        %v1559 = vld [vmem:[#allocation11 + $0x348] sm:$0xff]
        %v1560 = vld [vmem:[#allocation11 + $0x350] sm:$0xff]
        %v1561 = vld [vmem:[#allocation11 + $0x358] sm:$0xff]
        %v1562 = vld [vmem:[#allocation11 + $0x360] sm:$0xff]
        %v1563 = vld [vmem:[#allocation11 + $0x368] sm:$0xff]
        %v1564 = vld [vmem:[#allocation11 + $0x370] sm:$0xff]
        %v1565 = vld [vmem:[#allocation11 + $0x378] sm:$0xff]
        %v1566 = vld [vmem:[#allocation11 + $0x380] sm:$0xff]
        %v1567 = vld [vmem:[#allocation11 + $0x388] sm:$0xff]
        %v1568 = vld [vmem:[#allocation11 + $0x390] sm:$0xff]
        %v1569 = vld [vmem:[#allocation11 + $0x398] sm:$0xff]
        %v1570 = vld [vmem:[#allocation11 + $0x3a0] sm:$0xff]
        %v1571 = vld [vmem:[#allocation11 + $0x3a8] sm:$0xff]
        %v1572 = vld [vmem:[#allocation11 + $0x3b0] sm:$0xff]
        %v1573 = vld [vmem:[#allocation11 + $0x3b8] sm:$0xff]
        %v1574 = vld [vmem:[#allocation11 + $0x3c0] sm:$0xff]
        %v1575 = vld [vmem:[#allocation11 + $0x3c8] sm:$0xff]
        %v1576 = vld [vmem:[#allocation11 + $0x3d0] sm:$0xff]
        %v1577 = vld [vmem:[#allocation11 + $0x3d8] sm:$0xff]
        %v1578 = vld [vmem:[#allocation11 + $0x3e0] sm:$0xff]
        %v1579 = vld [vmem:[#allocation11 + $0x3e8] sm:$0xff]
        %v1580 = vld [vmem:[#allocation11 + $0x3f0] sm:$0xff]
        %v1581 = vld [vmem:[#allocation11 + $0x3f8] sm:$0xff]
        %v1582 = vld [vmem:[#allocation13] sm:$0x3]
        %v1584 = vlaneseq
        %v1585 = vshrl.u32 %v1584, 7
        %v1586 = vsub.s32 0, %v1585
        %v1587 = vrot.slane %v1582, %v1586
        %v1588 = vlaneseq
        %v1589 = vshrl.u32 %v1588, 7
        %v1590 = vsub.s32 1, %v1589
        %v1591 = vrot.slane %v1582, %v1590
        %v1722 = vunpack.c.l.b16 %v1454
        %v1723 = vunpack.c.h.b16 %v1454
        %v1724 = vunpack.c.l.b16 %v1455
        %v1725 = vunpack.c.h.b16 %v1455
        %v1726 = vunpack.c.l.b16 %v1456
        %v1727 = vunpack.c.h.b16 %v1456
        %v1728 = vunpack.c.l.b16 %v1457
        %v1729 = vunpack.c.h.b16 %v1457
        %v1730 = vunpack.c.l.b16 %v1458
        %v1731 = vunpack.c.h.b16 %v1458
        %v1732 = vunpack.c.l.b16 %v1459
        %v1733 = vunpack.c.h.b16 %v1459
        %v1734 = vunpack.c.l.b16 %v1460
        %v1735 = vunpack.c.h.b16 %v1460
        %v1736 = vunpack.c.l.b16 %v1461
        %v1737 = vunpack.c.h.b16 %v1461
        %v1738 = vunpack.c.l.b16 %v1462
        %v1739 = vunpack.c.h.b16 %v1462
        %v1740 = vunpack.c.l.b16 %v1463
        %v1741 = vunpack.c.h.b16 %v1463
        %v1742 = vunpack.c.l.b16 %v1464
        %v1743 = vunpack.c.h.b16 %v1464
        %v1744 = vunpack.c.l.b16 %v1465
        %v1745 = vunpack.c.h.b16 %v1465
        %v1746 = vunpack.c.l.b16 %v1466
        %v1747 = vunpack.c.h.b16 %v1466
        %v1748 = vunpack.c.l.b16 %v1467
        %v1749 = vunpack.c.h.b16 %v1467
        %v1750 = vunpack.c.l.b16 %v1468
        %v1751 = vunpack.c.h.b16 %v1468
        %v1752 = vunpack.c.l.b16 %v1469
        %v1753 = vunpack.c.h.b16 %v1469
        %v1754 = vunpack.c.l.b16 %v1470
        %v1755 = vunpack.c.h.b16 %v1470
        %v1756 = vunpack.c.l.b16 %v1471
        %v1757 = vunpack.c.h.b16 %v1471
        %v1758 = vunpack.c.l.b16 %v1472
        %v1759 = vunpack.c.h.b16 %v1472
        %v1760 = vunpack.c.l.b16 %v1473
        %v1761 = vunpack.c.h.b16 %v1473
        %v1762 = vunpack.c.l.b16 %v1474
        %v1763 = vunpack.c.h.b16 %v1474
        %v1764 = vunpack.c.l.b16 %v1475
        %v1765 = vunpack.c.h.b16 %v1475
        %v1766 = vunpack.c.l.b16 %v1476
        %v1767 = vunpack.c.h.b16 %v1476
        %v1768 = vunpack.c.l.b16 %v1477
        %v1769 = vunpack.c.h.b16 %v1477
        %v1770 = vunpack.c.l.b16 %v1478
        %v1771 = vunpack.c.h.b16 %v1478
        %v1772 = vunpack.c.l.b16 %v1479
        %v1773 = vunpack.c.h.b16 %v1479
        %v1774 = vunpack.c.l.b16 %v1480
        %v1775 = vunpack.c.h.b16 %v1480
        %v1776 = vunpack.c.l.b16 %v1481
        %v1777 = vunpack.c.h.b16 %v1481
        %v1778 = vunpack.c.l.b16 %v1482
        %v1779 = vunpack.c.h.b16 %v1482
        %v1780 = vunpack.c.l.b16 %v1483
        %v1781 = vunpack.c.h.b16 %v1483
        %v1782 = vunpack.c.l.b16 %v1484
        %v1783 = vunpack.c.h.b16 %v1484
        %v1784 = vunpack.c.l.b16 %v1485
        %v1785 = vunpack.c.h.b16 %v1485
        %v1786 = vunpack.c.l.b16 %v1486
        %v1787 = vunpack.c.h.b16 %v1486
        %v1788 = vunpack.c.l.b16 %v1487
        %v1789 = vunpack.c.h.b16 %v1487
        %v1790 = vunpack.c.l.b16 %v1488
        %v1791 = vunpack.c.h.b16 %v1488
        %v1792 = vunpack.c.l.b16 %v1489
        %v1793 = vunpack.c.h.b16 %v1489
        %v1794 = vunpack.c.l.b16 %v1490
        %v1795 = vunpack.c.h.b16 %v1490
        %v1796 = vunpack.c.l.b16 %v1491
        %v1797 = vunpack.c.h.b16 %v1491
        %v1798 = vunpack.c.l.b16 %v1492
        %v1799 = vunpack.c.h.b16 %v1492
        %v1800 = vunpack.c.l.b16 %v1493
        %v1801 = vunpack.c.h.b16 %v1493
        %v1802 = vunpack.c.l.b16 %v1494
        %v1803 = vunpack.c.h.b16 %v1494
        %v1804 = vunpack.c.l.b16 %v1495
        %v1805 = vunpack.c.h.b16 %v1495
        %v1806 = vunpack.c.l.b16 %v1496
        %v1807 = vunpack.c.h.b16 %v1496
        %v1808 = vunpack.c.l.b16 %v1497
        %v1809 = vunpack.c.h.b16 %v1497
        %v1810 = vunpack.c.l.b16 %v1498
        %v1811 = vunpack.c.h.b16 %v1498
        %v1812 = vunpack.c.l.b16 %v1499
        %v1813 = vunpack.c.h.b16 %v1499
        %v1814 = vunpack.c.l.b16 %v1500
        %v1815 = vunpack.c.h.b16 %v1500
        %v1816 = vunpack.c.l.b16 %v1501
        %v1817 = vunpack.c.h.b16 %v1501
        %v1818 = vunpack.c.l.b16 %v1502
        %v1819 = vunpack.c.h.b16 %v1502
        %v1820 = vunpack.c.l.b16 %v1503
        %v1821 = vunpack.c.h.b16 %v1503
        %v1822 = vunpack.c.l.b16 %v1504
        %v1823 = vunpack.c.h.b16 %v1504
        %v1824 = vunpack.c.l.b16 %v1505
        %v1825 = vunpack.c.h.b16 %v1505
        %v1826 = vunpack.c.l.b16 %v1506
        %v1827 = vunpack.c.h.b16 %v1506
        %v1828 = vunpack.c.l.b16 %v1507
        %v1829 = vunpack.c.h.b16 %v1507
        %v1830 = vunpack.c.l.b16 %v1508
        %v1831 = vunpack.c.h.b16 %v1508
        %v1832 = vunpack.c.l.b16 %v1509
        %v1833 = vunpack.c.h.b16 %v1509
        %v1834 = vunpack.c.l.b16 %v1510
        %v1835 = vunpack.c.h.b16 %v1510
        %v1836 = vunpack.c.l.b16 %v1511
        %v1837 = vunpack.c.h.b16 %v1511
        %v1838 = vunpack.c.l.b16 %v1512
        %v1839 = vunpack.c.h.b16 %v1512
        %v1840 = vunpack.c.l.b16 %v1513
        %v1841 = vunpack.c.h.b16 %v1513
        %v1842 = vunpack.c.l.b16 %v1514
        %v1843 = vunpack.c.h.b16 %v1514
        %v1844 = vunpack.c.l.b16 %v1515
        %v1845 = vunpack.c.h.b16 %v1515
        %v1846 = vunpack.c.l.b16 %v1516
        %v1847 = vunpack.c.h.b16 %v1516
        %v1848 = vunpack.c.l.b16 %v1517
        %v1849 = vunpack.c.h.b16 %v1517
        %v1850 = vunpack.c.l.b16 %v1518
        %v1851 = vunpack.c.h.b16 %v1518
        %v1852 = vunpack.c.l.b16 %v1519
        %v1853 = vunpack.c.h.b16 %v1519
        %v1854 = vunpack.c.l.b16 %v1520
        %v1855 = vunpack.c.h.b16 %v1520
        %v1856 = vunpack.c.l.b16 %v1521
        %v1857 = vunpack.c.h.b16 %v1521
        %v1858 = vunpack.c.l.b16 %v1522
        %v1859 = vunpack.c.h.b16 %v1522
        %v1860 = vunpack.c.l.b16 %v1523
        %v1861 = vunpack.c.h.b16 %v1523
        %v1862 = vunpack.c.l.b16 %v1524
        %v1863 = vunpack.c.h.b16 %v1524
        %v1864 = vunpack.c.l.b16 %v1525
        %v1865 = vunpack.c.h.b16 %v1525
        %v1866 = vunpack.c.l.b16 %v1526
        %v1867 = vunpack.c.h.b16 %v1526
        %v1868 = vunpack.c.l.b16 %v1527
        %v1869 = vunpack.c.h.b16 %v1527
        %v1870 = vunpack.c.l.b16 %v1528
        %v1871 = vunpack.c.h.b16 %v1528
        %v1872 = vunpack.c.l.b16 %v1529
        %v1873 = vunpack.c.h.b16 %v1529
        %v1874 = vunpack.c.l.b16 %v1530
        %v1875 = vunpack.c.h.b16 %v1530
        %v1876 = vunpack.c.l.b16 %v1531
        %v1877 = vunpack.c.h.b16 %v1531
        %v1878 = vunpack.c.l.b16 %v1532
        %v1879 = vunpack.c.h.b16 %v1532
        %v1880 = vunpack.c.l.b16 %v1533
        %v1881 = vunpack.c.h.b16 %v1533
        %v1882 = vunpack.c.l.b16 %v1534
        %v1883 = vunpack.c.h.b16 %v1534
        %v1884 = vunpack.c.l.b16 %v1535
        %v1885 = vunpack.c.h.b16 %v1535
        %v1886 = vunpack.c.l.b16 %v1536
        %v1887 = vunpack.c.h.b16 %v1536
        %v1888 = vunpack.c.l.b16 %v1537
        %v1889 = vunpack.c.h.b16 %v1537
        %v1890 = vunpack.c.l.b16 %v1538
        %v1891 = vunpack.c.h.b16 %v1538
        %v1892 = vunpack.c.l.b16 %v1539
        %v1893 = vunpack.c.h.b16 %v1539
        %v1894 = vunpack.c.l.b16 %v1540
        %v1895 = vunpack.c.h.b16 %v1540
        %v1896 = vunpack.c.l.b16 %v1541
        %v1897 = vunpack.c.h.b16 %v1541
        %v1898 = vunpack.c.l.b16 %v1542
        %v1899 = vunpack.c.h.b16 %v1542
        %v1900 = vunpack.c.l.b16 %v1543
        %v1901 = vunpack.c.h.b16 %v1543
        %v1902 = vunpack.c.l.b16 %v1544
        %v1903 = vunpack.c.h.b16 %v1544
        %v1904 = vunpack.c.l.b16 %v1545
        %v1905 = vunpack.c.h.b16 %v1545
        %v1906 = vunpack.c.l.b16 %v1546
        %v1907 = vunpack.c.h.b16 %v1546
        %v1908 = vunpack.c.l.b16 %v1547
        %v1909 = vunpack.c.h.b16 %v1547
        %v1910 = vunpack.c.l.b16 %v1548
        %v1911 = vunpack.c.h.b16 %v1548
        %v1912 = vunpack.c.l.b16 %v1549
        %v1913 = vunpack.c.h.b16 %v1549
        %v1914 = vunpack.c.l.b16 %v1550
        %v1915 = vunpack.c.h.b16 %v1550
        %v1916 = vunpack.c.l.b16 %v1551
        %v1917 = vunpack.c.h.b16 %v1551
        %v1918 = vunpack.c.l.b16 %v1552
        %v1919 = vunpack.c.h.b16 %v1552
        %v1920 = vunpack.c.l.b16 %v1553
        %v1921 = vunpack.c.h.b16 %v1553
        %v1922 = vunpack.c.l.b16 %v1554
        %v1923 = vunpack.c.h.b16 %v1554
        %v1924 = vunpack.c.l.b16 %v1555
        %v1925 = vunpack.c.h.b16 %v1555
        %v1926 = vunpack.c.l.b16 %v1556
        %v1927 = vunpack.c.h.b16 %v1556
        %v1928 = vunpack.c.l.b16 %v1557
        %v1929 = vunpack.c.h.b16 %v1557
        %v1930 = vunpack.c.l.b16 %v1558
        %v1931 = vunpack.c.h.b16 %v1558
        %v1932 = vunpack.c.l.b16 %v1559
        %v1933 = vunpack.c.h.b16 %v1559
        %v1934 = vunpack.c.l.b16 %v1560
        %v1935 = vunpack.c.h.b16 %v1560
        %v1936 = vunpack.c.l.b16 %v1561
        %v1937 = vunpack.c.h.b16 %v1561
        %v1938 = vunpack.c.l.b16 %v1562
        %v1939 = vunpack.c.h.b16 %v1562
        %v1940 = vunpack.c.l.b16 %v1563
        %v1941 = vunpack.c.h.b16 %v1563
        %v1942 = vunpack.c.l.b16 %v1564
        %v1943 = vunpack.c.h.b16 %v1564
        %v1944 = vunpack.c.l.b16 %v1565
        %v1945 = vunpack.c.h.b16 %v1565
        %v1946 = vunpack.c.l.b16 %v1566
        %v1947 = vunpack.c.h.b16 %v1566
        %v1948 = vunpack.c.l.b16 %v1567
        %v1949 = vunpack.c.h.b16 %v1567
        %v1950 = vunpack.c.l.b16 %v1568
        %v1951 = vunpack.c.h.b16 %v1568
        %v1952 = vunpack.c.l.b16 %v1569
        %v1953 = vunpack.c.h.b16 %v1569
        %v1954 = vunpack.c.l.b16 %v1570
        %v1955 = vunpack.c.h.b16 %v1570
        %v1956 = vunpack.c.l.b16 %v1571
        %v1957 = vunpack.c.h.b16 %v1571
        %v1958 = vunpack.c.l.b16 %v1572
        %v1959 = vunpack.c.h.b16 %v1572
        %v1960 = vunpack.c.l.b16 %v1573
        %v1961 = vunpack.c.h.b16 %v1573
        %v1962 = vunpack.c.l.b16 %v1574
        %v1963 = vunpack.c.h.b16 %v1574
        %v1964 = vunpack.c.l.b16 %v1575
        %v1965 = vunpack.c.h.b16 %v1575
        %v1966 = vunpack.c.l.b16 %v1576
        %v1967 = vunpack.c.h.b16 %v1576
        %v1968 = vunpack.c.l.b16 %v1577
        %v1969 = vunpack.c.h.b16 %v1577
        %v1970 = vunpack.c.l.b16 %v1578
        %v1971 = vunpack.c.h.b16 %v1578
        %v1972 = vunpack.c.l.b16 %v1579
        %v1973 = vunpack.c.h.b16 %v1579
        %v1974 = vunpack.c.l.b16 %v1580
        %v1975 = vunpack.c.h.b16 %v1580
        %v1976 = vunpack.c.l.b16 %v1581
        %v1977 = vunpack.c.h.b16 %v1581
        %v1978 = vpack.c.b16 %v1724, %v1722
        %v1979 = vpack.c.b16 %v1725, %v1723
        %v1980 = vpack.c.b16 %v1728, %v1726
        %v1981 = vpack.c.b16 %v1729, %v1727
        %v1982 = vpack.c.b16 %v1732, %v1730
        %v1983 = vpack.c.b16 %v1733, %v1731
        %v1984 = vpack.c.b16 %v1736, %v1734
        %v1985 = vpack.c.b16 %v1737, %v1735
        %v1986 = vpack.c.b16 %v1740, %v1738
        %v1987 = vpack.c.b16 %v1741, %v1739
        %v1988 = vpack.c.b16 %v1744, %v1742
        %v1989 = vpack.c.b16 %v1745, %v1743
        %v1990 = vpack.c.b16 %v1748, %v1746
        %v1991 = vpack.c.b16 %v1749, %v1747
        %v1992 = vpack.c.b16 %v1752, %v1750
        %v1993 = vpack.c.b16 %v1753, %v1751
        %v1994 = vpack.c.b16 %v1756, %v1754
        %v1995 = vpack.c.b16 %v1757, %v1755
        %v1996 = vpack.c.b16 %v1760, %v1758
        %v1997 = vpack.c.b16 %v1761, %v1759
        %v1998 = vpack.c.b16 %v1764, %v1762
        %v1999 = vpack.c.b16 %v1765, %v1763
        %v2000 = vpack.c.b16 %v1768, %v1766
        %v2001 = vpack.c.b16 %v1769, %v1767
        %v2002 = vpack.c.b16 %v1772, %v1770
        %v2003 = vpack.c.b16 %v1773, %v1771
        %v2004 = vpack.c.b16 %v1776, %v1774
        %v2005 = vpack.c.b16 %v1777, %v1775
        %v2006 = vpack.c.b16 %v1780, %v1778
        %v2007 = vpack.c.b16 %v1781, %v1779
        %v2008 = vpack.c.b16 %v1784, %v1782
        %v2009 = vpack.c.b16 %v1785, %v1783
        %v2010 = vpack.c.b16 %v1788, %v1786
        %v2011 = vpack.c.b16 %v1789, %v1787
        %v2012 = vpack.c.b16 %v1792, %v1790
        %v2013 = vpack.c.b16 %v1793, %v1791
        %v2014 = vpack.c.b16 %v1796, %v1794
        %v2015 = vpack.c.b16 %v1797, %v1795
        %v2016 = vpack.c.b16 %v1800, %v1798
        %v2017 = vpack.c.b16 %v1801, %v1799
        %v2018 = vpack.c.b16 %v1804, %v1802
        %v2019 = vpack.c.b16 %v1805, %v1803
        %v2020 = vpack.c.b16 %v1808, %v1806
        %v2021 = vpack.c.b16 %v1809, %v1807
        %v2022 = vpack.c.b16 %v1812, %v1810
        %v2023 = vpack.c.b16 %v1813, %v1811
        %v2024 = vpack.c.b16 %v1816, %v1814
        %v2025 = vpack.c.b16 %v1817, %v1815
        %v2026 = vpack.c.b16 %v1820, %v1818
        %v2027 = vpack.c.b16 %v1821, %v1819
        %v2028 = vpack.c.b16 %v1824, %v1822
        %v2029 = vpack.c.b16 %v1825, %v1823
        %v2030 = vpack.c.b16 %v1828, %v1826
        %v2031 = vpack.c.b16 %v1829, %v1827
        %v2032 = vpack.c.b16 %v1832, %v1830
        %v2033 = vpack.c.b16 %v1833, %v1831
        %v2034 = vpack.c.b16 %v1836, %v1834
        %v2035 = vpack.c.b16 %v1837, %v1835
        %v2036 = vpack.c.b16 %v1840, %v1838
        %v2037 = vpack.c.b16 %v1841, %v1839
        %v2038 = vpack.c.b16 %v1844, %v1842
        %v2039 = vpack.c.b16 %v1845, %v1843
        %v2040 = vpack.c.b16 %v1848, %v1846
        %v2041 = vpack.c.b16 %v1849, %v1847
        %v2042 = vpack.c.b16 %v1852, %v1850
        %v2043 = vpack.c.b16 %v1853, %v1851
        %v2044 = vpack.c.b16 %v1856, %v1854
        %v2045 = vpack.c.b16 %v1857, %v1855
        %v2046 = vpack.c.b16 %v1860, %v1858
        %v2047 = vpack.c.b16 %v1861, %v1859
        %v2048 = vpack.c.b16 %v1864, %v1862
        %v2049 = vpack.c.b16 %v1865, %v1863
        %v2050 = vpack.c.b16 %v1868, %v1866
        %v2051 = vpack.c.b16 %v1869, %v1867
        %v2052 = vpack.c.b16 %v1872, %v1870
        %v2053 = vpack.c.b16 %v1873, %v1871
        %v2054 = vpack.c.b16 %v1876, %v1874
        %v2055 = vpack.c.b16 %v1877, %v1875
        %v2056 = vpack.c.b16 %v1880, %v1878
        %v2057 = vpack.c.b16 %v1881, %v1879
        %v2058 = vpack.c.b16 %v1884, %v1882
        %v2059 = vpack.c.b16 %v1885, %v1883
        %v2060 = vpack.c.b16 %v1888, %v1886
        %v2061 = vpack.c.b16 %v1889, %v1887
        %v2062 = vpack.c.b16 %v1892, %v1890
        %v2063 = vpack.c.b16 %v1893, %v1891
        %v2064 = vpack.c.b16 %v1896, %v1894
        %v2065 = vpack.c.b16 %v1897, %v1895
        %v2066 = vpack.c.b16 %v1900, %v1898
        %v2067 = vpack.c.b16 %v1901, %v1899
        %v2068 = vpack.c.b16 %v1904, %v1902
        %v2069 = vpack.c.b16 %v1905, %v1903
        %v2070 = vpack.c.b16 %v1908, %v1906
        %v2071 = vpack.c.b16 %v1909, %v1907
        %v2072 = vpack.c.b16 %v1912, %v1910
        %v2073 = vpack.c.b16 %v1913, %v1911
        %v2074 = vpack.c.b16 %v1916, %v1914
        %v2075 = vpack.c.b16 %v1917, %v1915
        %v2076 = vpack.c.b16 %v1920, %v1918
        %v2077 = vpack.c.b16 %v1921, %v1919
        %v2078 = vpack.c.b16 %v1924, %v1922
        %v2079 = vpack.c.b16 %v1925, %v1923
        %v2080 = vpack.c.b16 %v1928, %v1926
        %v2081 = vpack.c.b16 %v1929, %v1927
        %v2082 = vpack.c.b16 %v1932, %v1930
        %v2083 = vpack.c.b16 %v1933, %v1931
        %v2084 = vpack.c.b16 %v1936, %v1934
        %v2085 = vpack.c.b16 %v1937, %v1935
        %v2086 = vpack.c.b16 %v1940, %v1938
        %v2087 = vpack.c.b16 %v1941, %v1939
        %v2088 = vpack.c.b16 %v1944, %v1942
        %v2089 = vpack.c.b16 %v1945, %v1943
        %v2090 = vpack.c.b16 %v1948, %v1946
        %v2091 = vpack.c.b16 %v1949, %v1947
        %v2092 = vpack.c.b16 %v1952, %v1950
        %v2093 = vpack.c.b16 %v1953, %v1951
        %v2094 = vpack.c.b16 %v1956, %v1954
        %v2095 = vpack.c.b16 %v1957, %v1955
        %v2096 = vpack.c.b16 %v1960, %v1958
        %v2097 = vpack.c.b16 %v1961, %v1959
        %v2098 = vpack.c.b16 %v1964, %v1962
        %v2099 = vpack.c.b16 %v1965, %v1963
        %v2100 = vpack.c.b16 %v1968, %v1966
        %v2101 = vpack.c.b16 %v1969, %v1967
        %v2102 = vpack.c.b16 %v1972, %v1970
        %v2103 = vpack.c.b16 %v1973, %v1971
        %v2104 = vpack.c.b16 %v1976, %v1974
        %v2105 = vpack.c.b16 %v1977, %v1975
        %2234 = vmatprep.subr.bf16.mxu0 %v1979
        %2235 = vmatpush1.bf16.msra.mxu0 %v1978
        %2236 = vmatprep.subr.bf16.mxu0 %v1981
        %2237 = vmatpush1.bf16.msra.mxu0 %v1980
        %2238 = vmatprep.subr.bf16.mxu0 %v1983
        %2239 = vmatpush1.bf16.msra.mxu0 %v1982
        %2240 = vmatprep.subr.bf16.mxu0 %v1985
        %2241 = vmatpush1.bf16.msra.mxu0 %v1984
        %2242 = vmatprep.subr.bf16.mxu0 %v1987
        %2243 = vmatpush1.bf16.msra.mxu0 %v1986
        %2244 = vmatprep.subr.bf16.mxu0 %v1989
        %2245 = vmatpush1.bf16.msra.mxu0 %v1988
        %2246 = vmatprep.subr.bf16.mxu0 %v1991
        %2247 = vmatpush1.bf16.msra.mxu0 %v1990
        %2248 = vmatprep.subr.bf16.mxu0 %v1993
        %2249 = vmatpush1.bf16.msra.mxu0 %v1992
        %2250 = vmatprep.subr.bf16.mxu0 %v1995
        %2251 = vmatpush1.bf16.msra.mxu0 %v1994
        %2252 = vmatprep.subr.bf16.mxu0 %v1997
        %2253 = vmatpush1.bf16.msra.mxu0 %v1996
        %2254 = vmatprep.subr.bf16.mxu0 %v1999
        %2255 = vmatpush1.bf16.msra.mxu0 %v1998
        %2256 = vmatprep.subr.bf16.mxu0 %v2001
        %2257 = vmatpush1.bf16.msra.mxu0 %v2000
        %2258 = vmatprep.subr.bf16.mxu0 %v2003
        %2259 = vmatpush1.bf16.msra.mxu0 %v2002
        %2260 = vmatprep.subr.bf16.mxu0 %v2005
        %2261 = vmatpush1.bf16.msra.mxu0 %v2004
        %2262 = vmatprep.subr.bf16.mxu0 %v2007
        %2263 = vmatpush1.bf16.msra.mxu0 %v2006
        %2264 = vmatprep.subr.bf16.mxu0 %v2009
        %2265 = vmatpush1.bf16.msra.mxu0 %v2008
        %2266 = vmatprep.mubr.bf16.mxu0 %v1447
        %2267 = vmatmul.mubr.bf16.gmra.mrb[0].mxu0 %v1446
        %v2268 = vpop.f32.mrb[0].mxu0
        %v2269 = vadd.f32 %v1587, %v2268
        %v2270 = vpop.f32.mrb[0].mxu0
        %v2271 = vadd.f32 %v1591, %v2270
        %v2272 = vpop.f32.mrb[0].mxu0
        %v2273 = vpop.f32.mrb[0].mxu0
        %2274 = vdwg.mxu0
        %2275 = vmatprep.subr.bf16.mxu0 %v2011
        %2276 = vmatpush1.bf16.msra.mxu0 %v2010
        %2277 = vmatprep.subr.bf16.mxu0 %v2013
        %2278 = vmatpush1.bf16.msra.mxu0 %v2012
        %2279 = vmatprep.subr.bf16.mxu0 %v2015
        %2280 = vmatpush1.bf16.msra.mxu0 %v2014
        %2281 = vmatprep.subr.bf16.mxu0 %v2017
        %2282 = vmatpush1.bf16.msra.mxu0 %v2016
        %2283 = vmatprep.subr.bf16.mxu0 %v2019
        %2284 = vmatpush1.bf16.msra.mxu0 %v2018
        %2285 = vmatprep.subr.bf16.mxu0 %v2021
        %2286 = vmatpush1.bf16.msra.mxu0 %v2020
        %2287 = vmatprep.subr.bf16.mxu0 %v2023
        %2288 = vmatpush1.bf16.msra.mxu0 %v2022
        %2289 = vmatprep.subr.bf16.mxu0 %v2025
        %2290 = vmatpush1.bf16.msra.mxu0 %v2024
        %2291 = vmatprep.subr.bf16.mxu0 %v2027
        %2292 = vmatpush1.bf16.msra.mxu0 %v2026
        %2293 = vmatprep.subr.bf16.mxu0 %v2029
        %2294 = vmatpush1.bf16.msra.mxu0 %v2028
        %2295 = vmatprep.subr.bf16.mxu0 %v2031
        %2296 = vmatpush1.bf16.msra.mxu0 %v2030
        %2297 = vmatprep.subr.bf16.mxu0 %v2033
        %2298 = vmatpush1.bf16.msra.mxu0 %v2032
        %2299 = vmatprep.subr.bf16.mxu0 %v2035
        %2300 = vmatpush1.bf16.msra.mxu0 %v2034
        %2301 = vmatprep.subr.bf16.mxu0 %v2037
        %2302 = vmatpush1.bf16.msra.mxu0 %v2036
        %2303 = vmatprep.subr.bf16.mxu0 %v2039
        %2304 = vmatpush1.bf16.msra.mxu0 %v2038
        %2305 = vmatprep.subr.bf16.mxu0 %v2041
        %2306 = vmatpush1.bf16.msra.mxu0 %v2040
        %2307 = vmatprep.mubr.bf16.mxu0 %v1449
        %2308 = vmatmul.mubr.bf16.gmra.mrb[0].mxu0 %v1448
        %v2309 = vpop.f32.mrb[0].mxu0
        %v2310 = vadd.f32 %v2269, %v2309
        %v2311 = vpop.f32.mrb[0].mxu0
        %v2312 = vadd.f32 %v2271, %v2311
        %v2313 = vpop.f32.mrb[0].mxu0
        %v2314 = vpop.f32.mrb[0].mxu0
        %2315 = vdwg.mxu0
        %2316 = vmatprep.subr.bf16.mxu0 %v2043
        %2317 = vmatpush1.bf16.msra.mxu0 %v2042
        %2318 = vmatprep.subr.bf16.mxu0 %v2045
        %2319 = vmatpush1.bf16.msra.mxu0 %v2044
        %2320 = vmatprep.subr.bf16.mxu0 %v2047
        %2321 = vmatpush1.bf16.msra.mxu0 %v2046
        %2322 = vmatprep.subr.bf16.mxu0 %v2049
        %2323 = vmatpush1.bf16.msra.mxu0 %v2048
        %2324 = vmatprep.subr.bf16.mxu0 %v2051
        %2325 = vmatpush1.bf16.msra.mxu0 %v2050
        %2326 = vmatprep.subr.bf16.mxu0 %v2053
        %2327 = vmatpush1.bf16.msra.mxu0 %v2052
        %2328 = vmatprep.subr.bf16.mxu0 %v2055
        %2329 = vmatpush1.bf16.msra.mxu0 %v2054
        %2330 = vmatprep.subr.bf16.mxu0 %v2057
        %2331 = vmatpush1.bf16.msra.mxu0 %v2056
        %2332 = vmatprep.subr.bf16.mxu0 %v2059
        %2333 = vmatpush1.bf16.msra.mxu0 %v2058
        %2334 = vmatprep.subr.bf16.mxu0 %v2061
        %2335 = vmatpush1.bf16.msra.mxu0 %v2060
        %2336 = vmatprep.subr.bf16.mxu0 %v2063
        %2337 = vmatpush1.bf16.msra.mxu0 %v2062
        %2338 = vmatprep.subr.bf16.mxu0 %v2065
        %2339 = vmatpush1.bf16.msra.mxu0 %v2064
        %2340 = vmatprep.subr.bf16.mxu0 %v2067
        %2341 = vmatpush1.bf16.msra.mxu0 %v2066
        %2342 = vmatprep.subr.bf16.mxu0 %v2069
        %2343 = vmatpush1.bf16.msra.mxu0 %v2068
        %2344 = vmatprep.subr.bf16.mxu0 %v2071
        %2345 = vmatpush1.bf16.msra.mxu0 %v2070
        %2346 = vmatprep.subr.bf16.mxu0 %v2073
        %2347 = vmatpush1.bf16.msra.mxu0 %v2072
        %2348 = vmatprep.mubr.bf16.mxu0 %v1451
        %2349 = vmatmul.mubr.bf16.gmra.mrb[0].mxu0 %v1450
        %v2350 = vpop.f32.mrb[0].mxu0
        %v2351 = vadd.f32 %v2310, %v2350
        %v2352 = vpop.f32.mrb[0].mxu0
        %v2353 = vadd.f32 %v2312, %v2352
        %v2354 = vpop.f32.mrb[0].mxu0
        %v2355 = vpop.f32.mrb[0].mxu0
        %2356 = vdwg.mxu0
        %2357 = vmatprep.subr.bf16.mxu0 %v2075
        %2358 = vmatpush1.bf16.msra.mxu0 %v2074
        %2359 = vmatprep.subr.bf16.mxu0 %v2077
        %2360 = vmatpush1.bf16.msra.mxu0 %v2076
        %2361 = vmatprep.subr.bf16.mxu0 %v2079
        %2362 = vmatpush1.bf16.msra.mxu0 %v2078
        %2363 = vmatprep.subr.bf16.mxu0 %v2081
        %2364 = vmatpush1.bf16.msra.mxu0 %v2080
        %2365 = vmatprep.subr.bf16.mxu0 %v2083
        %2366 = vmatpush1.bf16.msra.mxu0 %v2082
        %2367 = vmatprep.subr.bf16.mxu0 %v2085
        %2368 = vmatpush1.bf16.msra.mxu0 %v2084
        %2369 = vmatprep.subr.bf16.mxu0 %v2087
        %2370 = vmatpush1.bf16.msra.mxu0 %v2086
        %2371 = vmatprep.subr.bf16.mxu0 %v2089
        %2372 = vmatpush1.bf16.msra.mxu0 %v2088
        %2373 = vmatprep.subr.bf16.mxu0 %v2091
        %2374 = vmatpush1.bf16.msra.mxu0 %v2090
        %2375 = vmatprep.subr.bf16.mxu0 %v2093
        %2376 = vmatpush1.bf16.msra.mxu0 %v2092
        %2377 = vmatprep.subr.bf16.mxu0 %v2095
        %2378 = vmatpush1.bf16.msra.mxu0 %v2094
        %2379 = vmatprep.subr.bf16.mxu0 %v2097
        %2380 = vmatpush1.bf16.msra.mxu0 %v2096
        %2381 = vmatprep.subr.bf16.mxu0 %v2099
        %2382 = vmatpush1.bf16.msra.mxu0 %v2098
        %2383 = vmatprep.subr.bf16.mxu0 %v2101
        %2384 = vmatpush1.bf16.msra.mxu0 %v2100
        %2385 = vmatprep.subr.bf16.mxu0 %v2103
        %2386 = vmatpush1.bf16.msra.mxu0 %v2102
        %2387 = vmatprep.subr.bf16.mxu0 %v2105
        %2388 = vmatpush1.bf16.msra.mxu0 %v2104
        %2389 = vmatprep.mubr.bf16.mxu0 %v1453
        %2390 = vmatmul.mubr.bf16.gmra.mrb[0].mxu0 %v1452
        %v2391 = vpop.f32.mrb[0].mxu0
        %v2392 = vadd.f32 %v2351, %v2391
        %v2393 = vpop.f32.mrb[0].mxu0
        %v2394 = vadd.f32 %v2353, %v2393
        %v2395 = vpop.f32.mrb[0].mxu0
        %v2396 = vpop.f32.mrb[0].mxu0
        %2397 = vdwg.mxu0
        %v2398 = vadd.f32 %v2392, %v375
        %v2399 = vadd.f32 %v2394, %v376
        %v2400 = vpack.c.bf16 %v2398, %v2398
        %v2401 = vpack.c.bf16 %v2399, %v2399
        %v2404 = vunpack.c.l.b16 %v2400
        %v2405 = vunpack.c.l.b16 %v2401
        %v2406 = vpack.c.b16 %v2405, %v2404
        %2408 = vst [vmem:[%s373] sm:$0xff] %v2406
        %s2409 = sand.u32 %s187, 1
        %s2410 = scalar_lea.sflag [#allocation4], %s2409
        %s2411 = sand.u32 %s187, 1
        %s2412 = smul.addr %s2411, 8
        %s2413 = scalar_lea.vmem [#allocation14], %s2412
        // Predicated region
        $region77: #{clip_encoder_forward.16} parent=47 // pred_check
          %p2414 = pneg %p197
        $region78: #{clip_encoder_forward.16} parent=47 // pred_check_branch
          %2416 = sbr.rel (%p2414) target = $region80
        $region79: #{clip_encoder_forward.16} parent=47 // pred_region
          %s2418 = ssub.s32 128, 128
          %2419 = vsyncadd %s2410, %s2418
          %s2420 = smul.addr %s27, 2
          %s2421 = smul.addr %s2420, 64
          %s2422 = scalar_lea.hbm %s7, %s2421
          %s2424 = sshll.u32 %s2413, 4
          %s2425 = int_to_ptr.vmem [resolvable:$true] %s2424
          %2427 = dma.vmem_to_hbm [thread:$0]  %s2425, 128, %s2422, %s2410
        $region80: #{clip_encoder_forward.16} parent=47 // pred_fallthru
          _
      $region48: #{clip_encoder_forward.16} parent=5 // pred_fallthru
        _
      %p2428 = scmp.le.s32.totalorder 2, %s22
      // Predicated region
      $region81: #{clip_encoder_forward.16} parent=5 // pred_check
        %p2429 = pneg %p2428
      $region82: #{clip_encoder_forward.16} parent=5 // pred_check_branch
        %2431 = sbr.rel (%p2429) target = $region84
      $region83: #{clip_encoder_forward.16} parent=5 // pred_region
        %s2432 = ssub.s32 %s22, 2
        // Predicated region
        $region85: #{clip_encoder_forward.16} parent=83 // pred_check
          %p2433 = pneg %p203
        $region86: #{clip_encoder_forward.16} parent=83 // pred_check_branch
          %2435 = sbr.rel (%p2433) target = $region88
        $region87: #{clip_encoder_forward.16} parent=83 // pred_region
          %s2436 = sand.u32 %s188, 1
          %s2437 = scalar_lea.sflag [#allocation4], %s2436
          %s2438 = sand.u32 %s188, 1
          %s2439 = smul.addr %s2438, 8
          %s2440 = scalar_lea.vmem [#allocation14], %s2439
          %2441 = dma.done %s2437, 128
        $region88: #{clip_encoder_forward.16} parent=83 // pred_fallthru
          _
      $region84: #{clip_encoder_forward.16} parent=5 // pred_fallthru
        _
    $region6: #{clip_encoder_forward.16} parent=1 // loop_footer
      %s26 = sadd.s32 1, %s22
    $region7: #{clip_encoder_forward.16} parent=1 // loop_footer_branch
      %21 = sbr.rel target = $region3
    $region8: #{clip_encoder_forward.16} parent=1 // loop_exit
      _
    %2442 = vsyncpa [#allocation3], 1
    %s2443 = scalar_lea.sflag [#allocation3], 1
    %2444 = vsyncpa %s2443, 1
    %2445 = vsyncpa [#allocation6], 1
    %2446 = vsyncpa [#allocation9], 1
    %2447 = vsyncpa [#allocation12], 1
    %2448 = vsyncpa [#allocation4], 1
    %s2449 = scalar_lea.sflag [#allocation4], 1
    %2450 = vsyncpa %s2449, 1

</llo_original>
